<compile_context>
chip_gen: v6e
topology: v6e:2x2x1
jax: 0.10.0
libtpu: 0.0.40
codegen_flags: <defaults>
</compile_context>

<pallas_src>
import functools

import jax
import jax.numpy as jnp
from jax.experimental import pallas as pl
from jax.experimental.pallas import tpu as pltpu


def _round_up(x, m):
    return ((x + m - 1) // m) * m


def _cdiv(a, b):
    return (a + b - 1) // b


def _sublane_multiple(dtype):
    # f32 -> 8, bf16 -> 16, int8/fp8 -> 32 (packed-sublane tile constraint).
    return 32 // jnp.dtype(dtype).itemsize


def _vmem_limit_bytes():
    """Generation-aware VMEM budget (v7x: 64 MiB/TC physical; v5e/v6e: 128 MiB)."""
    try:
        kind = jax.devices()[0].device_kind.lower()
    except Exception:
        kind = ""
    if "v7" in kind:
        return 48 * 1024 * 1024
    return 64 * 1024 * 1024


_TK_CANDIDATES = (2048, 1536, 1024, 768, 512, 384, 256, 128)
_TN_CANDIDATES = (512, 384, 256, 128)


def select_prop_tiles(n_nodes, adjacency_dtype=jnp.float32):
    """Pick (tm, tk) for the N x N adjacency-propagation matmul.

    Memory-bound sizing: large tiles for DMA efficiency and low per-grid-step
    overhead, K padding kept <= 10%, >= 4 row blocks for v7x megacore when the
    graph allows it, and everything shrunk to the generation VMEM budget.
    """
    itemsize = jnp.dtype(adjacency_dtype).itemsize
    sub = _sublane_multiple(adjacency_dtype)
    kp_min = _round_up(n_nodes, 128)

    tk = 128
    for cand in _TK_CANDIDATES:
        if _round_up(n_nodes, cand) - kp_min <= 0.10 * kp_min:
            tk = cand
            break

    tm = 1024
    while tm > 256 and _cdiv(n_nodes, tm) < 4:   # keep >=4 parallel row blocks
        tm //= 2
    tm = max(sub, min(tm, _round_up(n_nodes, sub)))
    tm = _round_up(tm, sub)

    # Shrink tm until double-buffered A + resident B (tn=128) + acc/out fit.
    limit = _vmem_limit_bytes()
    budget = limit - 6 * 1024 * 1024
    kp = _round_up(n_nodes, tk)

    def vmem_est(tm_):
        return (2 * tm_ * tk * itemsize          # A tiles, double-buffered
                + 2 * kp * 128 * itemsize        # resident B slab (2 buffers)
                + 3 * tm_ * 128 * 4)             # f32 accumulator + out buffers

    while vmem_est(tm) > budget and tm > max(256, sub):
        tm = _round_up(max(sub, tm // 2), sub)
    return tm, tk


def prepare_adjacency(a, tm, tk, dtype=jnp.float32):
    """Pad (and optionally cast) an N x N propagation matrix ONCE per graph.

    The padded copy is reused by every layer / forward call, so the full
    read+write cost of jnp.pad on the big adjacency is paid once instead of
    once per matmul inside the forward.
    """
    n, n2 = a.shape
    assert n == n2, a.shape
    mp = _round_up(n, tm)
    kp = _round_up(n, tk)
    if (mp, kp) != (n, n2):
        a = jnp.pad(a, ((0, mp - n), (0, kp - n2)))
    return a.astype(dtype)


# ----------------------------------------------------------------------------
# Pallas kernel:  out = act(A @ B)  with A streamed in (tm, tk) tiles and the
# full (Kp, tn) B slab resident in VMEM; f32 accumulator (init/finalize P3).
# ----------------------------------------------------------------------------
def _propagate_kernel(a_ref, b_ref, o_ref, acc_ref, *, tk, relu):
    kk = pl.program_id(2)

    @pl.when(kk == 0)
    def _():
        acc_ref[...] = jnp.zeros_like(acc_ref)

    k_start = pl.multiple_of(kk * tk, tk)
    acc_ref[...] += jnp.dot(
        a_ref[...], b_ref[pl.ds(k_start, tk), :],
        preferred_element_type=jnp.float32,
    )

    @pl.when(kk == pl.num_programs(2) - 1)
    def _():
        out = acc_ref[...]
        if relu:
            out = jnp.maximum(out, 0.0)
        o_ref[...] = out.astype(o_ref.dtype)


def propagate(a_padded, b, *, n_rows, tm, tk, relu):
    """act(A @ B) where A is the pre-padded (Mp, Kp) propagation matrix."""
    mp, kp = a_padded.shape
    k_true, nout = b.shape
    assert k_true <= kp and mp % tm == 0 and kp % tk == 0

    limit = _vmem_limit_bytes()
    itemsize = jnp.dtype(a_padded.dtype).itemsize
    np_ = _round_up(nout, 128)

    # Output-column tile: as wide as the VMEM budget allows (fewer j blocks ->
    # fewer re-reads of the big A stream in the wide decoder output layer).
    tn = 128
    budget = limit - 8 * 1024 * 1024 - 2 * tm * tk * itemsize
    for cand in _TN_CANDIDATES:
        if np_ % cand:
            continue
        if 2 * kp * cand * itemsize + 3 * tm * cand * 4 <= budget:
            tn = cand
            break

    # B (= H @ W) is small: padding / casting it per call is cheap.
    b_p = b
    if (kp, np_) != (k_true, nout):
        b_p = jnp.pad(b, ((0, kp - k_true), (0, np_ - nout)))
    b_p = b_p.astype(a_padded.dtype)

    out = pl.pallas_call(
        functools.partial(_propagate_kernel, tk=tk, relu=relu),
        out_shape=jax.ShapeDtypeStruct((mp, np_), jnp.float32),
        grid_spec=pltpu.PrefetchScalarGridSpec(
            num_scalar_prefetch=0,
            grid=(mp // tm, np_ // tn, kp // tk),
            in_specs=[
                # A: (tm, tk) tile streamed over rows (i) and the K axis (kk).
                pl.BlockSpec((tm, tk), lambda i, j, kk: (i, kk)),
                # B: full (Kp, tn) column slab resident in VMEM; block index is
                # constant in i and kk, so it is only re-fetched when j changes.
                pl.BlockSpec((kp, tn), lambda i, j, kk: (0, j)),
            ],
            out_specs=pl.BlockSpec((tm, tn), lambda i, j, kk: (i, j)),
            scratch_shapes=[pltpu.VMEM((tm, tn), jnp.float32)],
        ),
        compiler_params=pltpu.CompilerParams(
            dimension_semantics=("parallel", "parallel", "arbitrary"),
            vmem_limit_bytes=limit,
        ),
    )(a_padded, b_p)

    if (mp, np_) != (n_rows, nout):
        out = out[:n_rows, :nout]
    return out


# ----------------------------------------------------------------------------
# GALA layer / IGALA forward
# ----------------------------------------------------------------------------
def gala_layer(a_padded, h, w, *, n, tm, tk, relu):
    # H @ W is <0.1% of the FLOPs: let XLA do it (perf review); only the
    # N x N propagation uses the Pallas kernel.
    hw = jnp.dot(h, w, preferred_element_type=jnp.float32)
    return propagate(a_padded, hw, n_rows=n, tm=tm, tk=tk, relu=relu)


@functools.partial(jax.jit, static_argnames=("n", "tm", "tk"))
def igala_forward(x, asm_p, asp_p, params, *, n, tm, tk):
    """IGALA.forward(x, asm, asp) -> (X, z), with pre-padded asm/asp."""
    # Encoder (Laplacian smoothing)
    h1 = gala_layer(asm_p, x, params["W_enc1"], n=n, tm=tm, tk=tk, relu=True)
    z = gala_layer(asm_p, h1, params["W_enc2"], n=n, tm=tm, tk=tk, relu=False)
    # Decoder (Laplacian sharpening)
    h2 = gala_layer(asp_p, z, params["W_dec1"], n=n, tm=tm, tk=tk, relu=True)
    X = gala_layer(asp_p, h2, params["W_dec2"], n=n, tm=tm, tk=tk, relu=False)
    return X, z


def igala_apply(x, asm, asp, params, *, adjacency_dtype=jnp.float32):
    """Pad/cast the adjacency once per graph, then run the jitted forward.

    adjacency_dtype=jnp.bfloat16 halves the dominant HBM stream (A) on every
    generation (accumulation stays f32) at ~1e-2 relative precision cost.
    """
    n = x.shape[0]
    tm, tk = select_prop_tiles(n, adjacency_dtype)
    asm_p = prepare_adjacency(asm, tm, tk, adjacency_dtype)
    asp_p = prepare_adjacency(asp, tm, tk, adjacency_dtype)
    return igala_forward(x, asm_p, asp_p, params, n=n, tm=tm, tk=tk)


def init_igala_params(key, input_dim, hidden_size, embedding_size):
    """Deterministic Glorot-style init for the 4 GALA layer weights."""
    k1, k2, k3, k4 = jax.random.split(key, 4)

    def glorot(k, fan_in, fan_out):
        scale = jnp.sqrt(6.0 / (fan_in + fan_out))
        return jax.random.uniform(
            k, (fan_in, fan_out), jnp.float32, -scale, scale
        )

    return {
        "W_enc1": glorot(k1, input_dim, hidden_size),
        "W_enc2": glorot(k2, hidden_size, embedding_size),
        "W_dec1": glorot(k3, embedding_size, hidden_size),
        "W_dec2": glorot(k4, hidden_size, input_dim),
    }


# ----------------------------------------------------------------------------
# Reference (plain JAX) for correctness check
# ----------------------------------------------------------------------------
def igala_forward_ref(x, asm, asp, params):
    h1 = jax.nn.relu(asm @ (x @ params["W_enc1"]))
    z = asm @ (h1 @ params["W_enc2"])
    h2 = jax.nn.relu(asp @ (z @ params["W_dec1"]))
    X = asp @ (h2 @ params["W_dec2"])
    return X, z


if __name__ == "__main__":
    # Small deterministic example.  N is NOT a tile multiple and the feature
    # width forces multi-K, multi-row and multi-j grid steps, exercising the
    # padding/slicing, accumulation, resident-B slicing and tile selection.
    N = 600
    input_dim = 1000
    hidden_size = 64
    embedding_size = 32

    key = jax.random.PRNGKey(0)
    kx, ka, kp = jax.random.split(key, 3)

    # Node features
    x = jax.random.normal(kx, (N, input_dim), jnp.float32)

    # Build a symmetric random adjacency, then smoothing / sharpening
    # propagation matrices (glue, plain JAX).
    a_rand = jax.random.uniform(ka, (N, N), jnp.float32)
    adj = (a_rand + a_rand.T > 1.8).astype(jnp.float32)
    adj = adj * (1.0 - jnp.eye(N, dtype=jnp.float32))  # no self loops

    # Smoothing:  asm = D~^-1/2 (I + A) D~^-1/2
    a_tilde = adj + jnp.eye(N, dtype=jnp.float32)
    d_s = jnp.sum(a_tilde, axis=1)
    d_s_inv_sqrt = 1.0 / jnp.sqrt(d_s)
    asm = d_s_inv_sqrt[:, None] * a_tilde * d_s_inv_sqrt[None, :]

    # Sharpening: asp = D^^-1/2 (2I - A) D^^-1/2  with D^ = D + I
    d_h = jnp.sum(adj, axis=1) + 1.0
    d_h_inv_sqrt = 1.0 / jnp.sqrt(d_h)
    a_hat = 2.0 * jnp.eye(N, dtype=jnp.float32) - adj
    asp = d_h_inv_sqrt[:, None] * a_hat * d_h_inv_sqrt[None, :]

    params = init_igala_params(kp, input_dim, hidden_size, embedding_size)

    # f32 adjacency keeps the tight correctness check; pass
    # adjacency_dtype=jnp.bfloat16 for the bandwidth-halving fast path.
    X_out, z_out = igala_apply(x, asm, asp, params)
    jax.block_until_ready((X_out, z_out))

    # Sanity check against plain-JAX reference.
    X_ref, z_ref = igala_forward_ref(x, asm, asp, params)
    assert X_out.shape == (N, input_dim)
    assert z_out.shape == (N, embedding_size)
    assert jnp.allclose(X_out, X_ref, atol=1e-3, rtol=1e-3)
    assert jnp.allclose(z_out, z_ref, atol=1e-3, rtol=1e-3)

    print("KERNEL_OK")
</pallas_src>

<mosaic_0001>
module attributes {stable_mosaic.version = 11 : i64} {
  func.func @_propagate_kernel(%arg0: i32, %arg1: i32, %arg2: i32, %arg3: memref<256x128xf32, #tpu.memory_space<vmem>>, %arg4: memref<640x128xf32, #tpu.memory_space<vmem>>, %arg5: memref<256x128xf32, #tpu.memory_space<vmem>>, %arg6: memref<256x128xf32, #tpu.memory_space<vmem>>) attributes {dimension_semantics = [#tpu.dimension_semantics<parallel>, #tpu.dimension_semantics<parallel>, #tpu.dimension_semantics<arbitrary>], iteration_bounds = array<i64: 3, 1, 5>, scalar_prefetch = 0 : i64, scratch_operands = 1 : i64, tpu.core_type = #tpu.core_type<tc>, window_params = [{transform_indices = @transform_0, window_bounds = array<i64: 256, 128>}, {transform_indices = @transform_1, window_bounds = array<i64: 640, 128>}, {transform_indices = @transform_2, window_bounds = array<i64: 256, 128>}]} {
    %c0_i32 = arith.constant 0 : i32
    %0 = arith.cmpi eq, %arg2, %c0_i32 : i32
    %1 = arith.extui %0 : i1 to i32
    %c0_i32_0 = arith.constant 0 : i32
    %2 = arith.cmpi ne, %1, %c0_i32_0 : i32
    scf.if %2 {
      %cst_8 = arith.constant 0.000000e+00 : f32
      %15 = vector.broadcast %cst_8 : f32 to vector<256x128xf32>
      %c0_9 = arith.constant 0 : index
      %c0_10 = arith.constant 0 : index
      %16 = vector.load %arg6[%c0_9, %c0_10] : memref<256x128xf32, #tpu.memory_space<vmem>>, vector<256x128xf32>
      tpu.vector_store %arg6[%c0_9, %c0_10], %15 {strides = array<i32>} : memref<256x128xf32, #tpu.memory_space<vmem>>, vector<256x128xf32>,
    } else {
    }
    %c128_i32 = arith.constant 128 : i32
    %3 = arith.muli %arg2, %c128_i32 : i32
    %4 = tpu.assume_multiple %3, 128 : i32
    %c0 = arith.constant 0 : index
    %c0_1 = arith.constant 0 : index
    %5 = vector.load %arg6[%c0, %c0_1] : memref<256x128xf32, #tpu.memory_space<vmem>>, vector<256x128xf32>
    %c0_2 = arith.constant 0 : index
    %c0_3 = arith.constant 0 : index
    %6 = vector.load %arg3[%c0_2, %c0_3] : memref<256x128xf32, #tpu.memory_space<vmem>>, vector<256x128xf32>
    %7 = arith.index_cast %4 : i32 to index
    %c0_4 = arith.constant 0 : index
    %8 = vector.load %arg4[%7, %c0_4] : memref<640x128xf32, #tpu.memory_space<vmem>>, vector<128x128xf32>
    %cst = arith.constant dense<0.000000e+00> : vector<256x128xf32>
    %9 = tpu.matmul %6, %8, %cst {dimension_numbers = #tpu.dot_dimension_numbers<[1], [0], [0], [1], [0, 0, 1, 1], [], []>} : vector<256x128xf32>, vector<128x128xf32>, vector<256x128xf32> -> vector<256x128xf32>
    %10 = arith.addf %5, %9 : vector<256x128xf32>
    %c0_5 = arith.constant 0 : index
    %c0_6 = arith.constant 0 : index
    %11 = vector.load %arg6[%c0_5, %c0_6] : memref<256x128xf32, #tpu.memory_space<vmem>>, vector<256x128xf32>
    tpu.vector_store %arg6[%c0_5, %c0_6], %10 {strides = array<i32>} : memref<256x128xf32, #tpu.memory_space<vmem>>, vector<256x128xf32>,
    %c4_i32 = arith.constant 4 : i32
    %12 = arith.cmpi eq, %arg2, %c4_i32 : i32
    %13 = arith.extui %12 : i1 to i32
    %c0_i32_7 = arith.constant 0 : i32
    %14 = arith.cmpi ne, %13, %c0_i32_7 : i32
    scf.if %14 {
      %c0_8 = arith.constant 0 : index
      %c0_9 = arith.constant 0 : index
      %15 = vector.load %arg6[%c0_8, %c0_9] : memref<256x128xf32, #tpu.memory_space<vmem>>, vector<256x128xf32>
      %cst_10 = arith.constant 0.000000e+00 : f32
      %16 = vector.broadcast %cst_10 : f32 to vector<256x128xf32>
      %17 = arith.maximumf %15, %16 : vector<256x128xf32>
      %c0_11 = arith.constant 0 : index
      %c0_12 = arith.constant 0 : index
      %18 = vector.load %arg5[%c0_11, %c0_12] : memref<256x128xf32, #tpu.memory_space<vmem>>, vector<256x128xf32>
      tpu.vector_store %arg5[%c0_11, %c0_12], %17 {strides = array<i32>} : memref<256x128xf32, #tpu.memory_space<vmem>>, vector<256x128xf32>,
    } else {
    }
    return
  }
  func.func @transform_0(%arg0: i32, %arg1: i32, %arg2: i32) -> (i32, i32) {
    %c0_i32 = arith.constant 0 : i32
    return %arg0, %arg2 : i32, i32
  }
  func.func @transform_1(%arg0: i32, %arg1: i32, %arg2: i32) -> (i32, i32) {
    %c0_i32 = arith.constant 0 : i32
    %c0_i32_0 = arith.constant 0 : i32
    return %c0_i32, %arg1 : i32, i32
  }
  func.func @transform_2(%arg0: i32, %arg1: i32, %arg2: i32) -> (i32, i32) {
    %c0_i32 = arith.constant 0 : i32
    return %arg0, %arg1 : i32, i32
  }
}

module attributes {stable_mosaic.version = 11 : i64} {
  func.func @_propagate_kernel(%arg0: i32, %arg1: i32, %arg2: i32, %arg3: memref<256x128xf32, #tpu.memory_space<vmem>>, %arg4: memref<640x128xf32, #tpu.memory_space<vmem>>, %arg5: memref<256x128xf32, #tpu.memory_space<vmem>>, %arg6: memref<256x128xf32, #tpu.memory_space<vmem>>) attributes {dimension_semantics = [#tpu.dimension_semantics<parallel>, #tpu.dimension_semantics<parallel>, #tpu.dimension_semantics<arbitrary>], iteration_bounds = array<i64: 3, 1, 5>, scalar_prefetch = 0 : i64, scratch_operands = 1 : i64, tpu.core_type = #tpu.core_type<tc>, window_params = [{transform_indices = @transform_0, window_bounds = array<i64: 256, 128>}, {transform_indices = @transform_1, window_bounds = array<i64: 640, 128>}, {transform_indices = @transform_2, window_bounds = array<i64: 256, 128>}]} {
    %c0_i32 = arith.constant 0 : i32
    %0 = arith.cmpi eq, %arg2, %c0_i32 : i32
    %1 = arith.extui %0 : i1 to i32
    %c0_i32_0 = arith.constant 0 : i32
    %2 = arith.cmpi ne, %1, %c0_i32_0 : i32
    scf.if %2 {
      %cst_8 = arith.constant 0.000000e+00 : f32
      %15 = vector.broadcast %cst_8 : f32 to vector<256x128xf32>
      %c0_9 = arith.constant 0 : index
      %c0_10 = arith.constant 0 : index
      %16 = vector.load %arg6[%c0_9, %c0_10] : memref<256x128xf32, #tpu.memory_space<vmem>>, vector<256x128xf32>
      tpu.vector_store %arg6[%c0_9, %c0_10], %15 {strides = array<i32>} : memref<256x128xf32, #tpu.memory_space<vmem>>, vector<256x128xf32>,
    } else {
    }
    %c128_i32 = arith.constant 128 : i32
    %3 = arith.muli %arg2, %c128_i32 : i32
    %4 = tpu.assume_multiple %3, 128 : i32
    %c0 = arith.constant 0 : index
    %c0_1 = arith.constant 0 : index
    %5 = vector.load %arg6[%c0, %c0_1] : memref<256x128xf32, #tpu.memory_space<vmem>>, vector<256x128xf32>
    %c0_2 = arith.constant 0 : index
    %c0_3 = arith.constant 0 : index
    %6 = vector.load %arg3[%c0_2, %c0_3] : memref<256x128xf32, #tpu.memory_space<vmem>>, vector<256x128xf32>
    %7 = arith.index_cast %4 : i32 to index
    %c0_4 = arith.constant 0 : index
    %8 = vector.load %arg4[%7, %c0_4] : memref<640x128xf32, #tpu.memory_space<vmem>>, vector<128x128xf32>
    %cst = arith.constant dense<0.000000e+00> : vector<256x128xf32>
    %9 = tpu.matmul %6, %8, %cst {dimension_numbers = #tpu.dot_dimension_numbers<[1], [0], [0], [1], [0, 0, 1, 1], [], []>} : vector<256x128xf32>, vector<128x128xf32>, vector<256x128xf32> -> vector<256x128xf32>
    %10 = arith.addf %5, %9 : vector<256x128xf32>
    %c0_5 = arith.constant 0 : index
    %c0_6 = arith.constant 0 : index
    %11 = vector.load %arg6[%c0_5, %c0_6] : memref<256x128xf32, #tpu.memory_space<vmem>>, vector<256x128xf32>
    tpu.vector_store %arg6[%c0_5, %c0_6], %10 {strides = array<i32>} : memref<256x128xf32, #tpu.memory_space<vmem>>, vector<256x128xf32>,
    %c4_i32 = arith.constant 4 : i32
    %12 = arith.cmpi eq, %arg2, %c4_i32 : i32
    %13 = arith.extui %12 : i1 to i32
    %c0_i32_7 = arith.constant 0 : i32
    %14 = arith.cmpi ne, %13, %c0_i32_7 : i32
    scf.if %14 {
      %c0_8 = arith.constant 0 : index
      %c0_9 = arith.constant 0 : index
      %15 = vector.load %arg6[%c0_8, %c0_9] : memref<256x128xf32, #tpu.memory_space<vmem>>, vector<256x128xf32>
      %c0_10 = arith.constant 0 : index
      %c0_11 = arith.constant 0 : index
      %16 = vector.load %arg5[%c0_10, %c0_11] : memref<256x128xf32, #tpu.memory_space<vmem>>, vector<256x128xf32>
      tpu.vector_store %arg5[%c0_10, %c0_11], %15 {strides = array<i32>} : memref<256x128xf32, #tpu.memory_space<vmem>>, vector<256x128xf32>,
    } else {
    }
    return
  }
  func.func @transform_0(%arg0: i32, %arg1: i32, %arg2: i32) -> (i32, i32) {
    %c0_i32 = arith.constant 0 : i32
    return %arg0, %arg2 : i32, i32
  }
  func.func @transform_1(%arg0: i32, %arg1: i32, %arg2: i32) -> (i32, i32) {
    %c0_i32 = arith.constant 0 : i32
    %c0_i32_0 = arith.constant 0 : i32
    return %c0_i32, %arg1 : i32, i32
  }
  func.func @transform_2(%arg0: i32, %arg1: i32, %arg2: i32) -> (i32, i32) {
    %c0_i32 = arith.constant 0 : i32
    return %arg0, %arg1 : i32, i32
  }
}

module attributes {stable_mosaic.version = 11 : i64} {
  func.func @_propagate_kernel(%arg0: i32, %arg1: i32, %arg2: i32, %arg3: memref<256x128xf32, #tpu.memory_space<vmem>>, %arg4: memref<640x512xf32, #tpu.memory_space<vmem>>, %arg5: memref<256x512xf32, #tpu.memory_space<vmem>>, %arg6: memref<256x512xf32, #tpu.memory_space<vmem>>) attributes {dimension_semantics = [#tpu.dimension_semantics<parallel>, #tpu.dimension_semantics<parallel>, #tpu.dimension_semantics<arbitrary>], iteration_bounds = array<i64: 3, 2, 5>, scalar_prefetch = 0 : i64, scratch_operands = 1 : i64, tpu.core_type = #tpu.core_type<tc>, window_params = [{transform_indices = @transform_0, window_bounds = array<i64: 256, 128>}, {transform_indices = @transform_1, window_bounds = array<i64: 640, 512>}, {transform_indices = @transform_2, window_bounds = array<i64: 256, 512>}]} {
    %c0_i32 = arith.constant 0 : i32
    %0 = arith.cmpi eq, %arg2, %c0_i32 : i32
    %1 = arith.extui %0 : i1 to i32
    %c0_i32_0 = arith.constant 0 : i32
    %2 = arith.cmpi ne, %1, %c0_i32_0 : i32
    scf.if %2 {
      %cst_8 = arith.constant 0.000000e+00 : f32
      %15 = vector.broadcast %cst_8 : f32 to vector<256x512xf32>
      %c0_9 = arith.constant 0 : index
      %c0_10 = arith.constant 0 : index
      %16 = vector.load %arg6[%c0_9, %c0_10] : memref<256x512xf32, #tpu.memory_space<vmem>>, vector<256x512xf32>
      tpu.vector_store %arg6[%c0_9, %c0_10], %15 {strides = array<i32>} : memref<256x512xf32, #tpu.memory_space<vmem>>, vector<256x512xf32>,
    } else {
    }
    %c128_i32 = arith.constant 128 : i32
    %3 = arith.muli %arg2, %c128_i32 : i32
    %4 = tpu.assume_multiple %3, 128 : i32
    %c0 = arith.constant 0 : index
    %c0_1 = arith.constant 0 : index
    %5 = vector.load %arg6[%c0, %c0_1] : memref<256x512xf32, #tpu.memory_space<vmem>>, vector<256x512xf32>
    %c0_2 = arith.constant 0 : index
    %c0_3 = arith.constant 0 : index
    %6 = vector.load %arg3[%c0_2, %c0_3] : memref<256x128xf32, #tpu.memory_space<vmem>>, vector<256x128xf32>
    %7 = arith.index_cast %4 : i32 to index
    %c0_4 = arith.constant 0 : index
    %8 = vector.load %arg4[%7, %c0_4] : memref<640x512xf32, #tpu.memory_space<vmem>>, vector<128x512xf32>
    %cst = arith.constant dense<0.000000e+00> : vector<256x512xf32>
    %9 = tpu.matmul %6, %8, %cst {dimension_numbers = #tpu.dot_dimension_numbers<[1], [0], [0], [1], [0, 0, 1, 1], [], []>} : vector<256x128xf32>, vector<128x512xf32>, vector<256x512xf32> -> vector<256x512xf32>
    %10 = arith.addf %5, %9 : vector<256x512xf32>
    %c0_5 = arith.constant 0 : index
    %c0_6 = arith.constant 0 : index
    %11 = vector.load %arg6[%c0_5, %c0_6] : memref<256x512xf32, #tpu.memory_space<vmem>>, vector<256x512xf32>
    tpu.vector_store %arg6[%c0_5, %c0_6], %10 {strides = array<i32>} : memref<256x512xf32, #tpu.memory_space<vmem>>, vector<256x512xf32>,
    %c4_i32 = arith.constant 4 : i32
    %12 = arith.cmpi eq, %arg2, %c4_i32 : i32
    %13 = arith.extui %12 : i1 to i32
    %c0_i32_7 = arith.constant 0 : i32
    %14 = arith.cmpi ne, %13, %c0_i32_7 : i32
    scf.if %14 {
      %c0_8 = arith.constant 0 : index
      %c0_9 = arith.constant 0 : index
      %15 = vector.load %arg6[%c0_8, %c0_9] : memref<256x512xf32, #tpu.memory_space<vmem>>, vector<256x512xf32>
      %c0_10 = arith.constant 0 : index
      %c0_11 = arith.constant 0 : index
      %16 = vector.load %arg5[%c0_10, %c0_11] : memref<256x512xf32, #tpu.memory_space<vmem>>, vector<256x512xf32>
      tpu.vector_store %arg5[%c0_10, %c0_11], %15 {strides = array<i32>} : memref<256x512xf32, #tpu.memory_space<vmem>>, vector<256x512xf32>,
    } else {
    }
    return
  }
  func.func @transform_0(%arg0: i32, %arg1: i32, %arg2: i32) -> (i32, i32) {
    %c0_i32 = arith.constant 0 : i32
    return %arg0, %arg2 : i32, i32
  }
  func.func @transform_1(%arg0: i32, %arg1: i32, %arg2: i32) -> (i32, i32) {
    %c0_i32 = arith.constant 0 : i32
    %c0_i32_0 = arith.constant 0 : i32
    return %c0_i32, %arg1 : i32, i32
  }
  func.func @transform_2(%arg0: i32, %arg1: i32, %arg2: i32) -> (i32, i32) {
    %c0_i32 = arith.constant 0 : i32
    return %arg0, %arg1 : i32, i32
  }
}

</mosaic_0001>

<llo_original>
// kernel: igala_forward.4
$region0: #{igala_forward.4}
  #allocation0 [shape = 'u32[]', space=smem, size = 0x4, offset = 0x4, fixed_abs, tag = 'smem constant byte address 0x4 - core index']
  #allocation1 [shape = 'u32[144,128]{1,0:T(1,128)}', space=vmem, size = 0x12000, scoped, tag = 'internal scratch']
  #allocation2 [shape = 'f32[256,128]{1,0:T(8,128)}', space=vmem, size = 0x20000, scoped, tag = 'scratch operand']
  %s0 = inlined_call_operand.vmem [shape: f32[768,640], index: 0, kind: input, shape index: {}]
  %s1 = inlined_call_operand.vmem [shape: f32[640,128], index: 1, kind: input, shape index: {}]
  %s2 = inlined_call_operand.vmem [shape: f32[768,128], index: 2, kind: output, shape index: {}]
  %s3 = sld [smem:[#allocation0]]
  $region87: #{igala_forward.4} parent=0
    _
  %s5 = ssub.s32 1, %s3
  %s6 = scalar_select 0, %s5, %s3
  $region1: #{igala_forward.4} parent=0
    #allocation3 [shape = 'u8[262144]{0}', space=vmem, size = 0x40000, scoped, tag = 'input window, operand 0']
    loop: start=0, step=1, limit=17
    $region2: #{igala_forward.4} parent=1 // loop_pre_header
      _
    $region3: #{igala_forward.4} parent=1 // loop_header
      %s8 = sphi 0, %s12
      %p9 = scmp.ge.s32.totalorder %s8, 17
      %s15 = sphi 0, %s34
      %s16 = sphi 0, %s30
      %s17 = sphi 0, %s26
      %s18 = sphi 0, %s15
      %s19 = sphi 0, %s16
      %s20 = sphi 0, %s17
      %s21 = sphi 0, %s18
      %s22 = sphi 0, %s19
      %s23 = sphi 0, %s20
      %s39 = sphi 0, %s41
      %s42 = sphi 0, %s39
      %s43 = sphi 0, %s42
      %s59 = sphi 0, %s43
      %s65 = sphi 0, %s67
      %s68 = sphi 0, %s65
      %s69 = sphi 0, %s68
      %s85 = sphi 0, %s69
      %s93 = sphi 0, %s95
      %s96 = sphi 0, %s93
      %s97 = sphi 0, %s96
      %s113 = sphi 0, %s97
    $region4: #{igala_forward.4} parent=1 // loop_header_branch
      %11 = sbr.rel (%p9) target = $region8
    $region5: #{igala_forward.4} parent=1 // loop_body
      %s13 = ssub.s32 %s8, 1
      %s14 = ssub.s32 %s8, 2
      %s24 = sadd.s32 1, %s17
      %p25 = scmp.ge.s32.totalorder %s24, 5
      %s26 = scalar_select %p25, 0, %s24
      %s27 = sadd.s32 1, %s16
      %s28 = scalar_select %p25, %s27, %s16
      %p29 = scmp.ge.s32.totalorder %s28, 1
      %s30 = scalar_select %p29, 0, %s28
      %s31 = sadd.s32 1, %s15
      %s32 = scalar_select %p29, %s31, %s15
      %p33 = scmp.ge.s32.totalorder %s32, 3
      %s34 = scalar_select %p33, 0, %s32
      %s35 = ssub.s32 %s15, %s34
      %s36 = ssub.s32 %s17, %s26
      %s37 = sor.u32 %s35, %s36
      %p38 = scmp.eq.s32.totalorder %s37, 0
      %s40 = sadd.s32 %s39, 1
      %s41 = scalar_select %p38, %s39, %s40
      %p44 = pneg %p38
      %p45 = scmp.eq.s32.totalorder %s8, 14
      %p46 = por %p44, %p45
      %p47 = scmp.ne.s32.totalorder %s39, %s42
      %p48 = scmp.eq.s32.totalorder %s8, 0
      %p49 = por %p47, %p48
      %p50 = scmp.ne.s32.totalorder %s39, %s42
      %p51 = scmp.eq.s32.totalorder %s13, 14
      %p52 = por %p50, %p51
      %p53 = scmp.ne.s32.totalorder %s42, %s43
      %p54 = scmp.eq.s32.totalorder %s13, 0
      %p55 = por %p53, %p54
      %p56 = scmp.ne.s32.totalorder %s42, %s43
      %p57 = scmp.eq.s32.totalorder %s14, 14
      %p58 = por %p56, %p57
      %p60 = scmp.ne.s32.totalorder %s43, %s59
      %p61 = scmp.eq.s32.totalorder %s14, 0
      %p62 = por %p60, %p61
      %s63 = ssub.s32 %s16, %s30
      %p64 = scmp.eq.s32.totalorder %s63, 0
      %s66 = sadd.s32 %s65, 1
      %s67 = scalar_select %p64, %s65, %s66
      %p70 = pneg %p64
      %p71 = scmp.eq.s32.totalorder %s8, 14
      %p72 = por %p70, %p71
      %p73 = scmp.ne.s32.totalorder %s65, %s68
      %p74 = scmp.eq.s32.totalorder %s8, 0
      %p75 = por %p73, %p74
      %p76 = scmp.ne.s32.totalorder %s65, %s68
      %p77 = scmp.eq.s32.totalorder %s13, 14
      %p78 = por %p76, %p77
      %p79 = scmp.ne.s32.totalorder %s68, %s69
      %p80 = scmp.eq.s32.totalorder %s13, 0
      %p81 = por %p79, %p80
      %p82 = scmp.ne.s32.totalorder %s68, %s69
      %p83 = scmp.eq.s32.totalorder %s14, 14
      %p84 = por %p82, %p83
      %p86 = scmp.ne.s32.totalorder %s69, %s85
      %p87 = scmp.eq.s32.totalorder %s14, 0
      %p88 = por %p86, %p87
      %s89 = ssub.s32 %s15, %s34
      %s90 = ssub.s32 %s16, %s30
      %s91 = sor.u32 %s89, %s90
      %p92 = scmp.eq.s32.totalorder %s91, 0
      %s94 = sadd.s32 %s93, 1
      %s95 = scalar_select %p92, %s93, %s94
      %p98 = pneg %p92
      %p99 = scmp.eq.s32.totalorder %s8, 14
      %p100 = por %p98, %p99
      %p101 = scmp.ne.s32.totalorder %s93, %s96
      %p102 = scmp.eq.s32.totalorder %s8, 0
      %p103 = por %p101, %p102
      %p104 = scmp.ne.s32.totalorder %s93, %s96
      %p105 = scmp.eq.s32.totalorder %s13, 14
      %p106 = por %p104, %p105
      %p107 = scmp.ne.s32.totalorder %s96, %s97
      %p108 = scmp.eq.s32.totalorder %s13, 0
      %p109 = por %p107, %p108
      %p110 = scmp.ne.s32.totalorder %s96, %s97
      %p111 = scmp.eq.s32.totalorder %s14, 14
      %p112 = por %p110, %p111
      %p114 = scmp.ne.s32.totalorder %s97, %s113
      %p115 = scmp.eq.s32.totalorder %s14, 0
      %p116 = por %p114, %p115
      %p117 = scmp.le.s32.totalorder 1, %s8
      %p118 = scmp.lt.s32.totalorder %s8, 16
      %p119 = pnand %p117, %p118
      %p120 = pneg %p119
      // Predicated region
      $region9: #{igala_forward.4} parent=5 // pred_check
        _
      $region10: #{igala_forward.4} parent=5 // pred_check_branch
        %122 = sbr.rel (%p119) target = $region12
      $region11: #{igala_forward.4} parent=5 // pred_region
        %s123 = ssub.s32 %s8, 1
        // Predicated region
        $region13: #{igala_forward.4} parent=11 // pred_check
          %p124 = pneg %p81
        $region14: #{igala_forward.4} parent=11 // pred_check_branch
          %126 = sbr.rel (%p124) target = $region16
        $region15: #{igala_forward.4} parent=11 // pred_region
          %p127 = scmp.lt.s32.totalorder %s19, 0
          %s128 = scalar_select %p127, %s19, 0
          %s129 = smul.addr %s128, 8
          %s130 = scalar_lea.vmem %s1, %s129
        $region16: #{igala_forward.4} parent=11 // pred_fallthru
          _
      $region12: #{igala_forward.4} parent=5 // pred_fallthru
        _
      %p131 = scmp.lt.s32.totalorder %s8, 15
      // Predicated region
      $region17: #{igala_forward.4} parent=5 // pred_check
        %p132 = pneg %p131
      $region18: #{igala_forward.4} parent=5 // pred_check_branch
        %134 = sbr.rel (%p132) target = $region20
      $region19: #{igala_forward.4} parent=5 // pred_region
        // Predicated region
        $region21: #{igala_forward.4} parent=19 // pred_check
          %p135 = pneg %p49
        $region22: #{igala_forward.4} parent=19 // pred_check_branch
          %137 = sbr.rel (%p135) target = $region24
        $region23: #{igala_forward.4} parent=19 // pred_region
          %s138 = sand.u32 %s39, 1
          %s139 = sand.u32 %s39, 1
          %s140 = smul.addr %s139, 256
          %s141 = scalar_lea.vmem [#allocation3], %s140
          %s142 = smul.u32 32, %s15
          %s143 = smul.addr %s142, 5
          %s144 = sadd.s32 %s17, %s143
          %s145 = smul.addr %s144, 8
          %s146 = scalar_lea.vmem %s0, %s145
          // Predicated region
          $region25: #{igala_forward.4} parent=23 // pred_check
            _
          $region26: #{igala_forward.4} parent=23 // pred_check_branch
            %148 = sbr.rel (0) target = $region28
          $region27: #{igala_forward.4} parent=23 // pred_region
            // Predicated region
            $region29: #{igala_forward.4} parent=27 // pred_check
              _
            $region30: #{igala_forward.4} parent=27 // pred_check_branch
              %150 = sbr.rel (0) target = $region32
            $region31: #{igala_forward.4} parent=27 // pred_region
              // Predicated region
              $region44: #{igala_forward.4} parent=31 // pred_check
                _
              $region45: #{igala_forward.4} parent=31 // pred_check_branch
                %228 = sbr.rel (0) target = $region47
              $region46: #{igala_forward.4} parent=31 // pred_region
                loop: start=0, step=1, limit=1
                $region48: #{igala_forward.4} parent=46 // loop_pre_header
                  _
                $region49: #{igala_forward.4} parent=46 // loop_header
                  %s230 = sphi 0, %s234
                  %p231 = scmp.ge.s32.totalorder %s230, 1
                  %s235 = sphi %s146, %s146
                  %s236 = sphi %s141, %s141
                $region50: #{igala_forward.4} parent=46 // loop_header_branch
                  %233 = sbr.rel (%p231) target = $region54
                $region51: #{igala_forward.4} parent=46 // loop_body
                  %v237 = vld [vmem:[%s235] sm:$0xff]
                  %238 = vst [vmem:[%s236] sm:$0xff] %v237
                  %v239 = vld [vmem:[%s235 + $0x28] sm:$0xff]
                  %240 = vst [vmem:[%s236 + $0x8] sm:$0xff] %v239
                  %v241 = vld [vmem:[%s235 + $0x50] sm:$0xff]
                  %242 = vst [vmem:[%s236 + $0x10] sm:$0xff] %v241
                  %v243 = vld [vmem:[%s235 + $0x78] sm:$0xff]
                  %244 = vst [vmem:[%s236 + $0x18] sm:$0xff] %v243
                  %v245 = vld [vmem:[%s235 + $0xa0] sm:$0xff]
                  %246 = vst [vmem:[%s236 + $0x20] sm:$0xff] %v245
                  %v247 = vld [vmem:[%s235 + $0xc8] sm:$0xff]
                  %248 = vst [vmem:[%s236 + $0x28] sm:$0xff] %v247
                  %v249 = vld [vmem:[%s235 + $0xf0] sm:$0xff]
                  %250 = vst [vmem:[%s236 + $0x30] sm:$0xff] %v249
                  %v251 = vld [vmem:[%s235 + $0x118] sm:$0xff]
                  %252 = vst [vmem:[%s236 + $0x38] sm:$0xff] %v251
                  %v253 = vld [vmem:[%s235 + $0x140] sm:$0xff]
                  %254 = vst [vmem:[%s236 + $0x40] sm:$0xff] %v253
                  %v255 = vld [vmem:[%s235 + $0x168] sm:$0xff]
                  %256 = vst [vmem:[%s236 + $0x48] sm:$0xff] %v255
                  %v257 = vld [vmem:[%s235 + $0x190] sm:$0xff]
                  %258 = vst [vmem:[%s236 + $0x50] sm:$0xff] %v257
                  %v259 = vld [vmem:[%s235 + $0x1b8] sm:$0xff]
                  %260 = vst [vmem:[%s236 + $0x58] sm:$0xff] %v259
                  %v261 = vld [vmem:[%s235 + $0x1e0] sm:$0xff]
                  %262 = vst [vmem:[%s236 + $0x60] sm:$0xff] %v261
                  %v263 = vld [vmem:[%s235 + $0x208] sm:$0xff]
                  %264 = vst [vmem:[%s236 + $0x68] sm:$0xff] %v263
                  %v265 = vld [vmem:[%s235 + $0x230] sm:$0xff]
                  %266 = vst [vmem:[%s236 + $0x70] sm:$0xff] %v265
                  %v267 = vld [vmem:[%s235 + $0x258] sm:$0xff]
                  %268 = vst [vmem:[%s236 + $0x78] sm:$0xff] %v267
                  %v269 = vld [vmem:[%s235 + $0x280] sm:$0xff]
                  %270 = vst [vmem:[%s236 + $0x80] sm:$0xff] %v269
                  %v271 = vld [vmem:[%s235 + $0x2a8] sm:$0xff]
                  %272 = vst [vmem:[%s236 + $0x88] sm:$0xff] %v271
                  %v273 = vld [vmem:[%s235 + $0x2d0] sm:$0xff]
                  %274 = vst [vmem:[%s236 + $0x90] sm:$0xff] %v273
                  %v275 = vld [vmem:[%s235 + $0x2f8] sm:$0xff]
                  %276 = vst [vmem:[%s236 + $0x98] sm:$0xff] %v275
                  %v277 = vld [vmem:[%s235 + $0x320] sm:$0xff]
                  %278 = vst [vmem:[%s236 + $0xa0] sm:$0xff] %v277
                  %v279 = vld [vmem:[%s235 + $0x348] sm:$0xff]
                  %280 = vst [vmem:[%s236 + $0xa8] sm:$0xff] %v279
                  %v281 = vld [vmem:[%s235 + $0x370] sm:$0xff]
                  %282 = vst [vmem:[%s236 + $0xb0] sm:$0xff] %v281
                  %v283 = vld [vmem:[%s235 + $0x398] sm:$0xff]
                  %284 = vst [vmem:[%s236 + $0xb8] sm:$0xff] %v283
                  %v285 = vld [vmem:[%s235 + $0x3c0] sm:$0xff]
                  %286 = vst [vmem:[%s236 + $0xc0] sm:$0xff] %v285
                  %v287 = vld [vmem:[%s235 + $0x3e8] sm:$0xff]
                  %288 = vst [vmem:[%s236 + $0xc8] sm:$0xff] %v287
                  %v289 = vld [vmem:[%s235 + $0x410] sm:$0xff]
                  %290 = vst [vmem:[%s236 + $0xd0] sm:$0xff] %v289
                  %v291 = vld [vmem:[%s235 + $0x438] sm:$0xff]
                  %292 = vst [vmem:[%s236 + $0xd8] sm:$0xff] %v291
                  %v293 = vld [vmem:[%s235 + $0x460] sm:$0xff]
                  %294 = vst [vmem:[%s236 + $0xe0] sm:$0xff] %v293
                  %v295 = vld [vmem:[%s235 + $0x488] sm:$0xff]
                  %296 = vst [vmem:[%s236 + $0xe8] sm:$0xff] %v295
                  %v297 = vld [vmem:[%s235 + $0x4b0] sm:$0xff]
                  %298 = vst [vmem:[%s236 + $0xf0] sm:$0xff] %v297
                  %v299 = vld [vmem:[%s235 + $0x4d8] sm:$0xff]
                  %300 = vst [vmem:[%s236 + $0xf8] sm:$0xff] %v299
                $region52: #{igala_forward.4} parent=46 // loop_footer
                  %s234 = sadd.s32 1, %s230
                $region53: #{igala_forward.4} parent=46 // loop_footer_branch
                  %229 = sbr.rel target = $region49
                $region54: #{igala_forward.4} parent=46 // loop_exit
                  _
              $region47: #{igala_forward.4} parent=31 // pred_fallthru
                _
              // Predicated region
              $region55: #{igala_forward.4} parent=31 // pred_check
                _
              $region56: #{igala_forward.4} parent=31 // pred_check_branch
                %302 = sbr.rel target = $region58
              $region57: #{igala_forward.4} parent=31 // pred_region
                _
              $region58: #{igala_forward.4} parent=31 // pred_fallthru
                _
            $region32: #{igala_forward.4} parent=27 // pred_fallthru
              _
            // Predicated region
            $region33: #{igala_forward.4} parent=27 // pred_check
              _
            $region34: #{igala_forward.4} parent=27 // pred_check_branch
              %152 = sbr.rel target = $region36
            $region35: #{igala_forward.4} parent=27 // pred_region
              %s154 = ssub.s32 256, 1
              loop: start=0, step=1, limit=1
              $region37: #{igala_forward.4} parent=35 // loop_pre_header
                _
              $region38: #{igala_forward.4} parent=35 // loop_header
                %s156 = sphi 0, %s160
                %p157 = scmp.ge.s32.totalorder %s156, 1
                %s161 = sphi %s146, %s146
                %s162 = sphi %s141, %s141
              $region39: #{igala_forward.4} parent=35 // loop_header_branch
                %159 = sbr.rel (%p157) target = $region43
              $region40: #{igala_forward.4} parent=35 // loop_body
                %v163 = vld [vmem:[%s161] sm:%s154]
                %164 = vst [vmem:[%s162] sm:%s154] %v163
                %v165 = vld [vmem:[%s161 + $0x28] sm:%s154]
                %166 = vst [vmem:[%s162 + $0x8] sm:%s154] %v165
                %v167 = vld [vmem:[%s161 + $0x50] sm:%s154]
                %168 = vst [vmem:[%s162 + $0x10] sm:%s154] %v167
                %v169 = vld [vmem:[%s161 + $0x78] sm:%s154]
                %170 = vst [vmem:[%s162 + $0x18] sm:%s154] %v169
                %v171 = vld [vmem:[%s161 + $0xa0] sm:%s154]
                %172 = vst [vmem:[%s162 + $0x20] sm:%s154] %v171
                %v173 = vld [vmem:[%s161 + $0xc8] sm:%s154]
                %174 = vst [vmem:[%s162 + $0x28] sm:%s154] %v173
                %v175 = vld [vmem:[%s161 + $0xf0] sm:%s154]
                %176 = vst [vmem:[%s162 + $0x30] sm:%s154] %v175
                %v177 = vld [vmem:[%s161 + $0x118] sm:%s154]
                %178 = vst [vmem:[%s162 + $0x38] sm:%s154] %v177
                %v179 = vld [vmem:[%s161 + $0x140] sm:%s154]
                %180 = vst [vmem:[%s162 + $0x40] sm:%s154] %v179
                %v181 = vld [vmem:[%s161 + $0x168] sm:%s154]
                %182 = vst [vmem:[%s162 + $0x48] sm:%s154] %v181
                %v183 = vld [vmem:[%s161 + $0x190] sm:%s154]
                %184 = vst [vmem:[%s162 + $0x50] sm:%s154] %v183
                %v185 = vld [vmem:[%s161 + $0x1b8] sm:%s154]
                %186 = vst [vmem:[%s162 + $0x58] sm:%s154] %v185
                %v187 = vld [vmem:[%s161 + $0x1e0] sm:%s154]
                %188 = vst [vmem:[%s162 + $0x60] sm:%s154] %v187
                %v189 = vld [vmem:[%s161 + $0x208] sm:%s154]
                %190 = vst [vmem:[%s162 + $0x68] sm:%s154] %v189
                %v191 = vld [vmem:[%s161 + $0x230] sm:%s154]
                %192 = vst [vmem:[%s162 + $0x70] sm:%s154] %v191
                %v193 = vld [vmem:[%s161 + $0x258] sm:%s154]
                %194 = vst [vmem:[%s162 + $0x78] sm:%s154] %v193
                %v195 = vld [vmem:[%s161 + $0x280] sm:%s154]
                %196 = vst [vmem:[%s162 + $0x80] sm:%s154] %v195
                %v197 = vld [vmem:[%s161 + $0x2a8] sm:%s154]
                %198 = vst [vmem:[%s162 + $0x88] sm:%s154] %v197
                %v199 = vld [vmem:[%s161 + $0x2d0] sm:%s154]
                %200 = vst [vmem:[%s162 + $0x90] sm:%s154] %v199
                %v201 = vld [vmem:[%s161 + $0x2f8] sm:%s154]
                %202 = vst [vmem:[%s162 + $0x98] sm:%s154] %v201
                %v203 = vld [vmem:[%s161 + $0x320] sm:%s154]
                %204 = vst [vmem:[%s162 + $0xa0] sm:%s154] %v203
                %v205 = vld [vmem:[%s161 + $0x348] sm:%s154]
                %206 = vst [vmem:[%s162 + $0xa8] sm:%s154] %v205
                %v207 = vld [vmem:[%s161 + $0x370] sm:%s154]
                %208 = vst [vmem:[%s162 + $0xb0] sm:%s154] %v207
                %v209 = vld [vmem:[%s161 + $0x398] sm:%s154]
                %210 = vst [vmem:[%s162 + $0xb8] sm:%s154] %v209
                %v211 = vld [vmem:[%s161 + $0x3c0] sm:%s154]
                %212 = vst [vmem:[%s162 + $0xc0] sm:%s154] %v211
                %v213 = vld [vmem:[%s161 + $0x3e8] sm:%s154]
                %214 = vst [vmem:[%s162 + $0xc8] sm:%s154] %v213
                %v215 = vld [vmem:[%s161 + $0x410] sm:%s154]
                %216 = vst [vmem:[%s162 + $0xd0] sm:%s154] %v215
                %v217 = vld [vmem:[%s161 + $0x438] sm:%s154]
                %218 = vst [vmem:[%s162 + $0xd8] sm:%s154] %v217
                %v219 = vld [vmem:[%s161 + $0x460] sm:%s154]
                %220 = vst [vmem:[%s162 + $0xe0] sm:%s154] %v219
                %v221 = vld [vmem:[%s161 + $0x488] sm:%s154]
                %222 = vst [vmem:[%s162 + $0xe8] sm:%s154] %v221
                %v223 = vld [vmem:[%s161 + $0x4b0] sm:%s154]
                %224 = vst [vmem:[%s162 + $0xf0] sm:%s154] %v223
                %v225 = vld [vmem:[%s161 + $0x4d8] sm:%s154]
                %226 = vst [vmem:[%s162 + $0xf8] sm:%s154] %v225
              $region41: #{igala_forward.4} parent=35 // loop_footer
                %s160 = sadd.s32 1, %s156
              $region42: #{igala_forward.4} parent=35 // loop_footer_branch
                %155 = sbr.rel target = $region38
              $region43: #{igala_forward.4} parent=35 // loop_exit
                _
            $region36: #{igala_forward.4} parent=27 // pred_fallthru
              _
          $region28: #{igala_forward.4} parent=23 // pred_fallthru
            _
          %303 = vnop
        $region24: #{igala_forward.4} parent=19 // pred_fallthru
          _
      $region20: #{igala_forward.4} parent=5 // pred_fallthru
        _
      %p304 = scmp.le.s32.totalorder 1, %s8
      %p305 = scmp.lt.s32.totalorder %s8, 16
      %p306 = pnand %p304, %p305
      %p307 = pneg %p306
      // Predicated region
      $region59: #{igala_forward.4} parent=5 // pred_check
        _
      $region60: #{igala_forward.4} parent=5 // pred_check_branch
        %309 = sbr.rel (%p306) target = $region62
      $region61: #{igala_forward.4} parent=5 // pred_region
        %s310 = ssub.s32 %s8, 1
        %s311 = sand.u32 %s42, 1
        %s312 = sand.u32 %s42, 1
        %s313 = smul.addr %s312, 256
        %s314 = scalar_lea.vmem [#allocation3], %s313
        // Predicated region
        $region63: #{igala_forward.4} parent=61 // pred_check
          %p315 = pneg %p55
        $region64: #{igala_forward.4} parent=61 // pred_check_branch
          %317 = sbr.rel (%p315) target = $region66
        $region65: #{igala_forward.4} parent=61 // pred_region
          _
        $region66: #{igala_forward.4} parent=61 // pred_fallthru
          _
        %s318 = sand.u32 %s42, 1
        %s319 = sand.u32 %s42, 1
        %s320 = smul.addr %s319, 256
        %s321 = scalar_lea.vmem [#allocation3], %s320
        %p322 = pneg %p55
        %p323 = pneg %p52
        %p324 = scmp.lt.s32.totalorder %s19, 0
        %s325 = scalar_select %p324, %s19, 0
        %s326 = smul.addr %s325, 8
        %s327 = scalar_lea.vmem %s1, %s326
        %p328 = pneg %p81
        %p329 = pneg %p78
        %p330 = pneg %p109
        %p331 = pneg %p106
        %s332 = smul.u32 32, %s18
        %p333 = scmp.lt.s32.totalorder %s332, 95
        %s334 = scalar_select %p333, %s332, 95
        %p335 = scmp.lt.s32.totalorder %s19, 0
        %s336 = scalar_select %p335, %s19, 0
        %s337 = sadd.s32 %s336, %s334
        %s338 = smul.addr %s337, 8
        %s339 = scalar_lea.vmem %s2, %s338
        %s340 = smul.u32 32, %s18
        %p341 = scmp.lt.s32.totalorder %s19, 0
        %s342 = scalar_select %p341, %s19, 0
        %s343 = smul.addr %s342, 8
        %s344 = scalar_lea.vmem %s1, %s343
        %s345 = smul.u32 32, %s18
        %p346 = scmp.lt.s32.totalorder %s345, 95
        %s347 = scalar_select %p346, %s345, 95
        %p348 = scmp.lt.s32.totalorder %s19, 0
        %s349 = scalar_select %p348, %s19, 0
        %s350 = sadd.s32 %s349, %s347
        %s351 = smul.addr %s350, 8
        %s352 = scalar_lea.vmem %s2, %s351
        %s353 = smul.u32 32, %s18
        %p354 = scmp.eq.s32.totalorder %s20, 0
        // Predicated region
        $region67: #{igala_forward.4} parent=61 // pred_check
          %p355 = pneg %p354
        $region68: #{igala_forward.4} parent=61 // pred_check_branch
          %357 = sbr.rel (%p355) target = $region70
        $region69: #{igala_forward.4} parent=61 // pred_region
          %358 = vst [vmem:[#allocation2] sm:$0xff] 0.0
          %359 = vst [vmem:[#allocation2 + $0x8] sm:$0xff] 0.0
          %360 = vst [vmem:[#allocation2 + $0x10] sm:$0xff] 0.0
          %361 = vst [vmem:[#allocation2 + $0x18] sm:$0xff] 0.0
          %362 = vst [vmem:[#allocation2 + $0x20] sm:$0xff] 0.0
          %363 = vst [vmem:[#allocation2 + $0x28] sm:$0xff] 0.0
          %364 = vst [vmem:[#allocation2 + $0x30] sm:$0xff] 0.0
          %365 = vst [vmem:[#allocation2 + $0x38] sm:$0xff] 0.0
          %366 = vst [vmem:[#allocation2 + $0x40] sm:$0xff] 0.0
          %367 = vst [vmem:[#allocation2 + $0x48] sm:$0xff] 0.0
          %368 = vst [vmem:[#allocation2 + $0x50] sm:$0xff] 0.0
          %369 = vst [vmem:[#allocation2 + $0x58] sm:$0xff] 0.0
          %370 = vst [vmem:[#allocation2 + $0x60] sm:$0xff] 0.0
          %371 = vst [vmem:[#allocation2 + $0x68] sm:$0xff] 0.0
          %372 = vst [vmem:[#allocation2 + $0x70] sm:$0xff] 0.0
          %373 = vst [vmem:[#allocation2 + $0x78] sm:$0xff] 0.0
          %374 = vst [vmem:[#allocation2 + $0x80] sm:$0xff] 0.0
          %375 = vst [vmem:[#allocation2 + $0x88] sm:$0xff] 0.0
          %376 = vst [vmem:[#allocation2 + $0x90] sm:$0xff] 0.0
          %377 = vst [vmem:[#allocation2 + $0x98] sm:$0xff] 0.0
          %378 = vst [vmem:[#allocation2 + $0xa0] sm:$0xff] 0.0
          %379 = vst [vmem:[#allocation2 + $0xa8] sm:$0xff] 0.0
          %380 = vst [vmem:[#allocation2 + $0xb0] sm:$0xff] 0.0
          %381 = vst [vmem:[#allocation2 + $0xb8] sm:$0xff] 0.0
          %382 = vst [vmem:[#allocation2 + $0xc0] sm:$0xff] 0.0
          %383 = vst [vmem:[#allocation2 + $0xc8] sm:$0xff] 0.0
          %384 = vst [vmem:[#allocation2 + $0xd0] sm:$0xff] 0.0
          %385 = vst [vmem:[#allocation2 + $0xd8] sm:$0xff] 0.0
          %386 = vst [vmem:[#allocation2 + $0xe0] sm:$0xff] 0.0
          %387 = vst [vmem:[#allocation2 + $0xe8] sm:$0xff] 0.0
          %388 = vst [vmem:[#allocation2 + $0xf0] sm:$0xff] 0.0
          %389 = vst [vmem:[#allocation2 + $0xf8] sm:$0xff] 0.0
        $region70: #{igala_forward.4} parent=61 // pred_fallthru
          _
        %s390 = smul.u32 %s20, 128
        %v391 = vld [vmem:[#allocation2] sm:$0xff]
        %v392 = vld [vmem:[#allocation2 + $0x8] sm:$0xff]
        %v393 = vld [vmem:[#allocation2 + $0x10] sm:$0xff]
        %v394 = vld [vmem:[#allocation2 + $0x18] sm:$0xff]
        %v395 = vld [vmem:[#allocation2 + $0x20] sm:$0xff]
        %v396 = vld [vmem:[#allocation2 + $0x28] sm:$0xff]
        %v397 = vld [vmem:[#allocation2 + $0x30] sm:$0xff]
        %v398 = vld [vmem:[#allocation2 + $0x38] sm:$0xff]
        %v399 = vld [vmem:[#allocation2 + $0x40] sm:$0xff]
        %v400 = vld [vmem:[#allocation2 + $0x48] sm:$0xff]
        %v401 = vld [vmem:[#allocation2 + $0x50] sm:$0xff]
        %v402 = vld [vmem:[#allocation2 + $0x58] sm:$0xff]
        %v403 = vld [vmem:[#allocation2 + $0x60] sm:$0xff]
        %v404 = vld [vmem:[#allocation2 + $0x68] sm:$0xff]
        %v405 = vld [vmem:[#allocation2 + $0x70] sm:$0xff]
        %v406 = vld [vmem:[#allocation2 + $0x78] sm:$0xff]
        %v407 = vld [vmem:[#allocation2 + $0x80] sm:$0xff]
        %v408 = vld [vmem:[#allocation2 + $0x88] sm:$0xff]
        %v409 = vld [vmem:[#allocation2 + $0x90] sm:$0xff]
        %v410 = vld [vmem:[#allocation2 + $0x98] sm:$0xff]
        %v411 = vld [vmem:[#allocation2 + $0xa0] sm:$0xff]
        %v412 = vld [vmem:[#allocation2 + $0xa8] sm:$0xff]
        %v413 = vld [vmem:[#allocation2 + $0xb0] sm:$0xff]
        %v414 = vld [vmem:[#allocation2 + $0xb8] sm:$0xff]
        %v415 = vld [vmem:[#allocation2 + $0xc0] sm:$0xff]
        %v416 = vld [vmem:[#allocation2 + $0xc8] sm:$0xff]
        %v417 = vld [vmem:[#allocation2 + $0xd0] sm:$0xff]
        %v418 = vld [vmem:[#allocation2 + $0xd8] sm:$0xff]
        %v419 = vld [vmem:[#allocation2 + $0xe0] sm:$0xff]
        %v420 = vld [vmem:[#allocation2 + $0xe8] sm:$0xff]
        %v421 = vld [vmem:[#allocation2 + $0xf0] sm:$0xff]
        %v422 = vld [vmem:[#allocation2 + $0xf8] sm:$0xff]
        %v423 = vld [vmem:[%s314] sm:$0xff]
        %v424 = vld [vmem:[%s314 + $0x8] sm:$0xff]
        %v425 = vld [vmem:[%s314 + $0x10] sm:$0xff]
        %v426 = vld [vmem:[%s314 + $0x18] sm:$0xff]
        %v427 = vld [vmem:[%s314 + $0x20] sm:$0xff]
        %v428 = vld [vmem:[%s314 + $0x28] sm:$0xff]
        %v429 = vld [vmem:[%s314 + $0x30] sm:$0xff]
        %v430 = vld [vmem:[%s314 + $0x38] sm:$0xff]
        %v431 = vld [vmem:[%s314 + $0x40] sm:$0xff]
        %v432 = vld [vmem:[%s314 + $0x48] sm:$0xff]
        %v433 = vld [vmem:[%s314 + $0x50] sm:$0xff]
        %v434 = vld [vmem:[%s314 + $0x58] sm:$0xff]
        %v435 = vld [vmem:[%s314 + $0x60] sm:$0xff]
        %v436 = vld [vmem:[%s314 + $0x68] sm:$0xff]
        %v437 = vld [vmem:[%s314 + $0x70] sm:$0xff]
        %v438 = vld [vmem:[%s314 + $0x78] sm:$0xff]
        %v439 = vld [vmem:[%s314 + $0x80] sm:$0xff]
        %v440 = vld [vmem:[%s314 + $0x88] sm:$0xff]
        %v441 = vld [vmem:[%s314 + $0x90] sm:$0xff]
        %v442 = vld [vmem:[%s314 + $0x98] sm:$0xff]
        %v443 = vld [vmem:[%s314 + $0xa0] sm:$0xff]
        %v444 = vld [vmem:[%s314 + $0xa8] sm:$0xff]
        %v445 = vld [vmem:[%s314 + $0xb0] sm:$0xff]
        %v446 = vld [vmem:[%s314 + $0xb8] sm:$0xff]
        %v447 = vld [vmem:[%s314 + $0xc0] sm:$0xff]
        %v448 = vld [vmem:[%s314 + $0xc8] sm:$0xff]
        %v449 = vld [vmem:[%s314 + $0xd0] sm:$0xff]
        %v450 = vld [vmem:[%s314 + $0xd8] sm:$0xff]
        %v451 = vld [vmem:[%s314 + $0xe0] sm:$0xff]
        %v452 = vld [vmem:[%s314 + $0xe8] sm:$0xff]
        %v453 = vld [vmem:[%s314 + $0xf0] sm:$0xff]
        %v454 = vld [vmem:[%s314 + $0xf8] sm:$0xff]
        %s455 = scalar_lea.vmem %s344, %s390
        %v456 = vld [vmem:[%s455] sm:$0xff]
        %v457 = vld [vmem:[%s455 + $0x8] sm:$0xff]
        %v458 = vld [vmem:[%s455 + $0x10] sm:$0xff]
        %v459 = vld [vmem:[%s455 + $0x18] sm:$0xff]
        %v460 = vld [vmem:[%s455 + $0x20] sm:$0xff]
        %v461 = vld [vmem:[%s455 + $0x28] sm:$0xff]
        %v462 = vld [vmem:[%s455 + $0x30] sm:$0xff]
        %v463 = vld [vmem:[%s455 + $0x38] sm:$0xff]
        %v464 = vld [vmem:[%s455 + $0x40] sm:$0xff]
        %v465 = vld [vmem:[%s455 + $0x48] sm:$0xff]
        %v466 = vld [vmem:[%s455 + $0x50] sm:$0xff]
        %v467 = vld [vmem:[%s455 + $0x58] sm:$0xff]
        %v468 = vld [vmem:[%s455 + $0x60] sm:$0xff]
        %v469 = vld [vmem:[%s455 + $0x68] sm:$0xff]
        %v470 = vld [vmem:[%s455 + $0x70] sm:$0xff]
        %v471 = vld [vmem:[%s455 + $0x78] sm:$0xff]
        %472 = vmatprep.subr.mxu0 0.0
        %473 = vmatpush1.msra.mxu0 %v471
        %474 = vmatprep.subr.mxu0 0.0
        %475 = vmatpush1.msra.mxu0 %v470
        %476 = vmatprep.subr.mxu0 0.0
        %477 = vmatpush1.msra.mxu0 %v469
        %478 = vmatprep.subr.mxu0 0.0
        %479 = vmatpush1.msra.mxu0 %v468
        %480 = vmatprep.subr.mxu0 0.0
        %481 = vmatpush1.msra.mxu0 %v467
        %482 = vmatprep.subr.mxu0 0.0
        %483 = vmatpush1.msra.mxu0 %v466
        %484 = vmatprep.subr.mxu0 0.0
        %485 = vmatpush1.msra.mxu0 %v465
        %486 = vmatprep.subr.mxu0 0.0
        %487 = vmatpush1.msra.mxu0 %v464
        %488 = vmatprep.subr.mxu0 0.0
        %489 = vmatpush1.msra.mxu0 %v463
        %490 = vmatprep.subr.mxu0 0.0
        %491 = vmatpush1.msra.mxu0 %v462
        %492 = vmatprep.subr.mxu0 0.0
        %493 = vmatpush1.msra.mxu0 %v461
        %494 = vmatprep.subr.mxu0 0.0
        %495 = vmatpush1.msra.mxu0 %v460
        %496 = vmatprep.subr.mxu0 0.0
        %497 = vmatpush1.msra.mxu0 %v459
        %498 = vmatprep.subr.mxu0 0.0
        %499 = vmatpush1.msra.mxu0 %v458
        %500 = vmatprep.subr.mxu0 0.0
        %501 = vmatpush1.msra.mxu0 %v457
        %502 = vmatprep.subr.mxu0 0.0
        %503 = vmatpush1.msra.mxu0 %v456
        %504 = vmatprep.subr.mxu0 0.0
        %505 = vmatpush2.msra.mxu0 0.0
        %506 = vmatprep.subr.mxu0 0.0
        %507 = vmatpush2.msra.mxu0 0.0
        %508 = vmatprep.subr.mxu0 0.0
        %509 = vmatpush2.msra.mxu0 0.0
        %510 = vmatprep.subr.mxu0 0.0
        %511 = vmatpush2.msra.mxu0 0.0
        %512 = vmatprep.subr.mxu0 0.0
        %513 = vmatpush2.msra.mxu0 0.0
        %514 = vmatprep.subr.mxu0 0.0
        %515 = vmatpush2.msra.mxu0 0.0
        %516 = vmatprep.subr.mxu0 0.0
        %517 = vmatpush2.msra.mxu0 0.0
        %518 = vmatprep.subr.mxu0 0.0
        %519 = vmatpush2.msra.mxu0 0.0
        %520 = vmatprep.subr.mxu0 0.0
        %521 = vmatpush2.msra.mxu0 0.0
        %522 = vmatprep.subr.mxu0 0.0
        %523 = vmatpush2.msra.mxu0 0.0
        %524 = vmatprep.subr.mxu0 0.0
        %525 = vmatpush2.msra.mxu0 0.0
        %526 = vmatprep.subr.mxu0 0.0
        %527 = vmatpush2.msra.mxu0 0.0
        %528 = vmatprep.subr.mxu0 0.0
        %529 = vmatpush2.msra.mxu0 0.0
        %530 = vmatprep.subr.mxu0 0.0
        %531 = vmatpush2.msra.mxu0 0.0
        %532 = vmatprep.subr.mxu0 0.0
        %533 = vmatpush2.msra.mxu0 0.0
        %534 = vmatprep.subr.mxu0 0.0
        %535 = vmatpush2.msra.mxu0 0.0
        %536 = vmatprep.mubr.f32.mxu0 0.0
        %537 = vmatmul.mubr.f32.gmra.mxu0 %v423
        %v538 = vpop.f32.mrf.mxu0
        %v539 = vadd.f32 0.0, %v538
        %v540 = vpop.f32.mrf.mxu0
        %541 = vmatprep.mubr.f32.mxu0 0.0
        %542 = vmatmul.mubr.f32.gmra.mxu0 %v424
        %v543 = vpop.f32.mrf.mxu0
        %v544 = vadd.f32 0.0, %v543
        %v545 = vpop.f32.mrf.mxu0
        %546 = vmatprep.mubr.f32.mxu0 0.0
        %547 = vmatmul.mubr.f32.gmra.mxu0 %v425
        %v548 = vpop.f32.mrf.mxu0
        %v549 = vadd.f32 0.0, %v548
        %v550 = vpop.f32.mrf.mxu0
        %551 = vmatprep.mubr.f32.mxu0 0.0
        %552 = vmatmul.mubr.f32.gmra.mxu0 %v426
        %v553 = vpop.f32.mrf.mxu0
        %v554 = vadd.f32 0.0, %v553
        %v555 = vpop.f32.mrf.mxu0
        %556 = vmatprep.mubr.f32.mxu0 0.0
        %557 = vmatmul.mubr.f32.gmra.mxu0 %v427
        %v558 = vpop.f32.mrf.mxu0
        %v559 = vadd.f32 0.0, %v558
        %v560 = vpop.f32.mrf.mxu0
        %561 = vmatprep.mubr.f32.mxu0 0.0
        %562 = vmatmul.mubr.f32.gmra.mxu0 %v428
        %v563 = vpop.f32.mrf.mxu0
        %v564 = vadd.f32 0.0, %v563
        %v565 = vpop.f32.mrf.mxu0
        %566 = vmatprep.mubr.f32.mxu0 0.0
        %567 = vmatmul.mubr.f32.gmra.mxu0 %v429
        %v568 = vpop.f32.mrf.mxu0
        %v569 = vadd.f32 0.0, %v568
        %v570 = vpop.f32.mrf.mxu0
        %571 = vmatprep.mubr.f32.mxu0 0.0
        %572 = vmatmul.mubr.f32.gmra.mxu0 %v430
        %v573 = vpop.f32.mrf.mxu0
        %v574 = vadd.f32 0.0, %v573
        %v575 = vpop.f32.mrf.mxu0
        %576 = vmatprep.mubr.f32.mxu0 0.0
        %577 = vmatmul.mubr.f32.gmra.mxu0 %v431
        %v578 = vpop.f32.mrf.mxu0
        %v579 = vadd.f32 0.0, %v578
        %v580 = vpop.f32.mrf.mxu0
        %581 = vmatprep.mubr.f32.mxu0 0.0
        %582 = vmatmul.mubr.f32.gmra.mxu0 %v432
        %v583 = vpop.f32.mrf.mxu0
        %v584 = vadd.f32 0.0, %v583
        %v585 = vpop.f32.mrf.mxu0
        %586 = vmatprep.mubr.f32.mxu0 0.0
        %587 = vmatmul.mubr.f32.gmra.mxu0 %v433
        %v588 = vpop.f32.mrf.mxu0
        %v589 = vadd.f32 0.0, %v588
        %v590 = vpop.f32.mrf.mxu0
        %591 = vmatprep.mubr.f32.mxu0 0.0
        %592 = vmatmul.mubr.f32.gmra.mxu0 %v434
        %v593 = vpop.f32.mrf.mxu0
        %v594 = vadd.f32 0.0, %v593
        %v595 = vpop.f32.mrf.mxu0
        %596 = vmatprep.mubr.f32.mxu0 0.0
        %597 = vmatmul.mubr.f32.gmra.mxu0 %v435
        %v598 = vpop.f32.mrf.mxu0
        %v599 = vadd.f32 0.0, %v598
        %v600 = vpop.f32.mrf.mxu0
        %601 = vmatprep.mubr.f32.mxu0 0.0
        %602 = vmatmul.mubr.f32.gmra.mxu0 %v436
        %v603 = vpop.f32.mrf.mxu0
        %v604 = vadd.f32 0.0, %v603
        %v605 = vpop.f32.mrf.mxu0
        %606 = vmatprep.mubr.f32.mxu0 0.0
        %607 = vmatmul.mubr.f32.gmra.mxu0 %v437
        %v608 = vpop.f32.mrf.mxu0
        %v609 = vadd.f32 0.0, %v608
        %v610 = vpop.f32.mrf.mxu0
        %611 = vmatprep.mubr.f32.mxu0 0.0
        %612 = vmatmul.mubr.f32.gmra.mxu0 %v438
        %v613 = vpop.f32.mrf.mxu0
        %v614 = vadd.f32 0.0, %v613
        %v615 = vpop.f32.mrf.mxu0
        %616 = vmatprep.mubr.f32.mxu0 0.0
        %617 = vmatmul.mubr.f32.gmra.mxu0 %v439
        %v618 = vpop.f32.mrf.mxu0
        %v619 = vadd.f32 0.0, %v618
        %v620 = vpop.f32.mrf.mxu0
        %621 = vmatprep.mubr.f32.mxu0 0.0
        %622 = vmatmul.mubr.f32.gmra.mxu0 %v440
        %v623 = vpop.f32.mrf.mxu0
        %v624 = vadd.f32 0.0, %v623
        %v625 = vpop.f32.mrf.mxu0
        %626 = vmatprep.mubr.f32.mxu0 0.0
        %627 = vmatmul.mubr.f32.gmra.mxu0 %v441
        %v628 = vpop.f32.mrf.mxu0
        %v629 = vadd.f32 0.0, %v628
        %v630 = vpop.f32.mrf.mxu0
        %631 = vmatprep.mubr.f32.mxu0 0.0
        %632 = vmatmul.mubr.f32.gmra.mxu0 %v442
        %v633 = vpop.f32.mrf.mxu0
        %v634 = vadd.f32 0.0, %v633
        %v635 = vpop.f32.mrf.mxu0
        %636 = vmatprep.mubr.f32.mxu0 0.0
        %637 = vmatmul.mubr.f32.gmra.mxu0 %v443
        %v638 = vpop.f32.mrf.mxu0
        %v639 = vadd.f32 0.0, %v638
        %v640 = vpop.f32.mrf.mxu0
        %641 = vmatprep.mubr.f32.mxu0 0.0
        %642 = vmatmul.mubr.f32.gmra.mxu0 %v444
        %v643 = vpop.f32.mrf.mxu0
        %v644 = vadd.f32 0.0, %v643
        %v645 = vpop.f32.mrf.mxu0
        %646 = vmatprep.mubr.f32.mxu0 0.0
        %647 = vmatmul.mubr.f32.gmra.mxu0 %v445
        %v648 = vpop.f32.mrf.mxu0
        %v649 = vadd.f32 0.0, %v648
        %v650 = vpop.f32.mrf.mxu0
        %651 = vmatprep.mubr.f32.mxu0 0.0
        %652 = vmatmul.mubr.f32.gmra.mxu0 %v446
        %v653 = vpop.f32.mrf.mxu0
        %v654 = vadd.f32 0.0, %v653
        %v655 = vpop.f32.mrf.mxu0
        %656 = vmatprep.mubr.f32.mxu0 0.0
        %657 = vmatmul.mubr.f32.gmra.mxu0 %v447
        %v658 = vpop.f32.mrf.mxu0
        %v659 = vadd.f32 0.0, %v658
        %v660 = vpop.f32.mrf.mxu0
        %661 = vmatprep.mubr.f32.mxu0 0.0
        %662 = vmatmul.mubr.f32.gmra.mxu0 %v448
        %v663 = vpop.f32.mrf.mxu0
        %v664 = vadd.f32 0.0, %v663
        %v665 = vpop.f32.mrf.mxu0
        %666 = vmatprep.mubr.f32.mxu0 0.0
        %667 = vmatmul.mubr.f32.gmra.mxu0 %v449
        %v668 = vpop.f32.mrf.mxu0
        %v669 = vadd.f32 0.0, %v668
        %v670 = vpop.f32.mrf.mxu0
        %671 = vmatprep.mubr.f32.mxu0 0.0
        %672 = vmatmul.mubr.f32.gmra.mxu0 %v450
        %v673 = vpop.f32.mrf.mxu0
        %v674 = vadd.f32 0.0, %v673
        %v675 = vpop.f32.mrf.mxu0
        %676 = vmatprep.mubr.f32.mxu0 0.0
        %677 = vmatmul.mubr.f32.gmra.mxu0 %v451
        %v678 = vpop.f32.mrf.mxu0
        %v679 = vadd.f32 0.0, %v678
        %v680 = vpop.f32.mrf.mxu0
        %681 = vmatprep.mubr.f32.mxu0 0.0
        %682 = vmatmul.mubr.f32.gmra.mxu0 %v452
        %v683 = vpop.f32.mrf.mxu0
        %v684 = vadd.f32 0.0, %v683
        %v685 = vpop.f32.mrf.mxu0
        %686 = vmatprep.mubr.f32.mxu0 0.0
        %687 = vmatmul.mubr.f32.gmra.mxu0 %v453
        %v688 = vpop.f32.mrf.mxu0
        %v689 = vadd.f32 0.0, %v688
        %v690 = vpop.f32.mrf.mxu0
        %691 = vmatprep.mubr.f32.mxu0 0.0
        %692 = vmatmul.mubr.f32.gmra.mxu0 %v454
        %v693 = vpop.f32.mrf.mxu0
        %v694 = vadd.f32 0.0, %v693
        %v695 = vpop.f32.mrf.mxu0
        %696 = vdwg.mxu0
        %v697 = vadd.f32 %v391, %v539
        %v698 = vadd.f32 %v392, %v544
        %v699 = vadd.f32 %v393, %v549
        %v700 = vadd.f32 %v394, %v554
        %v701 = vadd.f32 %v395, %v559
        %v702 = vadd.f32 %v396, %v564
        %v703 = vadd.f32 %v397, %v569
        %v704 = vadd.f32 %v398, %v574
        %v705 = vadd.f32 %v399, %v579
        %v706 = vadd.f32 %v400, %v584
        %v707 = vadd.f32 %v401, %v589
        %v708 = vadd.f32 %v402, %v594
        %v709 = vadd.f32 %v403, %v599
        %v710 = vadd.f32 %v404, %v604
        %v711 = vadd.f32 %v405, %v609
        %v712 = vadd.f32 %v406, %v614
        %v713 = vadd.f32 %v407, %v619
        %v714 = vadd.f32 %v408, %v624
        %v715 = vadd.f32 %v409, %v629
        %v716 = vadd.f32 %v410, %v634
        %v717 = vadd.f32 %v411, %v639
        %v718 = vadd.f32 %v412, %v644
        %v719 = vadd.f32 %v413, %v649
        %v720 = vadd.f32 %v414, %v654
        %v721 = vadd.f32 %v415, %v659
        %v722 = vadd.f32 %v416, %v664
        %v723 = vadd.f32 %v417, %v669
        %v724 = vadd.f32 %v418, %v674
        %v725 = vadd.f32 %v419, %v679
        %v726 = vadd.f32 %v420, %v684
        %v727 = vadd.f32 %v421, %v689
        %v728 = vadd.f32 %v422, %v694
        %729 = vst [vmem:[#allocation2] sm:$0xff] %v697
        %730 = vst [vmem:[#allocation2 + $0x8] sm:$0xff] %v698
        %731 = vst [vmem:[#allocation2 + $0x10] sm:$0xff] %v699
        %732 = vst [vmem:[#allocation2 + $0x18] sm:$0xff] %v700
        %733 = vst [vmem:[#allocation2 + $0x20] sm:$0xff] %v701
        %734 = vst [vmem:[#allocation2 + $0x28] sm:$0xff] %v702
        %735 = vst [vmem:[#allocation2 + $0x30] sm:$0xff] %v703
        %736 = vst [vmem:[#allocation2 + $0x38] sm:$0xff] %v704
        %737 = vst [vmem:[#allocation2 + $0x40] sm:$0xff] %v705
        %738 = vst [vmem:[#allocation2 + $0x48] sm:$0xff] %v706
        %739 = vst [vmem:[#allocation2 + $0x50] sm:$0xff] %v707
        %740 = vst [vmem:[#allocation2 + $0x58] sm:$0xff] %v708
        %741 = vst [vmem:[#allocation2 + $0x60] sm:$0xff] %v709
        %742 = vst [vmem:[#allocation2 + $0x68] sm:$0xff] %v710
        %743 = vst [vmem:[#allocation2 + $0x70] sm:$0xff] %v711
        %744 = vst [vmem:[#allocation2 + $0x78] sm:$0xff] %v712
        %745 = vst [vmem:[#allocation2 + $0x80] sm:$0xff] %v713
        %746 = vst [vmem:[#allocation2 + $0x88] sm:$0xff] %v714
        %747 = vst [vmem:[#allocation2 + $0x90] sm:$0xff] %v715
        %748 = vst [vmem:[#allocation2 + $0x98] sm:$0xff] %v716
        %749 = vst [vmem:[#allocation2 + $0xa0] sm:$0xff] %v717
        %750 = vst [vmem:[#allocation2 + $0xa8] sm:$0xff] %v718
        %751 = vst [vmem:[#allocation2 + $0xb0] sm:$0xff] %v719
        %752 = vst [vmem:[#allocation2 + $0xb8] sm:$0xff] %v720
        %753 = vst [vmem:[#allocation2 + $0xc0] sm:$0xff] %v721
        %754 = vst [vmem:[#allocation2 + $0xc8] sm:$0xff] %v722
        %755 = vst [vmem:[#allocation2 + $0xd0] sm:$0xff] %v723
        %756 = vst [vmem:[#allocation2 + $0xd8] sm:$0xff] %v724
        %757 = vst [vmem:[#allocation2 + $0xe0] sm:$0xff] %v725
        %758 = vst [vmem:[#allocation2 + $0xe8] sm:$0xff] %v726
        %759 = vst [vmem:[#allocation2 + $0xf0] sm:$0xff] %v727
        %760 = vst [vmem:[#allocation2 + $0xf8] sm:$0xff] %v728
        %p761 = scmp.eq.s32.totalorder %s20, 4
        // Predicated region
        $region71: #{igala_forward.4} parent=61 // pred_check
          %p762 = pneg %p761
        $region72: #{igala_forward.4} parent=61 // pred_check_branch
          %764 = sbr.rel (%p762) target = $region74
        $region73: #{igala_forward.4} parent=61 // pred_region
          %v765 = vld [vmem:[#allocation2] sm:$0xff]
          %v766 = vld [vmem:[#allocation2 + $0x8] sm:$0xff]
          %v767 = vld [vmem:[#allocation2 + $0x10] sm:$0xff]
          %v768 = vld [vmem:[#allocation2 + $0x18] sm:$0xff]
          %v769 = vld [vmem:[#allocation2 + $0x20] sm:$0xff]
          %v770 = vld [vmem:[#allocation2 + $0x28] sm:$0xff]
          %v771 = vld [vmem:[#allocation2 + $0x30] sm:$0xff]
          %v772 = vld [vmem:[#allocation2 + $0x38] sm:$0xff]
          %v773 = vld [vmem:[#allocation2 + $0x40] sm:$0xff]
          %v774 = vld [vmem:[#allocation2 + $0x48] sm:$0xff]
          %v775 = vld [vmem:[#allocation2 + $0x50] sm:$0xff]
          %v776 = vld [vmem:[#allocation2 + $0x58] sm:$0xff]
          %v777 = vld [vmem:[#allocation2 + $0x60] sm:$0xff]
          %v778 = vld [vmem:[#allocation2 + $0x68] sm:$0xff]
          %v779 = vld [vmem:[#allocation2 + $0x70] sm:$0xff]
          %v780 = vld [vmem:[#allocation2 + $0x78] sm:$0xff]
          %v781 = vld [vmem:[#allocation2 + $0x80] sm:$0xff]
          %v782 = vld [vmem:[#allocation2 + $0x88] sm:$0xff]
          %v783 = vld [vmem:[#allocation2 + $0x90] sm:$0xff]
          %v784 = vld [vmem:[#allocation2 + $0x98] sm:$0xff]
          %v785 = vld [vmem:[#allocation2 + $0xa0] sm:$0xff]
          %v786 = vld [vmem:[#allocation2 + $0xa8] sm:$0xff]
          %v787 = vld [vmem:[#allocation2 + $0xb0] sm:$0xff]
          %v788 = vld [vmem:[#allocation2 + $0xb8] sm:$0xff]
          %v789 = vld [vmem:[#allocation2 + $0xc0] sm:$0xff]
          %v790 = vld [vmem:[#allocation2 + $0xc8] sm:$0xff]
          %v791 = vld [vmem:[#allocation2 + $0xd0] sm:$0xff]
          %v792 = vld [vmem:[#allocation2 + $0xd8] sm:$0xff]
          %v793 = vld [vmem:[#allocation2 + $0xe0] sm:$0xff]
          %v794 = vld [vmem:[#allocation2 + $0xe8] sm:$0xff]
          %v795 = vld [vmem:[#allocation2 + $0xf0] sm:$0xff]
          %v796 = vld [vmem:[#allocation2 + $0xf8] sm:$0xff]
          %v797 = vmax.f32 %v765, 0.0
          %v798 = vmax.f32 %v766, 0.0
          %v799 = vmax.f32 %v767, 0.0
          %v800 = vmax.f32 %v768, 0.0
          %v801 = vmax.f32 %v769, 0.0
          %v802 = vmax.f32 %v770, 0.0
          %v803 = vmax.f32 %v771, 0.0
          %v804 = vmax.f32 %v772, 0.0
          %v805 = vmax.f32 %v773, 0.0
          %v806 = vmax.f32 %v774, 0.0
          %v807 = vmax.f32 %v775, 0.0
          %v808 = vmax.f32 %v776, 0.0
          %v809 = vmax.f32 %v777, 0.0
          %v810 = vmax.f32 %v778, 0.0
          %v811 = vmax.f32 %v779, 0.0
          %v812 = vmax.f32 %v780, 0.0
          %v813 = vmax.f32 %v781, 0.0
          %v814 = vmax.f32 %v782, 0.0
          %v815 = vmax.f32 %v783, 0.0
          %v816 = vmax.f32 %v784, 0.0
          %v817 = vmax.f32 %v785, 0.0
          %v818 = vmax.f32 %v786, 0.0
          %v819 = vmax.f32 %v787, 0.0
          %v820 = vmax.f32 %v788, 0.0
          %v821 = vmax.f32 %v789, 0.0
          %v822 = vmax.f32 %v790, 0.0
          %v823 = vmax.f32 %v791, 0.0
          %v824 = vmax.f32 %v792, 0.0
          %v825 = vmax.f32 %v793, 0.0
          %v826 = vmax.f32 %v794, 0.0
          %v827 = vmax.f32 %v795, 0.0
          %v828 = vmax.f32 %v796, 0.0
          %829 = vst [vmem:[%s352] sm:$0xff] %v797
          %830 = vst [vmem:[%s352 + $0x8] sm:$0xff] %v798
          %831 = vst [vmem:[%s352 + $0x10] sm:$0xff] %v799
          %832 = vst [vmem:[%s352 + $0x18] sm:$0xff] %v800
          %833 = vst [vmem:[%s352 + $0x20] sm:$0xff] %v801
          %834 = vst [vmem:[%s352 + $0x28] sm:$0xff] %v802
          %835 = vst [vmem:[%s352 + $0x30] sm:$0xff] %v803
          %836 = vst [vmem:[%s352 + $0x38] sm:$0xff] %v804
          %837 = vst [vmem:[%s352 + $0x40] sm:$0xff] %v805
          %838 = vst [vmem:[%s352 + $0x48] sm:$0xff] %v806
          %839 = vst [vmem:[%s352 + $0x50] sm:$0xff] %v807
          %840 = vst [vmem:[%s352 + $0x58] sm:$0xff] %v808
          %841 = vst [vmem:[%s352 + $0x60] sm:$0xff] %v809
          %842 = vst [vmem:[%s352 + $0x68] sm:$0xff] %v810
          %843 = vst [vmem:[%s352 + $0x70] sm:$0xff] %v811
          %844 = vst [vmem:[%s352 + $0x78] sm:$0xff] %v812
          %845 = vst [vmem:[%s352 + $0x80] sm:$0xff] %v813
          %846 = vst [vmem:[%s352 + $0x88] sm:$0xff] %v814
          %847 = vst [vmem:[%s352 + $0x90] sm:$0xff] %v815
          %848 = vst [vmem:[%s352 + $0x98] sm:$0xff] %v816
          %849 = vst [vmem:[%s352 + $0xa0] sm:$0xff] %v817
          %850 = vst [vmem:[%s352 + $0xa8] sm:$0xff] %v818
          %851 = vst [vmem:[%s352 + $0xb0] sm:$0xff] %v819
          %852 = vst [vmem:[%s352 + $0xb8] sm:$0xff] %v820
          %853 = vst [vmem:[%s352 + $0xc0] sm:$0xff] %v821
          %854 = vst [vmem:[%s352 + $0xc8] sm:$0xff] %v822
          %855 = vst [vmem:[%s352 + $0xd0] sm:$0xff] %v823
          %856 = vst [vmem:[%s352 + $0xd8] sm:$0xff] %v824
          %857 = vst [vmem:[%s352 + $0xe0] sm:$0xff] %v825
          %858 = vst [vmem:[%s352 + $0xe8] sm:$0xff] %v826
          %859 = vst [vmem:[%s352 + $0xf0] sm:$0xff] %v827
          %860 = vst [vmem:[%s352 + $0xf8] sm:$0xff] %v828
        $region74: #{igala_forward.4} parent=61 // pred_fallthru
          _
        %s861 = smul.u32 32, %s18
        %p862 = scmp.lt.s32.totalorder %s861, 95
        %s863 = scalar_select %p862, %s861, 95
        %p864 = scmp.lt.s32.totalorder %s19, 0
        %s865 = scalar_select %p864, %s19, 0
        %s866 = sadd.s32 %s865, %s863
        %s867 = smul.addr %s866, 8
        %s868 = scalar_lea.vmem %s2, %s867
        // Predicated region
        $region75: #{igala_forward.4} parent=61 // pred_check
          %p869 = pneg %p106
        $region76: #{igala_forward.4} parent=61 // pred_check_branch
          %871 = sbr.rel (%p869) target = $region78
        $region77: #{igala_forward.4} parent=61 // pred_region
          %s872 = smul.u32 32, %s18
        $region78: #{igala_forward.4} parent=61 // pred_fallthru
          _
      $region62: #{igala_forward.4} parent=5 // pred_fallthru
        _
      %p873 = scmp.le.s32.totalorder 2, %s8
      // Predicated region
      $region79: #{igala_forward.4} parent=5 // pred_check
        %p874 = pneg %p873
      $region80: #{igala_forward.4} parent=5 // pred_check_branch
        %876 = sbr.rel (%p874) target = $region82
      $region81: #{igala_forward.4} parent=5 // pred_region
        %s877 = ssub.s32 %s8, 2
        // Predicated region
        $region83: #{igala_forward.4} parent=81 // pred_check
          %p878 = pneg %p112
        $region84: #{igala_forward.4} parent=81 // pred_check_branch
          %880 = sbr.rel (%p878) target = $region86
        $region85: #{igala_forward.4} parent=81 // pred_region
          %s881 = smul.u32 32, %s21
          %p882 = scmp.lt.s32.totalorder %s881, 95
          %s883 = scalar_select %p882, %s881, 95
          %p884 = scmp.lt.s32.totalorder %s22, 0
          %s885 = scalar_select %p884, %s22, 0
          %s886 = sadd.s32 %s885, %s883
          %s887 = smul.addr %s886, 8
          %s888 = scalar_lea.vmem %s2, %s887
        $region86: #{igala_forward.4} parent=81 // pred_fallthru
          _
      $region82: #{igala_forward.4} parent=5 // pred_fallthru
        _
    $region6: #{igala_forward.4} parent=1 // loop_footer
      %s12 = sadd.s32 1, %s8
    $region7: #{igala_forward.4} parent=1 // loop_footer_branch
      %7 = sbr.rel target = $region3
    $region8: #{igala_forward.4} parent=1 // loop_exit
      _

// kernel: igala_forward.5
$region0: #{igala_forward.5}
  #allocation0 [shape = 'u32[]', space=smem, size = 0x4, offset = 0x4, fixed_abs, tag = 'smem constant byte address 0x4 - core index']
  #allocation1 [shape = 'u32[144,128]{1,0:T(1,128)}', space=vmem, size = 0x12000, scoped, tag = 'internal scratch']
  #allocation2 [shape = 'f32[256,128]{1,0:T(8,128)}', space=vmem, size = 0x20000, scoped, tag = 'scratch operand']
  %s0 = inlined_call_operand.vmem [shape: f32[768,640], index: 0, kind: input, shape index: {}]
  %s1 = inlined_call_operand.vmem [shape: f32[640,128], index: 1, kind: input, shape index: {}]
  %s2 = inlined_call_operand.vmem [shape: f32[768,128], index: 2, kind: output, shape index: {}]
  %s3 = sld [smem:[#allocation0]]
  $region87: #{igala_forward.5} parent=0
    _
  %s5 = ssub.s32 1, %s3
  %s6 = scalar_select 0, %s5, %s3
  $region1: #{igala_forward.5} parent=0
    #allocation3 [shape = 'u8[262144]{0}', space=vmem, size = 0x40000, scoped, tag = 'input window, operand 0']
    loop: start=0, step=1, limit=17
    $region2: #{igala_forward.5} parent=1 // loop_pre_header
      _
    $region3: #{igala_forward.5} parent=1 // loop_header
      %s8 = sphi 0, %s12
      %p9 = scmp.ge.s32.totalorder %s8, 17
      %s15 = sphi 0, %s34
      %s16 = sphi 0, %s30
      %s17 = sphi 0, %s26
      %s18 = sphi 0, %s15
      %s19 = sphi 0, %s16
      %s20 = sphi 0, %s17
      %s21 = sphi 0, %s18
      %s22 = sphi 0, %s19
      %s23 = sphi 0, %s20
      %s39 = sphi 0, %s41
      %s42 = sphi 0, %s39
      %s43 = sphi 0, %s42
      %s59 = sphi 0, %s43
      %s65 = sphi 0, %s67
      %s68 = sphi 0, %s65
      %s69 = sphi 0, %s68
      %s85 = sphi 0, %s69
      %s93 = sphi 0, %s95
      %s96 = sphi 0, %s93
      %s97 = sphi 0, %s96
      %s113 = sphi 0, %s97
    $region4: #{igala_forward.5} parent=1 // loop_header_branch
      %11 = sbr.rel (%p9) target = $region8
    $region5: #{igala_forward.5} parent=1 // loop_body
      %s13 = ssub.s32 %s8, 1
      %s14 = ssub.s32 %s8, 2
      %s24 = sadd.s32 1, %s17
      %p25 = scmp.ge.s32.totalorder %s24, 5
      %s26 = scalar_select %p25, 0, %s24
      %s27 = sadd.s32 1, %s16
      %s28 = scalar_select %p25, %s27, %s16
      %p29 = scmp.ge.s32.totalorder %s28, 1
      %s30 = scalar_select %p29, 0, %s28
      %s31 = sadd.s32 1, %s15
      %s32 = scalar_select %p29, %s31, %s15
      %p33 = scmp.ge.s32.totalorder %s32, 3
      %s34 = scalar_select %p33, 0, %s32
      %s35 = ssub.s32 %s15, %s34
      %s36 = ssub.s32 %s17, %s26
      %s37 = sor.u32 %s35, %s36
      %p38 = scmp.eq.s32.totalorder %s37, 0
      %s40 = sadd.s32 %s39, 1
      %s41 = scalar_select %p38, %s39, %s40
      %p44 = pneg %p38
      %p45 = scmp.eq.s32.totalorder %s8, 14
      %p46 = por %p44, %p45
      %p47 = scmp.ne.s32.totalorder %s39, %s42
      %p48 = scmp.eq.s32.totalorder %s8, 0
      %p49 = por %p47, %p48
      %p50 = scmp.ne.s32.totalorder %s39, %s42
      %p51 = scmp.eq.s32.totalorder %s13, 14
      %p52 = por %p50, %p51
      %p53 = scmp.ne.s32.totalorder %s42, %s43
      %p54 = scmp.eq.s32.totalorder %s13, 0
      %p55 = por %p53, %p54
      %p56 = scmp.ne.s32.totalorder %s42, %s43
      %p57 = scmp.eq.s32.totalorder %s14, 14
      %p58 = por %p56, %p57
      %p60 = scmp.ne.s32.totalorder %s43, %s59
      %p61 = scmp.eq.s32.totalorder %s14, 0
      %p62 = por %p60, %p61
      %s63 = ssub.s32 %s16, %s30
      %p64 = scmp.eq.s32.totalorder %s63, 0
      %s66 = sadd.s32 %s65, 1
      %s67 = scalar_select %p64, %s65, %s66
      %p70 = pneg %p64
      %p71 = scmp.eq.s32.totalorder %s8, 14
      %p72 = por %p70, %p71
      %p73 = scmp.ne.s32.totalorder %s65, %s68
      %p74 = scmp.eq.s32.totalorder %s8, 0
      %p75 = por %p73, %p74
      %p76 = scmp.ne.s32.totalorder %s65, %s68
      %p77 = scmp.eq.s32.totalorder %s13, 14
      %p78 = por %p76, %p77
      %p79 = scmp.ne.s32.totalorder %s68, %s69
      %p80 = scmp.eq.s32.totalorder %s13, 0
      %p81 = por %p79, %p80
      %p82 = scmp.ne.s32.totalorder %s68, %s69
      %p83 = scmp.eq.s32.totalorder %s14, 14
      %p84 = por %p82, %p83
      %p86 = scmp.ne.s32.totalorder %s69, %s85
      %p87 = scmp.eq.s32.totalorder %s14, 0
      %p88 = por %p86, %p87
      %s89 = ssub.s32 %s15, %s34
      %s90 = ssub.s32 %s16, %s30
      %s91 = sor.u32 %s89, %s90
      %p92 = scmp.eq.s32.totalorder %s91, 0
      %s94 = sadd.s32 %s93, 1
      %s95 = scalar_select %p92, %s93, %s94
      %p98 = pneg %p92
      %p99 = scmp.eq.s32.totalorder %s8, 14
      %p100 = por %p98, %p99
      %p101 = scmp.ne.s32.totalorder %s93, %s96
      %p102 = scmp.eq.s32.totalorder %s8, 0
      %p103 = por %p101, %p102
      %p104 = scmp.ne.s32.totalorder %s93, %s96
      %p105 = scmp.eq.s32.totalorder %s13, 14
      %p106 = por %p104, %p105
      %p107 = scmp.ne.s32.totalorder %s96, %s97
      %p108 = scmp.eq.s32.totalorder %s13, 0
      %p109 = por %p107, %p108
      %p110 = scmp.ne.s32.totalorder %s96, %s97
      %p111 = scmp.eq.s32.totalorder %s14, 14
      %p112 = por %p110, %p111
      %p114 = scmp.ne.s32.totalorder %s97, %s113
      %p115 = scmp.eq.s32.totalorder %s14, 0
      %p116 = por %p114, %p115
      %p117 = scmp.le.s32.totalorder 1, %s8
      %p118 = scmp.lt.s32.totalorder %s8, 16
      %p119 = pnand %p117, %p118
      %p120 = pneg %p119
      // Predicated region
      $region9: #{igala_forward.5} parent=5 // pred_check
        _
      $region10: #{igala_forward.5} parent=5 // pred_check_branch
        %122 = sbr.rel (%p119) target = $region12
      $region11: #{igala_forward.5} parent=5 // pred_region
        %s123 = ssub.s32 %s8, 1
        // Predicated region
        $region13: #{igala_forward.5} parent=11 // pred_check
          %p124 = pneg %p81
        $region14: #{igala_forward.5} parent=11 // pred_check_branch
          %126 = sbr.rel (%p124) target = $region16
        $region15: #{igala_forward.5} parent=11 // pred_region
          %p127 = scmp.lt.s32.totalorder %s19, 0
          %s128 = scalar_select %p127, %s19, 0
          %s129 = smul.addr %s128, 8
          %s130 = scalar_lea.vmem %s1, %s129
        $region16: #{igala_forward.5} parent=11 // pred_fallthru
          _
      $region12: #{igala_forward.5} parent=5 // pred_fallthru
        _
      %p131 = scmp.lt.s32.totalorder %s8, 15
      // Predicated region
      $region17: #{igala_forward.5} parent=5 // pred_check
        %p132 = pneg %p131
      $region18: #{igala_forward.5} parent=5 // pred_check_branch
        %134 = sbr.rel (%p132) target = $region20
      $region19: #{igala_forward.5} parent=5 // pred_region
        // Predicated region
        $region21: #{igala_forward.5} parent=19 // pred_check
          %p135 = pneg %p49
        $region22: #{igala_forward.5} parent=19 // pred_check_branch
          %137 = sbr.rel (%p135) target = $region24
        $region23: #{igala_forward.5} parent=19 // pred_region
          %s138 = sand.u32 %s39, 1
          %s139 = sand.u32 %s39, 1
          %s140 = smul.addr %s139, 256
          %s141 = scalar_lea.vmem [#allocation3], %s140
          %s142 = smul.u32 32, %s15
          %s143 = smul.addr %s142, 5
          %s144 = sadd.s32 %s17, %s143
          %s145 = smul.addr %s144, 8
          %s146 = scalar_lea.vmem %s0, %s145
          // Predicated region
          $region25: #{igala_forward.5} parent=23 // pred_check
            _
          $region26: #{igala_forward.5} parent=23 // pred_check_branch
            %148 = sbr.rel (0) target = $region28
          $region27: #{igala_forward.5} parent=23 // pred_region
            // Predicated region
            $region29: #{igala_forward.5} parent=27 // pred_check
              _
            $region30: #{igala_forward.5} parent=27 // pred_check_branch
              %150 = sbr.rel (0) target = $region32
            $region31: #{igala_forward.5} parent=27 // pred_region
              // Predicated region
              $region44: #{igala_forward.5} parent=31 // pred_check
                _
              $region45: #{igala_forward.5} parent=31 // pred_check_branch
                %228 = sbr.rel (0) target = $region47
              $region46: #{igala_forward.5} parent=31 // pred_region
                loop: start=0, step=1, limit=1
                $region48: #{igala_forward.5} parent=46 // loop_pre_header
                  _
                $region49: #{igala_forward.5} parent=46 // loop_header
                  %s230 = sphi 0, %s234
                  %p231 = scmp.ge.s32.totalorder %s230, 1
                  %s235 = sphi %s146, %s146
                  %s236 = sphi %s141, %s141
                $region50: #{igala_forward.5} parent=46 // loop_header_branch
                  %233 = sbr.rel (%p231) target = $region54
                $region51: #{igala_forward.5} parent=46 // loop_body
                  %v237 = vld [vmem:[%s235] sm:$0xff]
                  %238 = vst [vmem:[%s236] sm:$0xff] %v237
                  %v239 = vld [vmem:[%s235 + $0x28] sm:$0xff]
                  %240 = vst [vmem:[%s236 + $0x8] sm:$0xff] %v239
                  %v241 = vld [vmem:[%s235 + $0x50] sm:$0xff]
                  %242 = vst [vmem:[%s236 + $0x10] sm:$0xff] %v241
                  %v243 = vld [vmem:[%s235 + $0x78] sm:$0xff]
                  %244 = vst [vmem:[%s236 + $0x18] sm:$0xff] %v243
                  %v245 = vld [vmem:[%s235 + $0xa0] sm:$0xff]
                  %246 = vst [vmem:[%s236 + $0x20] sm:$0xff] %v245
                  %v247 = vld [vmem:[%s235 + $0xc8] sm:$0xff]
                  %248 = vst [vmem:[%s236 + $0x28] sm:$0xff] %v247
                  %v249 = vld [vmem:[%s235 + $0xf0] sm:$0xff]
                  %250 = vst [vmem:[%s236 + $0x30] sm:$0xff] %v249
                  %v251 = vld [vmem:[%s235 + $0x118] sm:$0xff]
                  %252 = vst [vmem:[%s236 + $0x38] sm:$0xff] %v251
                  %v253 = vld [vmem:[%s235 + $0x140] sm:$0xff]
                  %254 = vst [vmem:[%s236 + $0x40] sm:$0xff] %v253
                  %v255 = vld [vmem:[%s235 + $0x168] sm:$0xff]
                  %256 = vst [vmem:[%s236 + $0x48] sm:$0xff] %v255
                  %v257 = vld [vmem:[%s235 + $0x190] sm:$0xff]
                  %258 = vst [vmem:[%s236 + $0x50] sm:$0xff] %v257
                  %v259 = vld [vmem:[%s235 + $0x1b8] sm:$0xff]
                  %260 = vst [vmem:[%s236 + $0x58] sm:$0xff] %v259
                  %v261 = vld [vmem:[%s235 + $0x1e0] sm:$0xff]
                  %262 = vst [vmem:[%s236 + $0x60] sm:$0xff] %v261
                  %v263 = vld [vmem:[%s235 + $0x208] sm:$0xff]
                  %264 = vst [vmem:[%s236 + $0x68] sm:$0xff] %v263
                  %v265 = vld [vmem:[%s235 + $0x230] sm:$0xff]
                  %266 = vst [vmem:[%s236 + $0x70] sm:$0xff] %v265
                  %v267 = vld [vmem:[%s235 + $0x258] sm:$0xff]
                  %268 = vst [vmem:[%s236 + $0x78] sm:$0xff] %v267
                  %v269 = vld [vmem:[%s235 + $0x280] sm:$0xff]
                  %270 = vst [vmem:[%s236 + $0x80] sm:$0xff] %v269
                  %v271 = vld [vmem:[%s235 + $0x2a8] sm:$0xff]
                  %272 = vst [vmem:[%s236 + $0x88] sm:$0xff] %v271
                  %v273 = vld [vmem:[%s235 + $0x2d0] sm:$0xff]
                  %274 = vst [vmem:[%s236 + $0x90] sm:$0xff] %v273
                  %v275 = vld [vmem:[%s235 + $0x2f8] sm:$0xff]
                  %276 = vst [vmem:[%s236 + $0x98] sm:$0xff] %v275
                  %v277 = vld [vmem:[%s235 + $0x320] sm:$0xff]
                  %278 = vst [vmem:[%s236 + $0xa0] sm:$0xff] %v277
                  %v279 = vld [vmem:[%s235 + $0x348] sm:$0xff]
                  %280 = vst [vmem:[%s236 + $0xa8] sm:$0xff] %v279
                  %v281 = vld [vmem:[%s235 + $0x370] sm:$0xff]
                  %282 = vst [vmem:[%s236 + $0xb0] sm:$0xff] %v281
                  %v283 = vld [vmem:[%s235 + $0x398] sm:$0xff]
                  %284 = vst [vmem:[%s236 + $0xb8] sm:$0xff] %v283
                  %v285 = vld [vmem:[%s235 + $0x3c0] sm:$0xff]
                  %286 = vst [vmem:[%s236 + $0xc0] sm:$0xff] %v285
                  %v287 = vld [vmem:[%s235 + $0x3e8] sm:$0xff]
                  %288 = vst [vmem:[%s236 + $0xc8] sm:$0xff] %v287
                  %v289 = vld [vmem:[%s235 + $0x410] sm:$0xff]
                  %290 = vst [vmem:[%s236 + $0xd0] sm:$0xff] %v289
                  %v291 = vld [vmem:[%s235 + $0x438] sm:$0xff]
                  %292 = vst [vmem:[%s236 + $0xd8] sm:$0xff] %v291
                  %v293 = vld [vmem:[%s235 + $0x460] sm:$0xff]
                  %294 = vst [vmem:[%s236 + $0xe0] sm:$0xff] %v293
                  %v295 = vld [vmem:[%s235 + $0x488] sm:$0xff]
                  %296 = vst [vmem:[%s236 + $0xe8] sm:$0xff] %v295
                  %v297 = vld [vmem:[%s235 + $0x4b0] sm:$0xff]
                  %298 = vst [vmem:[%s236 + $0xf0] sm:$0xff] %v297
                  %v299 = vld [vmem:[%s235 + $0x4d8] sm:$0xff]
                  %300 = vst [vmem:[%s236 + $0xf8] sm:$0xff] %v299
                $region52: #{igala_forward.5} parent=46 // loop_footer
                  %s234 = sadd.s32 1, %s230
                $region53: #{igala_forward.5} parent=46 // loop_footer_branch
                  %229 = sbr.rel target = $region49
                $region54: #{igala_forward.5} parent=46 // loop_exit
                  _
              $region47: #{igala_forward.5} parent=31 // pred_fallthru
                _
              // Predicated region
              $region55: #{igala_forward.5} parent=31 // pred_check
                _
              $region56: #{igala_forward.5} parent=31 // pred_check_branch
                %302 = sbr.rel target = $region58
              $region57: #{igala_forward.5} parent=31 // pred_region
                _
              $region58: #{igala_forward.5} parent=31 // pred_fallthru
                _
            $region32: #{igala_forward.5} parent=27 // pred_fallthru
              _
            // Predicated region
            $region33: #{igala_forward.5} parent=27 // pred_check
              _
            $region34: #{igala_forward.5} parent=27 // pred_check_branch
              %152 = sbr.rel target = $region36
            $region35: #{igala_forward.5} parent=27 // pred_region
              %s154 = ssub.s32 256, 1
              loop: start=0, step=1, limit=1
              $region37: #{igala_forward.5} parent=35 // loop_pre_header
                _
              $region38: #{igala_forward.5} parent=35 // loop_header
                %s156 = sphi 0, %s160
                %p157 = scmp.ge.s32.totalorder %s156, 1
                %s161 = sphi %s146, %s146
                %s162 = sphi %s141, %s141
              $region39: #{igala_forward.5} parent=35 // loop_header_branch
                %159 = sbr.rel (%p157) target = $region43
              $region40: #{igala_forward.5} parent=35 // loop_body
                %v163 = vld [vmem:[%s161] sm:%s154]
                %164 = vst [vmem:[%s162] sm:%s154] %v163
                %v165 = vld [vmem:[%s161 + $0x28] sm:%s154]
                %166 = vst [vmem:[%s162 + $0x8] sm:%s154] %v165
                %v167 = vld [vmem:[%s161 + $0x50] sm:%s154]
                %168 = vst [vmem:[%s162 + $0x10] sm:%s154] %v167
                %v169 = vld [vmem:[%s161 + $0x78] sm:%s154]
                %170 = vst [vmem:[%s162 + $0x18] sm:%s154] %v169
                %v171 = vld [vmem:[%s161 + $0xa0] sm:%s154]
                %172 = vst [vmem:[%s162 + $0x20] sm:%s154] %v171
                %v173 = vld [vmem:[%s161 + $0xc8] sm:%s154]
                %174 = vst [vmem:[%s162 + $0x28] sm:%s154] %v173
                %v175 = vld [vmem:[%s161 + $0xf0] sm:%s154]
                %176 = vst [vmem:[%s162 + $0x30] sm:%s154] %v175
                %v177 = vld [vmem:[%s161 + $0x118] sm:%s154]
                %178 = vst [vmem:[%s162 + $0x38] sm:%s154] %v177
                %v179 = vld [vmem:[%s161 + $0x140] sm:%s154]
                %180 = vst [vmem:[%s162 + $0x40] sm:%s154] %v179
                %v181 = vld [vmem:[%s161 + $0x168] sm:%s154]
                %182 = vst [vmem:[%s162 + $0x48] sm:%s154] %v181
                %v183 = vld [vmem:[%s161 + $0x190] sm:%s154]
                %184 = vst [vmem:[%s162 + $0x50] sm:%s154] %v183
                %v185 = vld [vmem:[%s161 + $0x1b8] sm:%s154]
                %186 = vst [vmem:[%s162 + $0x58] sm:%s154] %v185
                %v187 = vld [vmem:[%s161 + $0x1e0] sm:%s154]
                %188 = vst [vmem:[%s162 + $0x60] sm:%s154] %v187
                %v189 = vld [vmem:[%s161 + $0x208] sm:%s154]
                %190 = vst [vmem:[%s162 + $0x68] sm:%s154] %v189
                %v191 = vld [vmem:[%s161 + $0x230] sm:%s154]
                %192 = vst [vmem:[%s162 + $0x70] sm:%s154] %v191
                %v193 = vld [vmem:[%s161 + $0x258] sm:%s154]
                %194 = vst [vmem:[%s162 + $0x78] sm:%s154] %v193
                %v195 = vld [vmem:[%s161 + $0x280] sm:%s154]
                %196 = vst [vmem:[%s162 + $0x80] sm:%s154] %v195
                %v197 = vld [vmem:[%s161 + $0x2a8] sm:%s154]
                %198 = vst [vmem:[%s162 + $0x88] sm:%s154] %v197
                %v199 = vld [vmem:[%s161 + $0x2d0] sm:%s154]
                %200 = vst [vmem:[%s162 + $0x90] sm:%s154] %v199
                %v201 = vld [vmem:[%s161 + $0x2f8] sm:%s154]
                %202 = vst [vmem:[%s162 + $0x98] sm:%s154] %v201
                %v203 = vld [vmem:[%s161 + $0x320] sm:%s154]
                %204 = vst [vmem:[%s162 + $0xa0] sm:%s154] %v203
                %v205 = vld [vmem:[%s161 + $0x348] sm:%s154]
                %206 = vst [vmem:[%s162 + $0xa8] sm:%s154] %v205
                %v207 = vld [vmem:[%s161 + $0x370] sm:%s154]
                %208 = vst [vmem:[%s162 + $0xb0] sm:%s154] %v207
                %v209 = vld [vmem:[%s161 + $0x398] sm:%s154]
                %210 = vst [vmem:[%s162 + $0xb8] sm:%s154] %v209
                %v211 = vld [vmem:[%s161 + $0x3c0] sm:%s154]
                %212 = vst [vmem:[%s162 + $0xc0] sm:%s154] %v211
                %v213 = vld [vmem:[%s161 + $0x3e8] sm:%s154]
                %214 = vst [vmem:[%s162 + $0xc8] sm:%s154] %v213
                %v215 = vld [vmem:[%s161 + $0x410] sm:%s154]
                %216 = vst [vmem:[%s162 + $0xd0] sm:%s154] %v215
                %v217 = vld [vmem:[%s161 + $0x438] sm:%s154]
                %218 = vst [vmem:[%s162 + $0xd8] sm:%s154] %v217
                %v219 = vld [vmem:[%s161 + $0x460] sm:%s154]
                %220 = vst [vmem:[%s162 + $0xe0] sm:%s154] %v219
                %v221 = vld [vmem:[%s161 + $0x488] sm:%s154]
                %222 = vst [vmem:[%s162 + $0xe8] sm:%s154] %v221
                %v223 = vld [vmem:[%s161 + $0x4b0] sm:%s154]
                %224 = vst [vmem:[%s162 + $0xf0] sm:%s154] %v223
                %v225 = vld [vmem:[%s161 + $0x4d8] sm:%s154]
                %226 = vst [vmem:[%s162 + $0xf8] sm:%s154] %v225
              $region41: #{igala_forward.5} parent=35 // loop_footer
                %s160 = sadd.s32 1, %s156
              $region42: #{igala_forward.5} parent=35 // loop_footer_branch
                %155 = sbr.rel target = $region38
              $region43: #{igala_forward.5} parent=35 // loop_exit
                _
            $region36: #{igala_forward.5} parent=27 // pred_fallthru
              _
          $region28: #{igala_forward.5} parent=23 // pred_fallthru
            _
          %303 = vnop
        $region24: #{igala_forward.5} parent=19 // pred_fallthru
          _
      $region20: #{igala_forward.5} parent=5 // pred_fallthru
        _
      %p304 = scmp.le.s32.totalorder 1, %s8
      %p305 = scmp.lt.s32.totalorder %s8, 16
      %p306 = pnand %p304, %p305
      %p307 = pneg %p306
      // Predicated region
      $region59: #{igala_forward.5} parent=5 // pred_check
        _
      $region60: #{igala_forward.5} parent=5 // pred_check_branch
        %309 = sbr.rel (%p306) target = $region62
      $region61: #{igala_forward.5} parent=5 // pred_region
        %s310 = ssub.s32 %s8, 1
        %s311 = sand.u32 %s42, 1
        %s312 = sand.u32 %s42, 1
        %s313 = smul.addr %s312, 256
        %s314 = scalar_lea.vmem [#allocation3], %s313
        // Predicated region
        $region63: #{igala_forward.5} parent=61 // pred_check
          %p315 = pneg %p55
        $region64: #{igala_forward.5} parent=61 // pred_check_branch
          %317 = sbr.rel (%p315) target = $region66
        $region65: #{igala_forward.5} parent=61 // pred_region
          _
        $region66: #{igala_forward.5} parent=61 // pred_fallthru
          _
        %s318 = sand.u32 %s42, 1
        %s319 = sand.u32 %s42, 1
        %s320 = smul.addr %s319, 256
        %s321 = scalar_lea.vmem [#allocation3], %s320
        %p322 = pneg %p55
        %p323 = pneg %p52
        %p324 = scmp.lt.s32.totalorder %s19, 0
        %s325 = scalar_select %p324, %s19, 0
        %s326 = smul.addr %s325, 8
        %s327 = scalar_lea.vmem %s1, %s326
        %p328 = pneg %p81
        %p329 = pneg %p78
        %p330 = pneg %p109
        %p331 = pneg %p106
        %s332 = smul.u32 32, %s18
        %p333 = scmp.lt.s32.totalorder %s332, 95
        %s334 = scalar_select %p333, %s332, 95
        %p335 = scmp.lt.s32.totalorder %s19, 0
        %s336 = scalar_select %p335, %s19, 0
        %s337 = sadd.s32 %s336, %s334
        %s338 = smul.addr %s337, 8
        %s339 = scalar_lea.vmem %s2, %s338
        %s340 = smul.u32 32, %s18
        %p341 = scmp.lt.s32.totalorder %s19, 0
        %s342 = scalar_select %p341, %s19, 0
        %s343 = smul.addr %s342, 8
        %s344 = scalar_lea.vmem %s1, %s343
        %s345 = smul.u32 32, %s18
        %p346 = scmp.lt.s32.totalorder %s345, 95
        %s347 = scalar_select %p346, %s345, 95
        %p348 = scmp.lt.s32.totalorder %s19, 0
        %s349 = scalar_select %p348, %s19, 0
        %s350 = sadd.s32 %s349, %s347
        %s351 = smul.addr %s350, 8
        %s352 = scalar_lea.vmem %s2, %s351
        %s353 = smul.u32 32, %s18
        %p354 = scmp.eq.s32.totalorder %s20, 0
        // Predicated region
        $region67: #{igala_forward.5} parent=61 // pred_check
          %p355 = pneg %p354
        $region68: #{igala_forward.5} parent=61 // pred_check_branch
          %357 = sbr.rel (%p355) target = $region70
        $region69: #{igala_forward.5} parent=61 // pred_region
          %358 = vst [vmem:[#allocation2] sm:$0xff] 0.0
          %359 = vst [vmem:[#allocation2 + $0x8] sm:$0xff] 0.0
          %360 = vst [vmem:[#allocation2 + $0x10] sm:$0xff] 0.0
          %361 = vst [vmem:[#allocation2 + $0x18] sm:$0xff] 0.0
          %362 = vst [vmem:[#allocation2 + $0x20] sm:$0xff] 0.0
          %363 = vst [vmem:[#allocation2 + $0x28] sm:$0xff] 0.0
          %364 = vst [vmem:[#allocation2 + $0x30] sm:$0xff] 0.0
          %365 = vst [vmem:[#allocation2 + $0x38] sm:$0xff] 0.0
          %366 = vst [vmem:[#allocation2 + $0x40] sm:$0xff] 0.0
          %367 = vst [vmem:[#allocation2 + $0x48] sm:$0xff] 0.0
          %368 = vst [vmem:[#allocation2 + $0x50] sm:$0xff] 0.0
          %369 = vst [vmem:[#allocation2 + $0x58] sm:$0xff] 0.0
          %370 = vst [vmem:[#allocation2 + $0x60] sm:$0xff] 0.0
          %371 = vst [vmem:[#allocation2 + $0x68] sm:$0xff] 0.0
          %372 = vst [vmem:[#allocation2 + $0x70] sm:$0xff] 0.0
          %373 = vst [vmem:[#allocation2 + $0x78] sm:$0xff] 0.0
          %374 = vst [vmem:[#allocation2 + $0x80] sm:$0xff] 0.0
          %375 = vst [vmem:[#allocation2 + $0x88] sm:$0xff] 0.0
          %376 = vst [vmem:[#allocation2 + $0x90] sm:$0xff] 0.0
          %377 = vst [vmem:[#allocation2 + $0x98] sm:$0xff] 0.0
          %378 = vst [vmem:[#allocation2 + $0xa0] sm:$0xff] 0.0
          %379 = vst [vmem:[#allocation2 + $0xa8] sm:$0xff] 0.0
          %380 = vst [vmem:[#allocation2 + $0xb0] sm:$0xff] 0.0
          %381 = vst [vmem:[#allocation2 + $0xb8] sm:$0xff] 0.0
          %382 = vst [vmem:[#allocation2 + $0xc0] sm:$0xff] 0.0
          %383 = vst [vmem:[#allocation2 + $0xc8] sm:$0xff] 0.0
          %384 = vst [vmem:[#allocation2 + $0xd0] sm:$0xff] 0.0
          %385 = vst [vmem:[#allocation2 + $0xd8] sm:$0xff] 0.0
          %386 = vst [vmem:[#allocation2 + $0xe0] sm:$0xff] 0.0
          %387 = vst [vmem:[#allocation2 + $0xe8] sm:$0xff] 0.0
          %388 = vst [vmem:[#allocation2 + $0xf0] sm:$0xff] 0.0
          %389 = vst [vmem:[#allocation2 + $0xf8] sm:$0xff] 0.0
        $region70: #{igala_forward.5} parent=61 // pred_fallthru
          _
        %s390 = smul.u32 %s20, 128
        %v391 = vld [vmem:[#allocation2] sm:$0xff]
        %v392 = vld [vmem:[#allocation2 + $0x8] sm:$0xff]
        %v393 = vld [vmem:[#allocation2 + $0x10] sm:$0xff]
        %v394 = vld [vmem:[#allocation2 + $0x18] sm:$0xff]
        %v395 = vld [vmem:[#allocation2 + $0x20] sm:$0xff]
        %v396 = vld [vmem:[#allocation2 + $0x28] sm:$0xff]
        %v397 = vld [vmem:[#allocation2 + $0x30] sm:$0xff]
        %v398 = vld [vmem:[#allocation2 + $0x38] sm:$0xff]
        %v399 = vld [vmem:[#allocation2 + $0x40] sm:$0xff]
        %v400 = vld [vmem:[#allocation2 + $0x48] sm:$0xff]
        %v401 = vld [vmem:[#allocation2 + $0x50] sm:$0xff]
        %v402 = vld [vmem:[#allocation2 + $0x58] sm:$0xff]
        %v403 = vld [vmem:[#allocation2 + $0x60] sm:$0xff]
        %v404 = vld [vmem:[#allocation2 + $0x68] sm:$0xff]
        %v405 = vld [vmem:[#allocation2 + $0x70] sm:$0xff]
        %v406 = vld [vmem:[#allocation2 + $0x78] sm:$0xff]
        %v407 = vld [vmem:[#allocation2 + $0x80] sm:$0xff]
        %v408 = vld [vmem:[#allocation2 + $0x88] sm:$0xff]
        %v409 = vld [vmem:[#allocation2 + $0x90] sm:$0xff]
        %v410 = vld [vmem:[#allocation2 + $0x98] sm:$0xff]
        %v411 = vld [vmem:[#allocation2 + $0xa0] sm:$0xff]
        %v412 = vld [vmem:[#allocation2 + $0xa8] sm:$0xff]
        %v413 = vld [vmem:[#allocation2 + $0xb0] sm:$0xff]
        %v414 = vld [vmem:[#allocation2 + $0xb8] sm:$0xff]
        %v415 = vld [vmem:[#allocation2 + $0xc0] sm:$0xff]
        %v416 = vld [vmem:[#allocation2 + $0xc8] sm:$0xff]
        %v417 = vld [vmem:[#allocation2 + $0xd0] sm:$0xff]
        %v418 = vld [vmem:[#allocation2 + $0xd8] sm:$0xff]
        %v419 = vld [vmem:[#allocation2 + $0xe0] sm:$0xff]
        %v420 = vld [vmem:[#allocation2 + $0xe8] sm:$0xff]
        %v421 = vld [vmem:[#allocation2 + $0xf0] sm:$0xff]
        %v422 = vld [vmem:[#allocation2 + $0xf8] sm:$0xff]
        %v423 = vld [vmem:[%s314] sm:$0xff]
        %v424 = vld [vmem:[%s314 + $0x8] sm:$0xff]
        %v425 = vld [vmem:[%s314 + $0x10] sm:$0xff]
        %v426 = vld [vmem:[%s314 + $0x18] sm:$0xff]
        %v427 = vld [vmem:[%s314 + $0x20] sm:$0xff]
        %v428 = vld [vmem:[%s314 + $0x28] sm:$0xff]
        %v429 = vld [vmem:[%s314 + $0x30] sm:$0xff]
        %v430 = vld [vmem:[%s314 + $0x38] sm:$0xff]
        %v431 = vld [vmem:[%s314 + $0x40] sm:$0xff]
        %v432 = vld [vmem:[%s314 + $0x48] sm:$0xff]
        %v433 = vld [vmem:[%s314 + $0x50] sm:$0xff]
        %v434 = vld [vmem:[%s314 + $0x58] sm:$0xff]
        %v435 = vld [vmem:[%s314 + $0x60] sm:$0xff]
        %v436 = vld [vmem:[%s314 + $0x68] sm:$0xff]
        %v437 = vld [vmem:[%s314 + $0x70] sm:$0xff]
        %v438 = vld [vmem:[%s314 + $0x78] sm:$0xff]
        %v439 = vld [vmem:[%s314 + $0x80] sm:$0xff]
        %v440 = vld [vmem:[%s314 + $0x88] sm:$0xff]
        %v441 = vld [vmem:[%s314 + $0x90] sm:$0xff]
        %v442 = vld [vmem:[%s314 + $0x98] sm:$0xff]
        %v443 = vld [vmem:[%s314 + $0xa0] sm:$0xff]
        %v444 = vld [vmem:[%s314 + $0xa8] sm:$0xff]
        %v445 = vld [vmem:[%s314 + $0xb0] sm:$0xff]
        %v446 = vld [vmem:[%s314 + $0xb8] sm:$0xff]
        %v447 = vld [vmem:[%s314 + $0xc0] sm:$0xff]
        %v448 = vld [vmem:[%s314 + $0xc8] sm:$0xff]
        %v449 = vld [vmem:[%s314 + $0xd0] sm:$0xff]
        %v450 = vld [vmem:[%s314 + $0xd8] sm:$0xff]
        %v451 = vld [vmem:[%s314 + $0xe0] sm:$0xff]
        %v452 = vld [vmem:[%s314 + $0xe8] sm:$0xff]
        %v453 = vld [vmem:[%s314 + $0xf0] sm:$0xff]
        %v454 = vld [vmem:[%s314 + $0xf8] sm:$0xff]
        %s455 = scalar_lea.vmem %s344, %s390
        %v456 = vld [vmem:[%s455] sm:$0xff]
        %v457 = vld [vmem:[%s455 + $0x8] sm:$0xff]
        %v458 = vld [vmem:[%s455 + $0x10] sm:$0xff]
        %v459 = vld [vmem:[%s455 + $0x18] sm:$0xff]
        %v460 = vld [vmem:[%s455 + $0x20] sm:$0xff]
        %v461 = vld [vmem:[%s455 + $0x28] sm:$0xff]
        %v462 = vld [vmem:[%s455 + $0x30] sm:$0xff]
        %v463 = vld [vmem:[%s455 + $0x38] sm:$0xff]
        %v464 = vld [vmem:[%s455 + $0x40] sm:$0xff]
        %v465 = vld [vmem:[%s455 + $0x48] sm:$0xff]
        %v466 = vld [vmem:[%s455 + $0x50] sm:$0xff]
        %v467 = vld [vmem:[%s455 + $0x58] sm:$0xff]
        %v468 = vld [vmem:[%s455 + $0x60] sm:$0xff]
        %v469 = vld [vmem:[%s455 + $0x68] sm:$0xff]
        %v470 = vld [vmem:[%s455 + $0x70] sm:$0xff]
        %v471 = vld [vmem:[%s455 + $0x78] sm:$0xff]
        %472 = vmatprep.subr.mxu0 0.0
        %473 = vmatpush1.msra.mxu0 %v471
        %474 = vmatprep.subr.mxu0 0.0
        %475 = vmatpush1.msra.mxu0 %v470
        %476 = vmatprep.subr.mxu0 0.0
        %477 = vmatpush1.msra.mxu0 %v469
        %478 = vmatprep.subr.mxu0 0.0
        %479 = vmatpush1.msra.mxu0 %v468
        %480 = vmatprep.subr.mxu0 0.0
        %481 = vmatpush1.msra.mxu0 %v467
        %482 = vmatprep.subr.mxu0 0.0
        %483 = vmatpush1.msra.mxu0 %v466
        %484 = vmatprep.subr.mxu0 0.0
        %485 = vmatpush1.msra.mxu0 %v465
        %486 = vmatprep.subr.mxu0 0.0
        %487 = vmatpush1.msra.mxu0 %v464
        %488 = vmatprep.subr.mxu0 0.0
        %489 = vmatpush1.msra.mxu0 %v463
        %490 = vmatprep.subr.mxu0 0.0
        %491 = vmatpush1.msra.mxu0 %v462
        %492 = vmatprep.subr.mxu0 0.0
        %493 = vmatpush1.msra.mxu0 %v461
        %494 = vmatprep.subr.mxu0 0.0
        %495 = vmatpush1.msra.mxu0 %v460
        %496 = vmatprep.subr.mxu0 0.0
        %497 = vmatpush1.msra.mxu0 %v459
        %498 = vmatprep.subr.mxu0 0.0
        %499 = vmatpush1.msra.mxu0 %v458
        %500 = vmatprep.subr.mxu0 0.0
        %501 = vmatpush1.msra.mxu0 %v457
        %502 = vmatprep.subr.mxu0 0.0
        %503 = vmatpush1.msra.mxu0 %v456
        %504 = vmatprep.subr.mxu0 0.0
        %505 = vmatpush2.msra.mxu0 0.0
        %506 = vmatprep.subr.mxu0 0.0
        %507 = vmatpush2.msra.mxu0 0.0
        %508 = vmatprep.subr.mxu0 0.0
        %509 = vmatpush2.msra.mxu0 0.0
        %510 = vmatprep.subr.mxu0 0.0
        %511 = vmatpush2.msra.mxu0 0.0
        %512 = vmatprep.subr.mxu0 0.0
        %513 = vmatpush2.msra.mxu0 0.0
        %514 = vmatprep.subr.mxu0 0.0
        %515 = vmatpush2.msra.mxu0 0.0
        %516 = vmatprep.subr.mxu0 0.0
        %517 = vmatpush2.msra.mxu0 0.0
        %518 = vmatprep.subr.mxu0 0.0
        %519 = vmatpush2.msra.mxu0 0.0
        %520 = vmatprep.subr.mxu0 0.0
        %521 = vmatpush2.msra.mxu0 0.0
        %522 = vmatprep.subr.mxu0 0.0
        %523 = vmatpush2.msra.mxu0 0.0
        %524 = vmatprep.subr.mxu0 0.0
        %525 = vmatpush2.msra.mxu0 0.0
        %526 = vmatprep.subr.mxu0 0.0
        %527 = vmatpush2.msra.mxu0 0.0
        %528 = vmatprep.subr.mxu0 0.0
        %529 = vmatpush2.msra.mxu0 0.0
        %530 = vmatprep.subr.mxu0 0.0
        %531 = vmatpush2.msra.mxu0 0.0
        %532 = vmatprep.subr.mxu0 0.0
        %533 = vmatpush2.msra.mxu0 0.0
        %534 = vmatprep.subr.mxu0 0.0
        %535 = vmatpush2.msra.mxu0 0.0
        %536 = vmatprep.mubr.f32.mxu0 0.0
        %537 = vmatmul.mubr.f32.gmra.mxu0 %v423
        %v538 = vpop.f32.mrf.mxu0
        %v539 = vadd.f32 0.0, %v538
        %v540 = vpop.f32.mrf.mxu0
        %541 = vmatprep.mubr.f32.mxu0 0.0
        %542 = vmatmul.mubr.f32.gmra.mxu0 %v424
        %v543 = vpop.f32.mrf.mxu0
        %v544 = vadd.f32 0.0, %v543
        %v545 = vpop.f32.mrf.mxu0
        %546 = vmatprep.mubr.f32.mxu0 0.0
        %547 = vmatmul.mubr.f32.gmra.mxu0 %v425
        %v548 = vpop.f32.mrf.mxu0
        %v549 = vadd.f32 0.0, %v548
        %v550 = vpop.f32.mrf.mxu0
        %551 = vmatprep.mubr.f32.mxu0 0.0
        %552 = vmatmul.mubr.f32.gmra.mxu0 %v426
        %v553 = vpop.f32.mrf.mxu0
        %v554 = vadd.f32 0.0, %v553
        %v555 = vpop.f32.mrf.mxu0
        %556 = vmatprep.mubr.f32.mxu0 0.0
        %557 = vmatmul.mubr.f32.gmra.mxu0 %v427
        %v558 = vpop.f32.mrf.mxu0
        %v559 = vadd.f32 0.0, %v558
        %v560 = vpop.f32.mrf.mxu0
        %561 = vmatprep.mubr.f32.mxu0 0.0
        %562 = vmatmul.mubr.f32.gmra.mxu0 %v428
        %v563 = vpop.f32.mrf.mxu0
        %v564 = vadd.f32 0.0, %v563
        %v565 = vpop.f32.mrf.mxu0
        %566 = vmatprep.mubr.f32.mxu0 0.0
        %567 = vmatmul.mubr.f32.gmra.mxu0 %v429
        %v568 = vpop.f32.mrf.mxu0
        %v569 = vadd.f32 0.0, %v568
        %v570 = vpop.f32.mrf.mxu0
        %571 = vmatprep.mubr.f32.mxu0 0.0
        %572 = vmatmul.mubr.f32.gmra.mxu0 %v430
        %v573 = vpop.f32.mrf.mxu0
        %v574 = vadd.f32 0.0, %v573
        %v575 = vpop.f32.mrf.mxu0
        %576 = vmatprep.mubr.f32.mxu0 0.0
        %577 = vmatmul.mubr.f32.gmra.mxu0 %v431
        %v578 = vpop.f32.mrf.mxu0
        %v579 = vadd.f32 0.0, %v578
        %v580 = vpop.f32.mrf.mxu0
        %581 = vmatprep.mubr.f32.mxu0 0.0
        %582 = vmatmul.mubr.f32.gmra.mxu0 %v432
        %v583 = vpop.f32.mrf.mxu0
        %v584 = vadd.f32 0.0, %v583
        %v585 = vpop.f32.mrf.mxu0
        %586 = vmatprep.mubr.f32.mxu0 0.0
        %587 = vmatmul.mubr.f32.gmra.mxu0 %v433
        %v588 = vpop.f32.mrf.mxu0
        %v589 = vadd.f32 0.0, %v588
        %v590 = vpop.f32.mrf.mxu0
        %591 = vmatprep.mubr.f32.mxu0 0.0
        %592 = vmatmul.mubr.f32.gmra.mxu0 %v434
        %v593 = vpop.f32.mrf.mxu0
        %v594 = vadd.f32 0.0, %v593
        %v595 = vpop.f32.mrf.mxu0
        %596 = vmatprep.mubr.f32.mxu0 0.0
        %597 = vmatmul.mubr.f32.gmra.mxu0 %v435
        %v598 = vpop.f32.mrf.mxu0
        %v599 = vadd.f32 0.0, %v598
        %v600 = vpop.f32.mrf.mxu0
        %601 = vmatprep.mubr.f32.mxu0 0.0
        %602 = vmatmul.mubr.f32.gmra.mxu0 %v436
        %v603 = vpop.f32.mrf.mxu0
        %v604 = vadd.f32 0.0, %v603
        %v605 = vpop.f32.mrf.mxu0
        %606 = vmatprep.mubr.f32.mxu0 0.0
        %607 = vmatmul.mubr.f32.gmra.mxu0 %v437
        %v608 = vpop.f32.mrf.mxu0
        %v609 = vadd.f32 0.0, %v608
        %v610 = vpop.f32.mrf.mxu0
        %611 = vmatprep.mubr.f32.mxu0 0.0
        %612 = vmatmul.mubr.f32.gmra.mxu0 %v438
        %v613 = vpop.f32.mrf.mxu0
        %v614 = vadd.f32 0.0, %v613
        %v615 = vpop.f32.mrf.mxu0
        %616 = vmatprep.mubr.f32.mxu0 0.0
        %617 = vmatmul.mubr.f32.gmra.mxu0 %v439
        %v618 = vpop.f32.mrf.mxu0
        %v619 = vadd.f32 0.0, %v618
        %v620 = vpop.f32.mrf.mxu0
        %621 = vmatprep.mubr.f32.mxu0 0.0
        %622 = vmatmul.mubr.f32.gmra.mxu0 %v440
        %v623 = vpop.f32.mrf.mxu0
        %v624 = vadd.f32 0.0, %v623
        %v625 = vpop.f32.mrf.mxu0
        %626 = vmatprep.mubr.f32.mxu0 0.0
        %627 = vmatmul.mubr.f32.gmra.mxu0 %v441
        %v628 = vpop.f32.mrf.mxu0
        %v629 = vadd.f32 0.0, %v628
        %v630 = vpop.f32.mrf.mxu0
        %631 = vmatprep.mubr.f32.mxu0 0.0
        %632 = vmatmul.mubr.f32.gmra.mxu0 %v442
        %v633 = vpop.f32.mrf.mxu0
        %v634 = vadd.f32 0.0, %v633
        %v635 = vpop.f32.mrf.mxu0
        %636 = vmatprep.mubr.f32.mxu0 0.0
        %637 = vmatmul.mubr.f32.gmra.mxu0 %v443
        %v638 = vpop.f32.mrf.mxu0
        %v639 = vadd.f32 0.0, %v638
        %v640 = vpop.f32.mrf.mxu0
        %641 = vmatprep.mubr.f32.mxu0 0.0
        %642 = vmatmul.mubr.f32.gmra.mxu0 %v444
        %v643 = vpop.f32.mrf.mxu0
        %v644 = vadd.f32 0.0, %v643
        %v645 = vpop.f32.mrf.mxu0
        %646 = vmatprep.mubr.f32.mxu0 0.0
        %647 = vmatmul.mubr.f32.gmra.mxu0 %v445
        %v648 = vpop.f32.mrf.mxu0
        %v649 = vadd.f32 0.0, %v648
        %v650 = vpop.f32.mrf.mxu0
        %651 = vmatprep.mubr.f32.mxu0 0.0
        %652 = vmatmul.mubr.f32.gmra.mxu0 %v446
        %v653 = vpop.f32.mrf.mxu0
        %v654 = vadd.f32 0.0, %v653
        %v655 = vpop.f32.mrf.mxu0
        %656 = vmatprep.mubr.f32.mxu0 0.0
        %657 = vmatmul.mubr.f32.gmra.mxu0 %v447
        %v658 = vpop.f32.mrf.mxu0
        %v659 = vadd.f32 0.0, %v658
        %v660 = vpop.f32.mrf.mxu0
        %661 = vmatprep.mubr.f32.mxu0 0.0
        %662 = vmatmul.mubr.f32.gmra.mxu0 %v448
        %v663 = vpop.f32.mrf.mxu0
        %v664 = vadd.f32 0.0, %v663
        %v665 = vpop.f32.mrf.mxu0
        %666 = vmatprep.mubr.f32.mxu0 0.0
        %667 = vmatmul.mubr.f32.gmra.mxu0 %v449
        %v668 = vpop.f32.mrf.mxu0
        %v669 = vadd.f32 0.0, %v668
        %v670 = vpop.f32.mrf.mxu0
        %671 = vmatprep.mubr.f32.mxu0 0.0
        %672 = vmatmul.mubr.f32.gmra.mxu0 %v450
        %v673 = vpop.f32.mrf.mxu0
        %v674 = vadd.f32 0.0, %v673
        %v675 = vpop.f32.mrf.mxu0
        %676 = vmatprep.mubr.f32.mxu0 0.0
        %677 = vmatmul.mubr.f32.gmra.mxu0 %v451
        %v678 = vpop.f32.mrf.mxu0
        %v679 = vadd.f32 0.0, %v678
        %v680 = vpop.f32.mrf.mxu0
        %681 = vmatprep.mubr.f32.mxu0 0.0
        %682 = vmatmul.mubr.f32.gmra.mxu0 %v452
        %v683 = vpop.f32.mrf.mxu0
        %v684 = vadd.f32 0.0, %v683
        %v685 = vpop.f32.mrf.mxu0
        %686 = vmatprep.mubr.f32.mxu0 0.0
        %687 = vmatmul.mubr.f32.gmra.mxu0 %v453
        %v688 = vpop.f32.mrf.mxu0
        %v689 = vadd.f32 0.0, %v688
        %v690 = vpop.f32.mrf.mxu0
        %691 = vmatprep.mubr.f32.mxu0 0.0
        %692 = vmatmul.mubr.f32.gmra.mxu0 %v454
        %v693 = vpop.f32.mrf.mxu0
        %v694 = vadd.f32 0.0, %v693
        %v695 = vpop.f32.mrf.mxu0
        %696 = vdwg.mxu0
        %v697 = vadd.f32 %v391, %v539
        %v698 = vadd.f32 %v392, %v544
        %v699 = vadd.f32 %v393, %v549
        %v700 = vadd.f32 %v394, %v554
        %v701 = vadd.f32 %v395, %v559
        %v702 = vadd.f32 %v396, %v564
        %v703 = vadd.f32 %v397, %v569
        %v704 = vadd.f32 %v398, %v574
        %v705 = vadd.f32 %v399, %v579
        %v706 = vadd.f32 %v400, %v584
        %v707 = vadd.f32 %v401, %v589
        %v708 = vadd.f32 %v402, %v594
        %v709 = vadd.f32 %v403, %v599
        %v710 = vadd.f32 %v404, %v604
        %v711 = vadd.f32 %v405, %v609
        %v712 = vadd.f32 %v406, %v614
        %v713 = vadd.f32 %v407, %v619
        %v714 = vadd.f32 %v408, %v624
        %v715 = vadd.f32 %v409, %v629
        %v716 = vadd.f32 %v410, %v634
        %v717 = vadd.f32 %v411, %v639
        %v718 = vadd.f32 %v412, %v644
        %v719 = vadd.f32 %v413, %v649
        %v720 = vadd.f32 %v414, %v654
        %v721 = vadd.f32 %v415, %v659
        %v722 = vadd.f32 %v416, %v664
        %v723 = vadd.f32 %v417, %v669
        %v724 = vadd.f32 %v418, %v674
        %v725 = vadd.f32 %v419, %v679
        %v726 = vadd.f32 %v420, %v684
        %v727 = vadd.f32 %v421, %v689
        %v728 = vadd.f32 %v422, %v694
        %729 = vst [vmem:[#allocation2] sm:$0xff] %v697
        %730 = vst [vmem:[#allocation2 + $0x8] sm:$0xff] %v698
        %731 = vst [vmem:[#allocation2 + $0x10] sm:$0xff] %v699
        %732 = vst [vmem:[#allocation2 + $0x18] sm:$0xff] %v700
        %733 = vst [vmem:[#allocation2 + $0x20] sm:$0xff] %v701
        %734 = vst [vmem:[#allocation2 + $0x28] sm:$0xff] %v702
        %735 = vst [vmem:[#allocation2 + $0x30] sm:$0xff] %v703
        %736 = vst [vmem:[#allocation2 + $0x38] sm:$0xff] %v704
        %737 = vst [vmem:[#allocation2 + $0x40] sm:$0xff] %v705
        %738 = vst [vmem:[#allocation2 + $0x48] sm:$0xff] %v706
        %739 = vst [vmem:[#allocation2 + $0x50] sm:$0xff] %v707
        %740 = vst [vmem:[#allocation2 + $0x58] sm:$0xff] %v708
        %741 = vst [vmem:[#allocation2 + $0x60] sm:$0xff] %v709
        %742 = vst [vmem:[#allocation2 + $0x68] sm:$0xff] %v710
        %743 = vst [vmem:[#allocation2 + $0x70] sm:$0xff] %v711
        %744 = vst [vmem:[#allocation2 + $0x78] sm:$0xff] %v712
        %745 = vst [vmem:[#allocation2 + $0x80] sm:$0xff] %v713
        %746 = vst [vmem:[#allocation2 + $0x88] sm:$0xff] %v714
        %747 = vst [vmem:[#allocation2 + $0x90] sm:$0xff] %v715
        %748 = vst [vmem:[#allocation2 + $0x98] sm:$0xff] %v716
        %749 = vst [vmem:[#allocation2 + $0xa0] sm:$0xff] %v717
        %750 = vst [vmem:[#allocation2 + $0xa8] sm:$0xff] %v718
        %751 = vst [vmem:[#allocation2 + $0xb0] sm:$0xff] %v719
        %752 = vst [vmem:[#allocation2 + $0xb8] sm:$0xff] %v720
        %753 = vst [vmem:[#allocation2 + $0xc0] sm:$0xff] %v721
        %754 = vst [vmem:[#allocation2 + $0xc8] sm:$0xff] %v722
        %755 = vst [vmem:[#allocation2 + $0xd0] sm:$0xff] %v723
        %756 = vst [vmem:[#allocation2 + $0xd8] sm:$0xff] %v724
        %757 = vst [vmem:[#allocation2 + $0xe0] sm:$0xff] %v725
        %758 = vst [vmem:[#allocation2 + $0xe8] sm:$0xff] %v726
        %759 = vst [vmem:[#allocation2 + $0xf0] sm:$0xff] %v727
        %760 = vst [vmem:[#allocation2 + $0xf8] sm:$0xff] %v728
        %p761 = scmp.eq.s32.totalorder %s20, 4
        // Predicated region
        $region71: #{igala_forward.5} parent=61 // pred_check
          %p762 = pneg %p761
        $region72: #{igala_forward.5} parent=61 // pred_check_branch
          %764 = sbr.rel (%p762) target = $region74
        $region73: #{igala_forward.5} parent=61 // pred_region
          %v765 = vld [vmem:[#allocation2] sm:$0xff]
          %v766 = vld [vmem:[#allocation2 + $0x8] sm:$0xff]
          %v767 = vld [vmem:[#allocation2 + $0x10] sm:$0xff]
          %v768 = vld [vmem:[#allocation2 + $0x18] sm:$0xff]
          %v769 = vld [vmem:[#allocation2 + $0x20] sm:$0xff]
          %v770 = vld [vmem:[#allocation2 + $0x28] sm:$0xff]
          %v771 = vld [vmem:[#allocation2 + $0x30] sm:$0xff]
          %v772 = vld [vmem:[#allocation2 + $0x38] sm:$0xff]
          %v773 = vld [vmem:[#allocation2 + $0x40] sm:$0xff]
          %v774 = vld [vmem:[#allocation2 + $0x48] sm:$0xff]
          %v775 = vld [vmem:[#allocation2 + $0x50] sm:$0xff]
          %v776 = vld [vmem:[#allocation2 + $0x58] sm:$0xff]
          %v777 = vld [vmem:[#allocation2 + $0x60] sm:$0xff]
          %v778 = vld [vmem:[#allocation2 + $0x68] sm:$0xff]
          %v779 = vld [vmem:[#allocation2 + $0x70] sm:$0xff]
          %v780 = vld [vmem:[#allocation2 + $0x78] sm:$0xff]
          %v781 = vld [vmem:[#allocation2 + $0x80] sm:$0xff]
          %v782 = vld [vmem:[#allocation2 + $0x88] sm:$0xff]
          %v783 = vld [vmem:[#allocation2 + $0x90] sm:$0xff]
          %v784 = vld [vmem:[#allocation2 + $0x98] sm:$0xff]
          %v785 = vld [vmem:[#allocation2 + $0xa0] sm:$0xff]
          %v786 = vld [vmem:[#allocation2 + $0xa8] sm:$0xff]
          %v787 = vld [vmem:[#allocation2 + $0xb0] sm:$0xff]
          %v788 = vld [vmem:[#allocation2 + $0xb8] sm:$0xff]
          %v789 = vld [vmem:[#allocation2 + $0xc0] sm:$0xff]
          %v790 = vld [vmem:[#allocation2 + $0xc8] sm:$0xff]
          %v791 = vld [vmem:[#allocation2 + $0xd0] sm:$0xff]
          %v792 = vld [vmem:[#allocation2 + $0xd8] sm:$0xff]
          %v793 = vld [vmem:[#allocation2 + $0xe0] sm:$0xff]
          %v794 = vld [vmem:[#allocation2 + $0xe8] sm:$0xff]
          %v795 = vld [vmem:[#allocation2 + $0xf0] sm:$0xff]
          %v796 = vld [vmem:[#allocation2 + $0xf8] sm:$0xff]
          %797 = vst [vmem:[%s352] sm:$0xff] %v765
          %798 = vst [vmem:[%s352 + $0x8] sm:$0xff] %v766
          %799 = vst [vmem:[%s352 + $0x10] sm:$0xff] %v767
          %800 = vst [vmem:[%s352 + $0x18] sm:$0xff] %v768
          %801 = vst [vmem:[%s352 + $0x20] sm:$0xff] %v769
          %802 = vst [vmem:[%s352 + $0x28] sm:$0xff] %v770
          %803 = vst [vmem:[%s352 + $0x30] sm:$0xff] %v771
          %804 = vst [vmem:[%s352 + $0x38] sm:$0xff] %v772
          %805 = vst [vmem:[%s352 + $0x40] sm:$0xff] %v773
          %806 = vst [vmem:[%s352 + $0x48] sm:$0xff] %v774
          %807 = vst [vmem:[%s352 + $0x50] sm:$0xff] %v775
          %808 = vst [vmem:[%s352 + $0x58] sm:$0xff] %v776
          %809 = vst [vmem:[%s352 + $0x60] sm:$0xff] %v777
          %810 = vst [vmem:[%s352 + $0x68] sm:$0xff] %v778
          %811 = vst [vmem:[%s352 + $0x70] sm:$0xff] %v779
          %812 = vst [vmem:[%s352 + $0x78] sm:$0xff] %v780
          %813 = vst [vmem:[%s352 + $0x80] sm:$0xff] %v781
          %814 = vst [vmem:[%s352 + $0x88] sm:$0xff] %v782
          %815 = vst [vmem:[%s352 + $0x90] sm:$0xff] %v783
          %816 = vst [vmem:[%s352 + $0x98] sm:$0xff] %v784
          %817 = vst [vmem:[%s352 + $0xa0] sm:$0xff] %v785
          %818 = vst [vmem:[%s352 + $0xa8] sm:$0xff] %v786
          %819 = vst [vmem:[%s352 + $0xb0] sm:$0xff] %v787
          %820 = vst [vmem:[%s352 + $0xb8] sm:$0xff] %v788
          %821 = vst [vmem:[%s352 + $0xc0] sm:$0xff] %v789
          %822 = vst [vmem:[%s352 + $0xc8] sm:$0xff] %v790
          %823 = vst [vmem:[%s352 + $0xd0] sm:$0xff] %v791
          %824 = vst [vmem:[%s352 + $0xd8] sm:$0xff] %v792
          %825 = vst [vmem:[%s352 + $0xe0] sm:$0xff] %v793
          %826 = vst [vmem:[%s352 + $0xe8] sm:$0xff] %v794
          %827 = vst [vmem:[%s352 + $0xf0] sm:$0xff] %v795
          %828 = vst [vmem:[%s352 + $0xf8] sm:$0xff] %v796
        $region74: #{igala_forward.5} parent=61 // pred_fallthru
          _
        %s829 = smul.u32 32, %s18
        %p830 = scmp.lt.s32.totalorder %s829, 95
        %s831 = scalar_select %p830, %s829, 95
        %p832 = scmp.lt.s32.totalorder %s19, 0
        %s833 = scalar_select %p832, %s19, 0
        %s834 = sadd.s32 %s833, %s831
        %s835 = smul.addr %s834, 8
        %s836 = scalar_lea.vmem %s2, %s835
        // Predicated region
        $region75: #{igala_forward.5} parent=61 // pred_check
          %p837 = pneg %p106
        $region76: #{igala_forward.5} parent=61 // pred_check_branch
          %839 = sbr.rel (%p837) target = $region78
        $region77: #{igala_forward.5} parent=61 // pred_region
          %s840 = smul.u32 32, %s18
        $region78: #{igala_forward.5} parent=61 // pred_fallthru
          _
      $region62: #{igala_forward.5} parent=5 // pred_fallthru
        _
      %p841 = scmp.le.s32.totalorder 2, %s8
      // Predicated region
      $region79: #{igala_forward.5} parent=5 // pred_check
        %p842 = pneg %p841
      $region80: #{igala_forward.5} parent=5 // pred_check_branch
        %844 = sbr.rel (%p842) target = $region82
      $region81: #{igala_forward.5} parent=5 // pred_region
        %s845 = ssub.s32 %s8, 2
        // Predicated region
        $region83: #{igala_forward.5} parent=81 // pred_check
          %p846 = pneg %p112
        $region84: #{igala_forward.5} parent=81 // pred_check_branch
          %848 = sbr.rel (%p846) target = $region86
        $region85: #{igala_forward.5} parent=81 // pred_region
          %s849 = smul.u32 32, %s21
          %p850 = scmp.lt.s32.totalorder %s849, 95
          %s851 = scalar_select %p850, %s849, 95
          %p852 = scmp.lt.s32.totalorder %s22, 0
          %s853 = scalar_select %p852, %s22, 0
          %s854 = sadd.s32 %s853, %s851
          %s855 = smul.addr %s854, 8
          %s856 = scalar_lea.vmem %s2, %s855
        $region86: #{igala_forward.5} parent=81 // pred_fallthru
          _
      $region82: #{igala_forward.5} parent=5 // pred_fallthru
        _
    $region6: #{igala_forward.5} parent=1 // loop_footer
      %s12 = sadd.s32 1, %s8
    $region7: #{igala_forward.5} parent=1 // loop_footer_branch
      %7 = sbr.rel target = $region3
    $region8: #{igala_forward.5} parent=1 // loop_exit
      _

// kernel: igala_forward.7
$region0: #{igala_forward.7}
  #allocation0 [shape = 'u32[]', space=smem, size = 0x4, offset = 0x4, fixed_abs, tag = 'smem constant byte address 0x4 - core index']
  #allocation1 [shape = 'u32[144,128]{1,0:T(1,128)}', space=vmem, size = 0x12000, scoped, tag = 'internal scratch']
  #allocation2 [shape = 'f32[256,512]{1,0:T(8,128)}', space=vmem, size = 0x80000, scoped, tag = 'scratch operand']
  %s0 = inlined_call_operand.vmem [shape: f32[768,640], index: 0, kind: input, shape index: {}]
  %s1 = inlined_call_operand.vmem [shape: f32[640,1024], index: 1, kind: input, shape index: {}]
  %s2 = inlined_call_operand.vmem [shape: f32[768,1024], index: 2, kind: output, shape index: {}]
  %s3 = sld [smem:[#allocation0]]
  $region129: #{igala_forward.7} parent=0
    _
  %s5 = ssub.s32 1, %s3
  %s6 = scalar_select 0, %s5, %s3
  $region1: #{igala_forward.7} parent=0
    #allocation3 [shape = 'u8[262144]{0}', space=vmem, size = 0x40000, scoped, tag = 'input window, operand 0']
    #allocation4 [shape = 'u8[2621440]{0}', space=vmem, size = 0x280000, scoped, tag = 'input window, operand 1']
    #allocation5 [shape = 'u8[1048576]{0}', space=vmem, size = 0x100000, scoped, tag = 'output window, operand 0']
    loop: start=0, step=1, limit=32
    $region2: #{igala_forward.7} parent=1 // loop_pre_header
      _
    $region3: #{igala_forward.7} parent=1 // loop_header
      %s8 = sphi 0, %s12
      %p9 = scmp.ge.s32.totalorder %s8, 32
      %s15 = sphi 0, %s34
      %s16 = sphi 0, %s30
      %s17 = sphi 0, %s26
      %s18 = sphi 0, %s15
      %s19 = sphi 0, %s16
      %s20 = sphi 0, %s17
      %s21 = sphi 0, %s18
      %s22 = sphi 0, %s19
      %s23 = sphi 0, %s20
      %s39 = sphi 0, %s41
      %s42 = sphi 0, %s39
      %s43 = sphi 0, %s42
      %s59 = sphi 0, %s43
      %s65 = sphi 0, %s67
      %s68 = sphi 0, %s65
      %s69 = sphi 0, %s68
      %s85 = sphi 0, %s69
      %s93 = sphi 0, %s95
      %s96 = sphi 0, %s93
      %s97 = sphi 0, %s96
      %s113 = sphi 0, %s97
    $region4: #{igala_forward.7} parent=1 // loop_header_branch
      %11 = sbr.rel (%p9) target = $region8
    $region5: #{igala_forward.7} parent=1 // loop_body
      %s13 = ssub.s32 %s8, 1
      %s14 = ssub.s32 %s8, 2
      %s24 = sadd.s32 1, %s17
      %p25 = scmp.ge.s32.totalorder %s24, 5
      %s26 = scalar_select %p25, 0, %s24
      %s27 = sadd.s32 1, %s16
      %s28 = scalar_select %p25, %s27, %s16
      %p29 = scmp.ge.s32.totalorder %s28, 2
      %s30 = scalar_select %p29, 0, %s28
      %s31 = sadd.s32 1, %s15
      %s32 = scalar_select %p29, %s31, %s15
      %p33 = scmp.ge.s32.totalorder %s32, 3
      %s34 = scalar_select %p33, 0, %s32
      %s35 = ssub.s32 %s15, %s34
      %s36 = ssub.s32 %s17, %s26
      %s37 = sor.u32 %s35, %s36
      %p38 = scmp.eq.s32.totalorder %s37, 0
      %s40 = sadd.s32 %s39, 1
      %s41 = scalar_select %p38, %s39, %s40
      %p44 = pneg %p38
      %p45 = scmp.eq.s32.totalorder %s8, 29
      %p46 = por %p44, %p45
      %p47 = scmp.ne.s32.totalorder %s39, %s42
      %p48 = scmp.eq.s32.totalorder %s8, 0
      %p49 = por %p47, %p48
      %p50 = scmp.ne.s32.totalorder %s39, %s42
      %p51 = scmp.eq.s32.totalorder %s13, 29
      %p52 = por %p50, %p51
      %p53 = scmp.ne.s32.totalorder %s42, %s43
      %p54 = scmp.eq.s32.totalorder %s13, 0
      %p55 = por %p53, %p54
      %p56 = scmp.ne.s32.totalorder %s42, %s43
      %p57 = scmp.eq.s32.totalorder %s14, 29
      %p58 = por %p56, %p57
      %p60 = scmp.ne.s32.totalorder %s43, %s59
      %p61 = scmp.eq.s32.totalorder %s14, 0
      %p62 = por %p60, %p61
      %s63 = ssub.s32 %s16, %s30
      %p64 = scmp.eq.s32.totalorder %s63, 0
      %s66 = sadd.s32 %s65, 1
      %s67 = scalar_select %p64, %s65, %s66
      %p70 = pneg %p64
      %p71 = scmp.eq.s32.totalorder %s8, 29
      %p72 = por %p70, %p71
      %p73 = scmp.ne.s32.totalorder %s65, %s68
      %p74 = scmp.eq.s32.totalorder %s8, 0
      %p75 = por %p73, %p74
      %p76 = scmp.ne.s32.totalorder %s65, %s68
      %p77 = scmp.eq.s32.totalorder %s13, 29
      %p78 = por %p76, %p77
      %p79 = scmp.ne.s32.totalorder %s68, %s69
      %p80 = scmp.eq.s32.totalorder %s13, 0
      %p81 = por %p79, %p80
      %p82 = scmp.ne.s32.totalorder %s68, %s69
      %p83 = scmp.eq.s32.totalorder %s14, 29
      %p84 = por %p82, %p83
      %p86 = scmp.ne.s32.totalorder %s69, %s85
      %p87 = scmp.eq.s32.totalorder %s14, 0
      %p88 = por %p86, %p87
      %s89 = ssub.s32 %s15, %s34
      %s90 = ssub.s32 %s16, %s30
      %s91 = sor.u32 %s89, %s90
      %p92 = scmp.eq.s32.totalorder %s91, 0
      %s94 = sadd.s32 %s93, 1
      %s95 = scalar_select %p92, %s93, %s94
      %p98 = pneg %p92
      %p99 = scmp.eq.s32.totalorder %s8, 29
      %p100 = por %p98, %p99
      %p101 = scmp.ne.s32.totalorder %s93, %s96
      %p102 = scmp.eq.s32.totalorder %s8, 0
      %p103 = por %p101, %p102
      %p104 = scmp.ne.s32.totalorder %s93, %s96
      %p105 = scmp.eq.s32.totalorder %s13, 29
      %p106 = por %p104, %p105
      %p107 = scmp.ne.s32.totalorder %s96, %s97
      %p108 = scmp.eq.s32.totalorder %s13, 0
      %p109 = por %p107, %p108
      %p110 = scmp.ne.s32.totalorder %s96, %s97
      %p111 = scmp.eq.s32.totalorder %s14, 29
      %p112 = por %p110, %p111
      %p114 = scmp.ne.s32.totalorder %s97, %s113
      %p115 = scmp.eq.s32.totalorder %s14, 0
      %p116 = por %p114, %p115
      %p117 = scmp.le.s32.totalorder 1, %s8
      %p118 = scmp.lt.s32.totalorder %s8, 31
      %p119 = pnand %p117, %p118
      %p120 = pneg %p119
      // Predicated region
      $region9: #{igala_forward.7} parent=5 // pred_check
        _
      $region10: #{igala_forward.7} parent=5 // pred_check_branch
        %122 = sbr.rel (%p119) target = $region12
      $region11: #{igala_forward.7} parent=5 // pred_region
        %s123 = ssub.s32 %s8, 1
      $region12: #{igala_forward.7} parent=5 // pred_fallthru
        _
      %p124 = scmp.lt.s32.totalorder %s8, 30
      // Predicated region
      $region13: #{igala_forward.7} parent=5 // pred_check
        %p125 = pneg %p124
      $region14: #{igala_forward.7} parent=5 // pred_check_branch
        %127 = sbr.rel (%p125) target = $region16
      $region15: #{igala_forward.7} parent=5 // pred_region
        // Predicated region
        $region17: #{igala_forward.7} parent=15 // pred_check
          %p128 = pneg %p49
        $region18: #{igala_forward.7} parent=15 // pred_check_branch
          %130 = sbr.rel (%p128) target = $region20
        $region19: #{igala_forward.7} parent=15 // pred_region
          %s131 = sand.u32 %s39, 1
          %s132 = sand.u32 %s39, 1
          %s133 = smul.addr %s132, 256
          %s134 = scalar_lea.vmem [#allocation3], %s133
          %s135 = smul.u32 32, %s15
          %s136 = smul.addr %s135, 5
          %s137 = sadd.s32 %s17, %s136
          %s138 = smul.addr %s137, 8
          %s139 = scalar_lea.vmem %s0, %s138
          // Predicated region
          $region21: #{igala_forward.7} parent=19 // pred_check
            _
          $region22: #{igala_forward.7} parent=19 // pred_check_branch
            %141 = sbr.rel (0) target = $region24
          $region23: #{igala_forward.7} parent=19 // pred_region
            // Predicated region
            $region25: #{igala_forward.7} parent=23 // pred_check
              _
            $region26: #{igala_forward.7} parent=23 // pred_check_branch
              %143 = sbr.rel (0) target = $region28
            $region27: #{igala_forward.7} parent=23 // pred_region
              // Predicated region
              $region40: #{igala_forward.7} parent=27 // pred_check
                _
              $region41: #{igala_forward.7} parent=27 // pred_check_branch
                %221 = sbr.rel (0) target = $region43
              $region42: #{igala_forward.7} parent=27 // pred_region
                loop: start=0, step=1, limit=1
                $region44: #{igala_forward.7} parent=42 // loop_pre_header
                  _
                $region45: #{igala_forward.7} parent=42 // loop_header
                  %s223 = sphi 0, %s227
                  %p224 = scmp.ge.s32.totalorder %s223, 1
                  %s228 = sphi %s139, %s139
                  %s229 = sphi %s134, %s134
                $region46: #{igala_forward.7} parent=42 // loop_header_branch
                  %226 = sbr.rel (%p224) target = $region50
                $region47: #{igala_forward.7} parent=42 // loop_body
                  %v230 = vld [vmem:[%s228] sm:$0xff]
                  %231 = vst [vmem:[%s229] sm:$0xff] %v230
                  %v232 = vld [vmem:[%s228 + $0x28] sm:$0xff]
                  %233 = vst [vmem:[%s229 + $0x8] sm:$0xff] %v232
                  %v234 = vld [vmem:[%s228 + $0x50] sm:$0xff]
                  %235 = vst [vmem:[%s229 + $0x10] sm:$0xff] %v234
                  %v236 = vld [vmem:[%s228 + $0x78] sm:$0xff]
                  %237 = vst [vmem:[%s229 + $0x18] sm:$0xff] %v236
                  %v238 = vld [vmem:[%s228 + $0xa0] sm:$0xff]
                  %239 = vst [vmem:[%s229 + $0x20] sm:$0xff] %v238
                  %v240 = vld [vmem:[%s228 + $0xc8] sm:$0xff]
                  %241 = vst [vmem:[%s229 + $0x28] sm:$0xff] %v240
                  %v242 = vld [vmem:[%s228 + $0xf0] sm:$0xff]
                  %243 = vst [vmem:[%s229 + $0x30] sm:$0xff] %v242
                  %v244 = vld [vmem:[%s228 + $0x118] sm:$0xff]
                  %245 = vst [vmem:[%s229 + $0x38] sm:$0xff] %v244
                  %v246 = vld [vmem:[%s228 + $0x140] sm:$0xff]
                  %247 = vst [vmem:[%s229 + $0x40] sm:$0xff] %v246
                  %v248 = vld [vmem:[%s228 + $0x168] sm:$0xff]
                  %249 = vst [vmem:[%s229 + $0x48] sm:$0xff] %v248
                  %v250 = vld [vmem:[%s228 + $0x190] sm:$0xff]
                  %251 = vst [vmem:[%s229 + $0x50] sm:$0xff] %v250
                  %v252 = vld [vmem:[%s228 + $0x1b8] sm:$0xff]
                  %253 = vst [vmem:[%s229 + $0x58] sm:$0xff] %v252
                  %v254 = vld [vmem:[%s228 + $0x1e0] sm:$0xff]
                  %255 = vst [vmem:[%s229 + $0x60] sm:$0xff] %v254
                  %v256 = vld [vmem:[%s228 + $0x208] sm:$0xff]
                  %257 = vst [vmem:[%s229 + $0x68] sm:$0xff] %v256
                  %v258 = vld [vmem:[%s228 + $0x230] sm:$0xff]
                  %259 = vst [vmem:[%s229 + $0x70] sm:$0xff] %v258
                  %v260 = vld [vmem:[%s228 + $0x258] sm:$0xff]
                  %261 = vst [vmem:[%s229 + $0x78] sm:$0xff] %v260
                  %v262 = vld [vmem:[%s228 + $0x280] sm:$0xff]
                  %263 = vst [vmem:[%s229 + $0x80] sm:$0xff] %v262
                  %v264 = vld [vmem:[%s228 + $0x2a8] sm:$0xff]
                  %265 = vst [vmem:[%s229 + $0x88] sm:$0xff] %v264
                  %v266 = vld [vmem:[%s228 + $0x2d0] sm:$0xff]
                  %267 = vst [vmem:[%s229 + $0x90] sm:$0xff] %v266
                  %v268 = vld [vmem:[%s228 + $0x2f8] sm:$0xff]
                  %269 = vst [vmem:[%s229 + $0x98] sm:$0xff] %v268
                  %v270 = vld [vmem:[%s228 + $0x320] sm:$0xff]
                  %271 = vst [vmem:[%s229 + $0xa0] sm:$0xff] %v270
                  %v272 = vld [vmem:[%s228 + $0x348] sm:$0xff]
                  %273 = vst [vmem:[%s229 + $0xa8] sm:$0xff] %v272
                  %v274 = vld [vmem:[%s228 + $0x370] sm:$0xff]
                  %275 = vst [vmem:[%s229 + $0xb0] sm:$0xff] %v274
                  %v276 = vld [vmem:[%s228 + $0x398] sm:$0xff]
                  %277 = vst [vmem:[%s229 + $0xb8] sm:$0xff] %v276
                  %v278 = vld [vmem:[%s228 + $0x3c0] sm:$0xff]
                  %279 = vst [vmem:[%s229 + $0xc0] sm:$0xff] %v278
                  %v280 = vld [vmem:[%s228 + $0x3e8] sm:$0xff]
                  %281 = vst [vmem:[%s229 + $0xc8] sm:$0xff] %v280
                  %v282 = vld [vmem:[%s228 + $0x410] sm:$0xff]
                  %283 = vst [vmem:[%s229 + $0xd0] sm:$0xff] %v282
                  %v284 = vld [vmem:[%s228 + $0x438] sm:$0xff]
                  %285 = vst [vmem:[%s229 + $0xd8] sm:$0xff] %v284
                  %v286 = vld [vmem:[%s228 + $0x460] sm:$0xff]
                  %287 = vst [vmem:[%s229 + $0xe0] sm:$0xff] %v286
                  %v288 = vld [vmem:[%s228 + $0x488] sm:$0xff]
                  %289 = vst [vmem:[%s229 + $0xe8] sm:$0xff] %v288
                  %v290 = vld [vmem:[%s228 + $0x4b0] sm:$0xff]
                  %291 = vst [vmem:[%s229 + $0xf0] sm:$0xff] %v290
                  %v292 = vld [vmem:[%s228 + $0x4d8] sm:$0xff]
                  %293 = vst [vmem:[%s229 + $0xf8] sm:$0xff] %v292
                $region48: #{igala_forward.7} parent=42 // loop_footer
                  %s227 = sadd.s32 1, %s223
                $region49: #{igala_forward.7} parent=42 // loop_footer_branch
                  %222 = sbr.rel target = $region45
                $region50: #{igala_forward.7} parent=42 // loop_exit
                  _
              $region43: #{igala_forward.7} parent=27 // pred_fallthru
                _
              // Predicated region
              $region51: #{igala_forward.7} parent=27 // pred_check
                _
              $region52: #{igala_forward.7} parent=27 // pred_check_branch
                %295 = sbr.rel target = $region54
              $region53: #{igala_forward.7} parent=27 // pred_region
                _
              $region54: #{igala_forward.7} parent=27 // pred_fallthru
                _
            $region28: #{igala_forward.7} parent=23 // pred_fallthru
              _
            // Predicated region
            $region29: #{igala_forward.7} parent=23 // pred_check
              _
            $region30: #{igala_forward.7} parent=23 // pred_check_branch
              %145 = sbr.rel target = $region32
            $region31: #{igala_forward.7} parent=23 // pred_region
              %s147 = ssub.s32 256, 1
              loop: start=0, step=1, limit=1
              $region33: #{igala_forward.7} parent=31 // loop_pre_header
                _
              $region34: #{igala_forward.7} parent=31 // loop_header
                %s149 = sphi 0, %s153
                %p150 = scmp.ge.s32.totalorder %s149, 1
                %s154 = sphi %s139, %s139
                %s155 = sphi %s134, %s134
              $region35: #{igala_forward.7} parent=31 // loop_header_branch
                %152 = sbr.rel (%p150) target = $region39
              $region36: #{igala_forward.7} parent=31 // loop_body
                %v156 = vld [vmem:[%s154] sm:%s147]
                %157 = vst [vmem:[%s155] sm:%s147] %v156
                %v158 = vld [vmem:[%s154 + $0x28] sm:%s147]
                %159 = vst [vmem:[%s155 + $0x8] sm:%s147] %v158
                %v160 = vld [vmem:[%s154 + $0x50] sm:%s147]
                %161 = vst [vmem:[%s155 + $0x10] sm:%s147] %v160
                %v162 = vld [vmem:[%s154 + $0x78] sm:%s147]
                %163 = vst [vmem:[%s155 + $0x18] sm:%s147] %v162
                %v164 = vld [vmem:[%s154 + $0xa0] sm:%s147]
                %165 = vst [vmem:[%s155 + $0x20] sm:%s147] %v164
                %v166 = vld [vmem:[%s154 + $0xc8] sm:%s147]
                %167 = vst [vmem:[%s155 + $0x28] sm:%s147] %v166
                %v168 = vld [vmem:[%s154 + $0xf0] sm:%s147]
                %169 = vst [vmem:[%s155 + $0x30] sm:%s147] %v168
                %v170 = vld [vmem:[%s154 + $0x118] sm:%s147]
                %171 = vst [vmem:[%s155 + $0x38] sm:%s147] %v170
                %v172 = vld [vmem:[%s154 + $0x140] sm:%s147]
                %173 = vst [vmem:[%s155 + $0x40] sm:%s147] %v172
                %v174 = vld [vmem:[%s154 + $0x168] sm:%s147]
                %175 = vst [vmem:[%s155 + $0x48] sm:%s147] %v174
                %v176 = vld [vmem:[%s154 + $0x190] sm:%s147]
                %177 = vst [vmem:[%s155 + $0x50] sm:%s147] %v176
                %v178 = vld [vmem:[%s154 + $0x1b8] sm:%s147]
                %179 = vst [vmem:[%s155 + $0x58] sm:%s147] %v178
                %v180 = vld [vmem:[%s154 + $0x1e0] sm:%s147]
                %181 = vst [vmem:[%s155 + $0x60] sm:%s147] %v180
                %v182 = vld [vmem:[%s154 + $0x208] sm:%s147]
                %183 = vst [vmem:[%s155 + $0x68] sm:%s147] %v182
                %v184 = vld [vmem:[%s154 + $0x230] sm:%s147]
                %185 = vst [vmem:[%s155 + $0x70] sm:%s147] %v184
                %v186 = vld [vmem:[%s154 + $0x258] sm:%s147]
                %187 = vst [vmem:[%s155 + $0x78] sm:%s147] %v186
                %v188 = vld [vmem:[%s154 + $0x280] sm:%s147]
                %189 = vst [vmem:[%s155 + $0x80] sm:%s147] %v188
                %v190 = vld [vmem:[%s154 + $0x2a8] sm:%s147]
                %191 = vst [vmem:[%s155 + $0x88] sm:%s147] %v190
                %v192 = vld [vmem:[%s154 + $0x2d0] sm:%s147]
                %193 = vst [vmem:[%s155 + $0x90] sm:%s147] %v192
                %v194 = vld [vmem:[%s154 + $0x2f8] sm:%s147]
                %195 = vst [vmem:[%s155 + $0x98] sm:%s147] %v194
                %v196 = vld [vmem:[%s154 + $0x320] sm:%s147]
                %197 = vst [vmem:[%s155 + $0xa0] sm:%s147] %v196
                %v198 = vld [vmem:[%s154 + $0x348] sm:%s147]
                %199 = vst [vmem:[%s155 + $0xa8] sm:%s147] %v198
                %v200 = vld [vmem:[%s154 + $0x370] sm:%s147]
                %201 = vst [vmem:[%s155 + $0xb0] sm:%s147] %v200
                %v202 = vld [vmem:[%s154 + $0x398] sm:%s147]
                %203 = vst [vmem:[%s155 + $0xb8] sm:%s147] %v202
                %v204 = vld [vmem:[%s154 + $0x3c0] sm:%s147]
                %205 = vst [vmem:[%s155 + $0xc0] sm:%s147] %v204
                %v206 = vld [vmem:[%s154 + $0x3e8] sm:%s147]
                %207 = vst [vmem:[%s155 + $0xc8] sm:%s147] %v206
                %v208 = vld [vmem:[%s154 + $0x410] sm:%s147]
                %209 = vst [vmem:[%s155 + $0xd0] sm:%s147] %v208
                %v210 = vld [vmem:[%s154 + $0x438] sm:%s147]
                %211 = vst [vmem:[%s155 + $0xd8] sm:%s147] %v210
                %v212 = vld [vmem:[%s154 + $0x460] sm:%s147]
                %213 = vst [vmem:[%s155 + $0xe0] sm:%s147] %v212
                %v214 = vld [vmem:[%s154 + $0x488] sm:%s147]
                %215 = vst [vmem:[%s155 + $0xe8] sm:%s147] %v214
                %v216 = vld [vmem:[%s154 + $0x4b0] sm:%s147]
                %217 = vst [vmem:[%s155 + $0xf0] sm:%s147] %v216
                %v218 = vld [vmem:[%s154 + $0x4d8] sm:%s147]
                %219 = vst [vmem:[%s155 + $0xf8] sm:%s147] %v218
              $region37: #{igala_forward.7} parent=31 // loop_footer
                %s153 = sadd.s32 1, %s149
              $region38: #{igala_forward.7} parent=31 // loop_footer_branch
                %148 = sbr.rel target = $region34
              $region39: #{igala_forward.7} parent=31 // loop_exit
                _
            $region32: #{igala_forward.7} parent=23 // pred_fallthru
              _
          $region24: #{igala_forward.7} parent=19 // pred_fallthru
            _
          %296 = vnop
        $region20: #{igala_forward.7} parent=15 // pred_fallthru
          _
        // Predicated region
        $region55: #{igala_forward.7} parent=15 // pred_check
          %p297 = pneg %p75
        $region56: #{igala_forward.7} parent=15 // pred_check_branch
          %299 = sbr.rel (%p297) target = $region58
        $region57: #{igala_forward.7} parent=15 // pred_region
          %s300 = sand.u32 %s65, 1
          %s301 = sand.u32 %s65, 1
          %s302 = smul.addr %s301, 2560
          %s303 = scalar_lea.vmem [#allocation4], %s302
          %s304 = smul.u32 4, %s16
          %s305 = smul.addr %s304, 8
          %s306 = scalar_lea.vmem %s1, %s305
          // Predicated region
          $region59: #{igala_forward.7} parent=57 // pred_check
            _
          $region60: #{igala_forward.7} parent=57 // pred_check_branch
            %308 = sbr.rel (0) target = $region62
          $region61: #{igala_forward.7} parent=57 // pred_region
            // Predicated region
            $region63: #{igala_forward.7} parent=61 // pred_check
              _
            $region64: #{igala_forward.7} parent=61 // pred_check_branch
              %310 = sbr.rel (0) target = $region66
            $region65: #{igala_forward.7} parent=61 // pred_region
              loop: start=0, step=1, limit=1
              $region67: #{igala_forward.7} parent=65 // loop_pre_header
                _
              $region68: #{igala_forward.7} parent=65 // loop_header
                %s312 = sphi 0, %s316
                %p313 = scmp.ge.s32.totalorder %s312, 1
                %s317 = sphi %s306, %s306
                %s318 = sphi %s303, %s303
              $region69: #{igala_forward.7} parent=65 // loop_header_branch
                %315 = sbr.rel (%p313) target = $region73
              $region70: #{igala_forward.7} parent=65 // loop_body
                %v319 = vld [vmem:[%s317] sm:$0xff]
                %320 = vst [vmem:[%s318] sm:$0xff] %v319
                %v321 = vld [vmem:[%s317 + $0x8] sm:$0xff]
                %322 = vst [vmem:[%s318 + $0x8] sm:$0xff] %v321
                %v323 = vld [vmem:[%s317 + $0x10] sm:$0xff]
                %324 = vst [vmem:[%s318 + $0x10] sm:$0xff] %v323
                %v325 = vld [vmem:[%s317 + $0x18] sm:$0xff]
                %326 = vst [vmem:[%s318 + $0x18] sm:$0xff] %v325
                %v327 = vld [vmem:[%s317 + $0x40] sm:$0xff]
                %328 = vst [vmem:[%s318 + $0x20] sm:$0xff] %v327
                %v329 = vld [vmem:[%s317 + $0x48] sm:$0xff]
                %330 = vst [vmem:[%s318 + $0x28] sm:$0xff] %v329
                %v331 = vld [vmem:[%s317 + $0x50] sm:$0xff]
                %332 = vst [vmem:[%s318 + $0x30] sm:$0xff] %v331
                %v333 = vld [vmem:[%s317 + $0x58] sm:$0xff]
                %334 = vst [vmem:[%s318 + $0x38] sm:$0xff] %v333
                %v335 = vld [vmem:[%s317 + $0x80] sm:$0xff]
                %336 = vst [vmem:[%s318 + $0x40] sm:$0xff] %v335
                %v337 = vld [vmem:[%s317 + $0x88] sm:$0xff]
                %338 = vst [vmem:[%s318 + $0x48] sm:$0xff] %v337
                %v339 = vld [vmem:[%s317 + $0x90] sm:$0xff]
                %340 = vst [vmem:[%s318 + $0x50] sm:$0xff] %v339
                %v341 = vld [vmem:[%s317 + $0x98] sm:$0xff]
                %342 = vst [vmem:[%s318 + $0x58] sm:$0xff] %v341
                %v343 = vld [vmem:[%s317 + $0xc0] sm:$0xff]
                %344 = vst [vmem:[%s318 + $0x60] sm:$0xff] %v343
                %v345 = vld [vmem:[%s317 + $0xc8] sm:$0xff]
                %346 = vst [vmem:[%s318 + $0x68] sm:$0xff] %v345
                %v347 = vld [vmem:[%s317 + $0xd0] sm:$0xff]
                %348 = vst [vmem:[%s318 + $0x70] sm:$0xff] %v347
                %v349 = vld [vmem:[%s317 + $0xd8] sm:$0xff]
                %350 = vst [vmem:[%s318 + $0x78] sm:$0xff] %v349
                %v351 = vld [vmem:[%s317 + $0x100] sm:$0xff]
                %352 = vst [vmem:[%s318 + $0x80] sm:$0xff] %v351
                %v353 = vld [vmem:[%s317 + $0x108] sm:$0xff]
                %354 = vst [vmem:[%s318 + $0x88] sm:$0xff] %v353
                %v355 = vld [vmem:[%s317 + $0x110] sm:$0xff]
                %356 = vst [vmem:[%s318 + $0x90] sm:$0xff] %v355
                %v357 = vld [vmem:[%s317 + $0x118] sm:$0xff]
                %358 = vst [vmem:[%s318 + $0x98] sm:$0xff] %v357
                %v359 = vld [vmem:[%s317 + $0x140] sm:$0xff]
                %360 = vst [vmem:[%s318 + $0xa0] sm:$0xff] %v359
                %v361 = vld [vmem:[%s317 + $0x148] sm:$0xff]
                %362 = vst [vmem:[%s318 + $0xa8] sm:$0xff] %v361
                %v363 = vld [vmem:[%s317 + $0x150] sm:$0xff]
                %364 = vst [vmem:[%s318 + $0xb0] sm:$0xff] %v363
                %v365 = vld [vmem:[%s317 + $0x158] sm:$0xff]
                %366 = vst [vmem:[%s318 + $0xb8] sm:$0xff] %v365
                %v367 = vld [vmem:[%s317 + $0x180] sm:$0xff]
                %368 = vst [vmem:[%s318 + $0xc0] sm:$0xff] %v367
                %v369 = vld [vmem:[%s317 + $0x188] sm:$0xff]
                %370 = vst [vmem:[%s318 + $0xc8] sm:$0xff] %v369
                %v371 = vld [vmem:[%s317 + $0x190] sm:$0xff]
                %372 = vst [vmem:[%s318 + $0xd0] sm:$0xff] %v371
                %v373 = vld [vmem:[%s317 + $0x198] sm:$0xff]
                %374 = vst [vmem:[%s318 + $0xd8] sm:$0xff] %v373
                %v375 = vld [vmem:[%s317 + $0x1c0] sm:$0xff]
                %376 = vst [vmem:[%s318 + $0xe0] sm:$0xff] %v375
                %v377 = vld [vmem:[%s317 + $0x1c8] sm:$0xff]
                %378 = vst [vmem:[%s318 + $0xe8] sm:$0xff] %v377
                %v379 = vld [vmem:[%s317 + $0x1d0] sm:$0xff]
                %380 = vst [vmem:[%s318 + $0xf0] sm:$0xff] %v379
                %v381 = vld [vmem:[%s317 + $0x1d8] sm:$0xff]
                %382 = vst [vmem:[%s318 + $0xf8] sm:$0xff] %v381
                %v383 = vld [vmem:[%s317 + $0x200] sm:$0xff]
                %384 = vst [vmem:[%s318 + $0x100] sm:$0xff] %v383
                %v385 = vld [vmem:[%s317 + $0x208] sm:$0xff]
                %386 = vst [vmem:[%s318 + $0x108] sm:$0xff] %v385
                %v387 = vld [vmem:[%s317 + $0x210] sm:$0xff]
                %388 = vst [vmem:[%s318 + $0x110] sm:$0xff] %v387
                %v389 = vld [vmem:[%s317 + $0x218] sm:$0xff]
                %390 = vst [vmem:[%s318 + $0x118] sm:$0xff] %v389
                %v391 = vld [vmem:[%s317 + $0x240] sm:$0xff]
                %392 = vst [vmem:[%s318 + $0x120] sm:$0xff] %v391
                %v393 = vld [vmem:[%s317 + $0x248] sm:$0xff]
                %394 = vst [vmem:[%s318 + $0x128] sm:$0xff] %v393
                %v395 = vld [vmem:[%s317 + $0x250] sm:$0xff]
                %396 = vst [vmem:[%s318 + $0x130] sm:$0xff] %v395
                %v397 = vld [vmem:[%s317 + $0x258] sm:$0xff]
                %398 = vst [vmem:[%s318 + $0x138] sm:$0xff] %v397
                %v399 = vld [vmem:[%s317 + $0x280] sm:$0xff]
                %400 = vst [vmem:[%s318 + $0x140] sm:$0xff] %v399
                %v401 = vld [vmem:[%s317 + $0x288] sm:$0xff]
                %402 = vst [vmem:[%s318 + $0x148] sm:$0xff] %v401
                %v403 = vld [vmem:[%s317 + $0x290] sm:$0xff]
                %404 = vst [vmem:[%s318 + $0x150] sm:$0xff] %v403
                %v405 = vld [vmem:[%s317 + $0x298] sm:$0xff]
                %406 = vst [vmem:[%s318 + $0x158] sm:$0xff] %v405
                %v407 = vld [vmem:[%s317 + $0x2c0] sm:$0xff]
                %408 = vst [vmem:[%s318 + $0x160] sm:$0xff] %v407
                %v409 = vld [vmem:[%s317 + $0x2c8] sm:$0xff]
                %410 = vst [vmem:[%s318 + $0x168] sm:$0xff] %v409
                %v411 = vld [vmem:[%s317 + $0x2d0] sm:$0xff]
                %412 = vst [vmem:[%s318 + $0x170] sm:$0xff] %v411
                %v413 = vld [vmem:[%s317 + $0x2d8] sm:$0xff]
                %414 = vst [vmem:[%s318 + $0x178] sm:$0xff] %v413
                %v415 = vld [vmem:[%s317 + $0x300] sm:$0xff]
                %416 = vst [vmem:[%s318 + $0x180] sm:$0xff] %v415
                %v417 = vld [vmem:[%s317 + $0x308] sm:$0xff]
                %418 = vst [vmem:[%s318 + $0x188] sm:$0xff] %v417
                %v419 = vld [vmem:[%s317 + $0x310] sm:$0xff]
                %420 = vst [vmem:[%s318 + $0x190] sm:$0xff] %v419
                %v421 = vld [vmem:[%s317 + $0x318] sm:$0xff]
                %422 = vst [vmem:[%s318 + $0x198] sm:$0xff] %v421
                %v423 = vld [vmem:[%s317 + $0x340] sm:$0xff]
                %424 = vst [vmem:[%s318 + $0x1a0] sm:$0xff] %v423
                %v425 = vld [vmem:[%s317 + $0x348] sm:$0xff]
                %426 = vst [vmem:[%s318 + $0x1a8] sm:$0xff] %v425
                %v427 = vld [vmem:[%s317 + $0x350] sm:$0xff]
                %428 = vst [vmem:[%s318 + $0x1b0] sm:$0xff] %v427
                %v429 = vld [vmem:[%s317 + $0x358] sm:$0xff]
                %430 = vst [vmem:[%s318 + $0x1b8] sm:$0xff] %v429
                %v431 = vld [vmem:[%s317 + $0x380] sm:$0xff]
                %432 = vst [vmem:[%s318 + $0x1c0] sm:$0xff] %v431
                %v433 = vld [vmem:[%s317 + $0x388] sm:$0xff]
                %434 = vst [vmem:[%s318 + $0x1c8] sm:$0xff] %v433
                %v435 = vld [vmem:[%s317 + $0x390] sm:$0xff]
                %436 = vst [vmem:[%s318 + $0x1d0] sm:$0xff] %v435
                %v437 = vld [vmem:[%s317 + $0x398] sm:$0xff]
                %438 = vst [vmem:[%s318 + $0x1d8] sm:$0xff] %v437
                %v439 = vld [vmem:[%s317 + $0x3c0] sm:$0xff]
                %440 = vst [vmem:[%s318 + $0x1e0] sm:$0xff] %v439
                %v441 = vld [vmem:[%s317 + $0x3c8] sm:$0xff]
                %442 = vst [vmem:[%s318 + $0x1e8] sm:$0xff] %v441
                %v443 = vld [vmem:[%s317 + $0x3d0] sm:$0xff]
                %444 = vst [vmem:[%s318 + $0x1f0] sm:$0xff] %v443
                %v445 = vld [vmem:[%s317 + $0x3d8] sm:$0xff]
                %446 = vst [vmem:[%s318 + $0x1f8] sm:$0xff] %v445
                %v447 = vld [vmem:[%s317 + $0x400] sm:$0xff]
                %448 = vst [vmem:[%s318 + $0x200] sm:$0xff] %v447
                %v449 = vld [vmem:[%s317 + $0x408] sm:$0xff]
                %450 = vst [vmem:[%s318 + $0x208] sm:$0xff] %v449
                %v451 = vld [vmem:[%s317 + $0x410] sm:$0xff]
                %452 = vst [vmem:[%s318 + $0x210] sm:$0xff] %v451
                %v453 = vld [vmem:[%s317 + $0x418] sm:$0xff]
                %454 = vst [vmem:[%s318 + $0x218] sm:$0xff] %v453
                %v455 = vld [vmem:[%s317 + $0x440] sm:$0xff]
                %456 = vst [vmem:[%s318 + $0x220] sm:$0xff] %v455
                %v457 = vld [vmem:[%s317 + $0x448] sm:$0xff]
                %458 = vst [vmem:[%s318 + $0x228] sm:$0xff] %v457
                %v459 = vld [vmem:[%s317 + $0x450] sm:$0xff]
                %460 = vst [vmem:[%s318 + $0x230] sm:$0xff] %v459
                %v461 = vld [vmem:[%s317 + $0x458] sm:$0xff]
                %462 = vst [vmem:[%s318 + $0x238] sm:$0xff] %v461
                %v463 = vld [vmem:[%s317 + $0x480] sm:$0xff]
                %464 = vst [vmem:[%s318 + $0x240] sm:$0xff] %v463
                %v465 = vld [vmem:[%s317 + $0x488] sm:$0xff]
                %466 = vst [vmem:[%s318 + $0x248] sm:$0xff] %v465
                %v467 = vld [vmem:[%s317 + $0x490] sm:$0xff]
                %468 = vst [vmem:[%s318 + $0x250] sm:$0xff] %v467
                %v469 = vld [vmem:[%s317 + $0x498] sm:$0xff]
                %470 = vst [vmem:[%s318 + $0x258] sm:$0xff] %v469
                %v471 = vld [vmem:[%s317 + $0x4c0] sm:$0xff]
                %472 = vst [vmem:[%s318 + $0x260] sm:$0xff] %v471
                %v473 = vld [vmem:[%s317 + $0x4c8] sm:$0xff]
                %474 = vst [vmem:[%s318 + $0x268] sm:$0xff] %v473
                %v475 = vld [vmem:[%s317 + $0x4d0] sm:$0xff]
                %476 = vst [vmem:[%s318 + $0x270] sm:$0xff] %v475
                %v477 = vld [vmem:[%s317 + $0x4d8] sm:$0xff]
                %478 = vst [vmem:[%s318 + $0x278] sm:$0xff] %v477
                %v479 = vld [vmem:[%s317 + $0x500] sm:$0xff]
                %480 = vst [vmem:[%s318 + $0x280] sm:$0xff] %v479
                %v481 = vld [vmem:[%s317 + $0x508] sm:$0xff]
                %482 = vst [vmem:[%s318 + $0x288] sm:$0xff] %v481
                %v483 = vld [vmem:[%s317 + $0x510] sm:$0xff]
                %484 = vst [vmem:[%s318 + $0x290] sm:$0xff] %v483
                %v485 = vld [vmem:[%s317 + $0x518] sm:$0xff]
                %486 = vst [vmem:[%s318 + $0x298] sm:$0xff] %v485
                %v487 = vld [vmem:[%s317 + $0x540] sm:$0xff]
                %488 = vst [vmem:[%s318 + $0x2a0] sm:$0xff] %v487
                %v489 = vld [vmem:[%s317 + $0x548] sm:$0xff]
                %490 = vst [vmem:[%s318 + $0x2a8] sm:$0xff] %v489
                %v491 = vld [vmem:[%s317 + $0x550] sm:$0xff]
                %492 = vst [vmem:[%s318 + $0x2b0] sm:$0xff] %v491
                %v493 = vld [vmem:[%s317 + $0x558] sm:$0xff]
                %494 = vst [vmem:[%s318 + $0x2b8] sm:$0xff] %v493
                %v495 = vld [vmem:[%s317 + $0x580] sm:$0xff]
                %496 = vst [vmem:[%s318 + $0x2c0] sm:$0xff] %v495
                %v497 = vld [vmem:[%s317 + $0x588] sm:$0xff]
                %498 = vst [vmem:[%s318 + $0x2c8] sm:$0xff] %v497
                %v499 = vld [vmem:[%s317 + $0x590] sm:$0xff]
                %500 = vst [vmem:[%s318 + $0x2d0] sm:$0xff] %v499
                %v501 = vld [vmem:[%s317 + $0x598] sm:$0xff]
                %502 = vst [vmem:[%s318 + $0x2d8] sm:$0xff] %v501
                %v503 = vld [vmem:[%s317 + $0x5c0] sm:$0xff]
                %504 = vst [vmem:[%s318 + $0x2e0] sm:$0xff] %v503
                %v505 = vld [vmem:[%s317 + $0x5c8] sm:$0xff]
                %506 = vst [vmem:[%s318 + $0x2e8] sm:$0xff] %v505
                %v507 = vld [vmem:[%s317 + $0x5d0] sm:$0xff]
                %508 = vst [vmem:[%s318 + $0x2f0] sm:$0xff] %v507
                %v509 = vld [vmem:[%s317 + $0x5d8] sm:$0xff]
                %510 = vst [vmem:[%s318 + $0x2f8] sm:$0xff] %v509
                %v511 = vld [vmem:[%s317 + $0x600] sm:$0xff]
                %512 = vst [vmem:[%s318 + $0x300] sm:$0xff] %v511
                %v513 = vld [vmem:[%s317 + $0x608] sm:$0xff]
                %514 = vst [vmem:[%s318 + $0x308] sm:$0xff] %v513
                %v515 = vld [vmem:[%s317 + $0x610] sm:$0xff]
                %516 = vst [vmem:[%s318 + $0x310] sm:$0xff] %v515
                %v517 = vld [vmem:[%s317 + $0x618] sm:$0xff]
                %518 = vst [vmem:[%s318 + $0x318] sm:$0xff] %v517
                %v519 = vld [vmem:[%s317 + $0x640] sm:$0xff]
                %520 = vst [vmem:[%s318 + $0x320] sm:$0xff] %v519
                %v521 = vld [vmem:[%s317 + $0x648] sm:$0xff]
                %522 = vst [vmem:[%s318 + $0x328] sm:$0xff] %v521
                %v523 = vld [vmem:[%s317 + $0x650] sm:$0xff]
                %524 = vst [vmem:[%s318 + $0x330] sm:$0xff] %v523
                %v525 = vld [vmem:[%s317 + $0x658] sm:$0xff]
                %526 = vst [vmem:[%s318 + $0x338] sm:$0xff] %v525
                %v527 = vld [vmem:[%s317 + $0x680] sm:$0xff]
                %528 = vst [vmem:[%s318 + $0x340] sm:$0xff] %v527
                %v529 = vld [vmem:[%s317 + $0x688] sm:$0xff]
                %530 = vst [vmem:[%s318 + $0x348] sm:$0xff] %v529
                %v531 = vld [vmem:[%s317 + $0x690] sm:$0xff]
                %532 = vst [vmem:[%s318 + $0x350] sm:$0xff] %v531
                %v533 = vld [vmem:[%s317 + $0x698] sm:$0xff]
                %534 = vst [vmem:[%s318 + $0x358] sm:$0xff] %v533
                %v535 = vld [vmem:[%s317 + $0x6c0] sm:$0xff]
                %536 = vst [vmem:[%s318 + $0x360] sm:$0xff] %v535
                %v537 = vld [vmem:[%s317 + $0x6c8] sm:$0xff]
                %538 = vst [vmem:[%s318 + $0x368] sm:$0xff] %v537
                %v539 = vld [vmem:[%s317 + $0x6d0] sm:$0xff]
                %540 = vst [vmem:[%s318 + $0x370] sm:$0xff] %v539
                %v541 = vld [vmem:[%s317 + $0x6d8] sm:$0xff]
                %542 = vst [vmem:[%s318 + $0x378] sm:$0xff] %v541
                %v543 = vld [vmem:[%s317 + $0x700] sm:$0xff]
                %544 = vst [vmem:[%s318 + $0x380] sm:$0xff] %v543
                %v545 = vld [vmem:[%s317 + $0x708] sm:$0xff]
                %546 = vst [vmem:[%s318 + $0x388] sm:$0xff] %v545
                %v547 = vld [vmem:[%s317 + $0x710] sm:$0xff]
                %548 = vst [vmem:[%s318 + $0x390] sm:$0xff] %v547
                %v549 = vld [vmem:[%s317 + $0x718] sm:$0xff]
                %550 = vst [vmem:[%s318 + $0x398] sm:$0xff] %v549
                %v551 = vld [vmem:[%s317 + $0x740] sm:$0xff]
                %552 = vst [vmem:[%s318 + $0x3a0] sm:$0xff] %v551
                %v553 = vld [vmem:[%s317 + $0x748] sm:$0xff]
                %554 = vst [vmem:[%s318 + $0x3a8] sm:$0xff] %v553
                %v555 = vld [vmem:[%s317 + $0x750] sm:$0xff]
                %556 = vst [vmem:[%s318 + $0x3b0] sm:$0xff] %v555
                %v557 = vld [vmem:[%s317 + $0x758] sm:$0xff]
                %558 = vst [vmem:[%s318 + $0x3b8] sm:$0xff] %v557
                %v559 = vld [vmem:[%s317 + $0x780] sm:$0xff]
                %560 = vst [vmem:[%s318 + $0x3c0] sm:$0xff] %v559
                %v561 = vld [vmem:[%s317 + $0x788] sm:$0xff]
                %562 = vst [vmem:[%s318 + $0x3c8] sm:$0xff] %v561
                %v563 = vld [vmem:[%s317 + $0x790] sm:$0xff]
                %564 = vst [vmem:[%s318 + $0x3d0] sm:$0xff] %v563
                %v565 = vld [vmem:[%s317 + $0x798] sm:$0xff]
                %566 = vst [vmem:[%s318 + $0x3d8] sm:$0xff] %v565
                %v567 = vld [vmem:[%s317 + $0x7c0] sm:$0xff]
                %568 = vst [vmem:[%s318 + $0x3e0] sm:$0xff] %v567
                %v569 = vld [vmem:[%s317 + $0x7c8] sm:$0xff]
                %570 = vst [vmem:[%s318 + $0x3e8] sm:$0xff] %v569
                %v571 = vld [vmem:[%s317 + $0x7d0] sm:$0xff]
                %572 = vst [vmem:[%s318 + $0x3f0] sm:$0xff] %v571
                %v573 = vld [vmem:[%s317 + $0x7d8] sm:$0xff]
                %574 = vst [vmem:[%s318 + $0x3f8] sm:$0xff] %v573
                %v575 = vld [vmem:[%s317 + $0x800] sm:$0xff]
                %576 = vst [vmem:[%s318 + $0x400] sm:$0xff] %v575
                %v577 = vld [vmem:[%s317 + $0x808] sm:$0xff]
                %578 = vst [vmem:[%s318 + $0x408] sm:$0xff] %v577
                %v579 = vld [vmem:[%s317 + $0x810] sm:$0xff]
                %580 = vst [vmem:[%s318 + $0x410] sm:$0xff] %v579
                %v581 = vld [vmem:[%s317 + $0x818] sm:$0xff]
                %582 = vst [vmem:[%s318 + $0x418] sm:$0xff] %v581
                %v583 = vld [vmem:[%s317 + $0x840] sm:$0xff]
                %584 = vst [vmem:[%s318 + $0x420] sm:$0xff] %v583
                %v585 = vld [vmem:[%s317 + $0x848] sm:$0xff]
                %586 = vst [vmem:[%s318 + $0x428] sm:$0xff] %v585
                %v587 = vld [vmem:[%s317 + $0x850] sm:$0xff]
                %588 = vst [vmem:[%s318 + $0x430] sm:$0xff] %v587
                %v589 = vld [vmem:[%s317 + $0x858] sm:$0xff]
                %590 = vst [vmem:[%s318 + $0x438] sm:$0xff] %v589
                %v591 = vld [vmem:[%s317 + $0x880] sm:$0xff]
                %592 = vst [vmem:[%s318 + $0x440] sm:$0xff] %v591
                %v593 = vld [vmem:[%s317 + $0x888] sm:$0xff]
                %594 = vst [vmem:[%s318 + $0x448] sm:$0xff] %v593
                %v595 = vld [vmem:[%s317 + $0x890] sm:$0xff]
                %596 = vst [vmem:[%s318 + $0x450] sm:$0xff] %v595
                %v597 = vld [vmem:[%s317 + $0x898] sm:$0xff]
                %598 = vst [vmem:[%s318 + $0x458] sm:$0xff] %v597
                %v599 = vld [vmem:[%s317 + $0x8c0] sm:$0xff]
                %600 = vst [vmem:[%s318 + $0x460] sm:$0xff] %v599
                %v601 = vld [vmem:[%s317 + $0x8c8] sm:$0xff]
                %602 = vst [vmem:[%s318 + $0x468] sm:$0xff] %v601
                %v603 = vld [vmem:[%s317 + $0x8d0] sm:$0xff]
                %604 = vst [vmem:[%s318 + $0x470] sm:$0xff] %v603
                %v605 = vld [vmem:[%s317 + $0x8d8] sm:$0xff]
                %606 = vst [vmem:[%s318 + $0x478] sm:$0xff] %v605
                %v607 = vld [vmem:[%s317 + $0x900] sm:$0xff]
                %608 = vst [vmem:[%s318 + $0x480] sm:$0xff] %v607
                %v609 = vld [vmem:[%s317 + $0x908] sm:$0xff]
                %610 = vst [vmem:[%s318 + $0x488] sm:$0xff] %v609
                %v611 = vld [vmem:[%s317 + $0x910] sm:$0xff]
                %612 = vst [vmem:[%s318 + $0x490] sm:$0xff] %v611
                %v613 = vld [vmem:[%s317 + $0x918] sm:$0xff]
                %614 = vst [vmem:[%s318 + $0x498] sm:$0xff] %v613
                %v615 = vld [vmem:[%s317 + $0x940] sm:$0xff]
                %616 = vst [vmem:[%s318 + $0x4a0] sm:$0xff] %v615
                %v617 = vld [vmem:[%s317 + $0x948] sm:$0xff]
                %618 = vst [vmem:[%s318 + $0x4a8] sm:$0xff] %v617
                %v619 = vld [vmem:[%s317 + $0x950] sm:$0xff]
                %620 = vst [vmem:[%s318 + $0x4b0] sm:$0xff] %v619
                %v621 = vld [vmem:[%s317 + $0x958] sm:$0xff]
                %622 = vst [vmem:[%s318 + $0x4b8] sm:$0xff] %v621
                %v623 = vld [vmem:[%s317 + $0x980] sm:$0xff]
                %624 = vst [vmem:[%s318 + $0x4c0] sm:$0xff] %v623
                %v625 = vld [vmem:[%s317 + $0x988] sm:$0xff]
                %626 = vst [vmem:[%s318 + $0x4c8] sm:$0xff] %v625
                %v627 = vld [vmem:[%s317 + $0x990] sm:$0xff]
                %628 = vst [vmem:[%s318 + $0x4d0] sm:$0xff] %v627
                %v629 = vld [vmem:[%s317 + $0x998] sm:$0xff]
                %630 = vst [vmem:[%s318 + $0x4d8] sm:$0xff] %v629
                %v631 = vld [vmem:[%s317 + $0x9c0] sm:$0xff]
                %632 = vst [vmem:[%s318 + $0x4e0] sm:$0xff] %v631
                %v633 = vld [vmem:[%s317 + $0x9c8] sm:$0xff]
                %634 = vst [vmem:[%s318 + $0x4e8] sm:$0xff] %v633
                %v635 = vld [vmem:[%s317 + $0x9d0] sm:$0xff]
                %636 = vst [vmem:[%s318 + $0x4f0] sm:$0xff] %v635
                %v637 = vld [vmem:[%s317 + $0x9d8] sm:$0xff]
                %638 = vst [vmem:[%s318 + $0x4f8] sm:$0xff] %v637
                %v639 = vld [vmem:[%s317 + $0xa00] sm:$0xff]
                %640 = vst [vmem:[%s318 + $0x500] sm:$0xff] %v639
                %v641 = vld [vmem:[%s317 + $0xa08] sm:$0xff]
                %642 = vst [vmem:[%s318 + $0x508] sm:$0xff] %v641
                %v643 = vld [vmem:[%s317 + $0xa10] sm:$0xff]
                %644 = vst [vmem:[%s318 + $0x510] sm:$0xff] %v643
                %v645 = vld [vmem:[%s317 + $0xa18] sm:$0xff]
                %646 = vst [vmem:[%s318 + $0x518] sm:$0xff] %v645
                %v647 = vld [vmem:[%s317 + $0xa40] sm:$0xff]
                %648 = vst [vmem:[%s318 + $0x520] sm:$0xff] %v647
                %v649 = vld [vmem:[%s317 + $0xa48] sm:$0xff]
                %650 = vst [vmem:[%s318 + $0x528] sm:$0xff] %v649
                %v651 = vld [vmem:[%s317 + $0xa50] sm:$0xff]
                %652 = vst [vmem:[%s318 + $0x530] sm:$0xff] %v651
                %v653 = vld [vmem:[%s317 + $0xa58] sm:$0xff]
                %654 = vst [vmem:[%s318 + $0x538] sm:$0xff] %v653
                %v655 = vld [vmem:[%s317 + $0xa80] sm:$0xff]
                %656 = vst [vmem:[%s318 + $0x540] sm:$0xff] %v655
                %v657 = vld [vmem:[%s317 + $0xa88] sm:$0xff]
                %658 = vst [vmem:[%s318 + $0x548] sm:$0xff] %v657
                %v659 = vld [vmem:[%s317 + $0xa90] sm:$0xff]
                %660 = vst [vmem:[%s318 + $0x550] sm:$0xff] %v659
                %v661 = vld [vmem:[%s317 + $0xa98] sm:$0xff]
                %662 = vst [vmem:[%s318 + $0x558] sm:$0xff] %v661
                %v663 = vld [vmem:[%s317 + $0xac0] sm:$0xff]
                %664 = vst [vmem:[%s318 + $0x560] sm:$0xff] %v663
                %v665 = vld [vmem:[%s317 + $0xac8] sm:$0xff]
                %666 = vst [vmem:[%s318 + $0x568] sm:$0xff] %v665
                %v667 = vld [vmem:[%s317 + $0xad0] sm:$0xff]
                %668 = vst [vmem:[%s318 + $0x570] sm:$0xff] %v667
                %v669 = vld [vmem:[%s317 + $0xad8] sm:$0xff]
                %670 = vst [vmem:[%s318 + $0x578] sm:$0xff] %v669
                %v671 = vld [vmem:[%s317 + $0xb00] sm:$0xff]
                %672 = vst [vmem:[%s318 + $0x580] sm:$0xff] %v671
                %v673 = vld [vmem:[%s317 + $0xb08] sm:$0xff]
                %674 = vst [vmem:[%s318 + $0x588] sm:$0xff] %v673
                %v675 = vld [vmem:[%s317 + $0xb10] sm:$0xff]
                %676 = vst [vmem:[%s318 + $0x590] sm:$0xff] %v675
                %v677 = vld [vmem:[%s317 + $0xb18] sm:$0xff]
                %678 = vst [vmem:[%s318 + $0x598] sm:$0xff] %v677
                %v679 = vld [vmem:[%s317 + $0xb40] sm:$0xff]
                %680 = vst [vmem:[%s318 + $0x5a0] sm:$0xff] %v679
                %v681 = vld [vmem:[%s317 + $0xb48] sm:$0xff]
                %682 = vst [vmem:[%s318 + $0x5a8] sm:$0xff] %v681
                %v683 = vld [vmem:[%s317 + $0xb50] sm:$0xff]
                %684 = vst [vmem:[%s318 + $0x5b0] sm:$0xff] %v683
                %v685 = vld [vmem:[%s317 + $0xb58] sm:$0xff]
                %686 = vst [vmem:[%s318 + $0x5b8] sm:$0xff] %v685
                %v687 = vld [vmem:[%s317 + $0xb80] sm:$0xff]
                %688 = vst [vmem:[%s318 + $0x5c0] sm:$0xff] %v687
                %v689 = vld [vmem:[%s317 + $0xb88] sm:$0xff]
                %690 = vst [vmem:[%s318 + $0x5c8] sm:$0xff] %v689
                %v691 = vld [vmem:[%s317 + $0xb90] sm:$0xff]
                %692 = vst [vmem:[%s318 + $0x5d0] sm:$0xff] %v691
                %v693 = vld [vmem:[%s317 + $0xb98] sm:$0xff]
                %694 = vst [vmem:[%s318 + $0x5d8] sm:$0xff] %v693
                %v695 = vld [vmem:[%s317 + $0xbc0] sm:$0xff]
                %696 = vst [vmem:[%s318 + $0x5e0] sm:$0xff] %v695
                %v697 = vld [vmem:[%s317 + $0xbc8] sm:$0xff]
                %698 = vst [vmem:[%s318 + $0x5e8] sm:$0xff] %v697
                %v699 = vld [vmem:[%s317 + $0xbd0] sm:$0xff]
                %700 = vst [vmem:[%s318 + $0x5f0] sm:$0xff] %v699
                %v701 = vld [vmem:[%s317 + $0xbd8] sm:$0xff]
                %702 = vst [vmem:[%s318 + $0x5f8] sm:$0xff] %v701
                %v703 = vld [vmem:[%s317 + $0xc00] sm:$0xff]
                %704 = vst [vmem:[%s318 + $0x600] sm:$0xff] %v703
                %v705 = vld [vmem:[%s317 + $0xc08] sm:$0xff]
                %706 = vst [vmem:[%s318 + $0x608] sm:$0xff] %v705
                %v707 = vld [vmem:[%s317 + $0xc10] sm:$0xff]
                %708 = vst [vmem:[%s318 + $0x610] sm:$0xff] %v707
                %v709 = vld [vmem:[%s317 + $0xc18] sm:$0xff]
                %710 = vst [vmem:[%s318 + $0x618] sm:$0xff] %v709
                %v711 = vld [vmem:[%s317 + $0xc40] sm:$0xff]
                %712 = vst [vmem:[%s318 + $0x620] sm:$0xff] %v711
                %v713 = vld [vmem:[%s317 + $0xc48] sm:$0xff]
                %714 = vst [vmem:[%s318 + $0x628] sm:$0xff] %v713
                %v715 = vld [vmem:[%s317 + $0xc50] sm:$0xff]
                %716 = vst [vmem:[%s318 + $0x630] sm:$0xff] %v715
                %v717 = vld [vmem:[%s317 + $0xc58] sm:$0xff]
                %718 = vst [vmem:[%s318 + $0x638] sm:$0xff] %v717
                %v719 = vld [vmem:[%s317 + $0xc80] sm:$0xff]
                %720 = vst [vmem:[%s318 + $0x640] sm:$0xff] %v719
                %v721 = vld [vmem:[%s317 + $0xc88] sm:$0xff]
                %722 = vst [vmem:[%s318 + $0x648] sm:$0xff] %v721
                %v723 = vld [vmem:[%s317 + $0xc90] sm:$0xff]
                %724 = vst [vmem:[%s318 + $0x650] sm:$0xff] %v723
                %v725 = vld [vmem:[%s317 + $0xc98] sm:$0xff]
                %726 = vst [vmem:[%s318 + $0x658] sm:$0xff] %v725
                %v727 = vld [vmem:[%s317 + $0xcc0] sm:$0xff]
                %728 = vst [vmem:[%s318 + $0x660] sm:$0xff] %v727
                %v729 = vld [vmem:[%s317 + $0xcc8] sm:$0xff]
                %730 = vst [vmem:[%s318 + $0x668] sm:$0xff] %v729
                %v731 = vld [vmem:[%s317 + $0xcd0] sm:$0xff]
                %732 = vst [vmem:[%s318 + $0x670] sm:$0xff] %v731
                %v733 = vld [vmem:[%s317 + $0xcd8] sm:$0xff]
                %734 = vst [vmem:[%s318 + $0x678] sm:$0xff] %v733
                %v735 = vld [vmem:[%s317 + $0xd00] sm:$0xff]
                %736 = vst [vmem:[%s318 + $0x680] sm:$0xff] %v735
                %v737 = vld [vmem:[%s317 + $0xd08] sm:$0xff]
                %738 = vst [vmem:[%s318 + $0x688] sm:$0xff] %v737
                %v739 = vld [vmem:[%s317 + $0xd10] sm:$0xff]
                %740 = vst [vmem:[%s318 + $0x690] sm:$0xff] %v739
                %v741 = vld [vmem:[%s317 + $0xd18] sm:$0xff]
                %742 = vst [vmem:[%s318 + $0x698] sm:$0xff] %v741
                %v743 = vld [vmem:[%s317 + $0xd40] sm:$0xff]
                %744 = vst [vmem:[%s318 + $0x6a0] sm:$0xff] %v743
                %v745 = vld [vmem:[%s317 + $0xd48] sm:$0xff]
                %746 = vst [vmem:[%s318 + $0x6a8] sm:$0xff] %v745
                %v747 = vld [vmem:[%s317 + $0xd50] sm:$0xff]
                %748 = vst [vmem:[%s318 + $0x6b0] sm:$0xff] %v747
                %v749 = vld [vmem:[%s317 + $0xd58] sm:$0xff]
                %750 = vst [vmem:[%s318 + $0x6b8] sm:$0xff] %v749
                %v751 = vld [vmem:[%s317 + $0xd80] sm:$0xff]
                %752 = vst [vmem:[%s318 + $0x6c0] sm:$0xff] %v751
                %v753 = vld [vmem:[%s317 + $0xd88] sm:$0xff]
                %754 = vst [vmem:[%s318 + $0x6c8] sm:$0xff] %v753
                %v755 = vld [vmem:[%s317 + $0xd90] sm:$0xff]
                %756 = vst [vmem:[%s318 + $0x6d0] sm:$0xff] %v755
                %v757 = vld [vmem:[%s317 + $0xd98] sm:$0xff]
                %758 = vst [vmem:[%s318 + $0x6d8] sm:$0xff] %v757
                %v759 = vld [vmem:[%s317 + $0xdc0] sm:$0xff]
                %760 = vst [vmem:[%s318 + $0x6e0] sm:$0xff] %v759
                %v761 = vld [vmem:[%s317 + $0xdc8] sm:$0xff]
                %762 = vst [vmem:[%s318 + $0x6e8] sm:$0xff] %v761
                %v763 = vld [vmem:[%s317 + $0xdd0] sm:$0xff]
                %764 = vst [vmem:[%s318 + $0x6f0] sm:$0xff] %v763
                %v765 = vld [vmem:[%s317 + $0xdd8] sm:$0xff]
                %766 = vst [vmem:[%s318 + $0x6f8] sm:$0xff] %v765
                %v767 = vld [vmem:[%s317 + $0xe00] sm:$0xff]
                %768 = vst [vmem:[%s318 + $0x700] sm:$0xff] %v767
                %v769 = vld [vmem:[%s317 + $0xe08] sm:$0xff]
                %770 = vst [vmem:[%s318 + $0x708] sm:$0xff] %v769
                %v771 = vld [vmem:[%s317 + $0xe10] sm:$0xff]
                %772 = vst [vmem:[%s318 + $0x710] sm:$0xff] %v771
                %v773 = vld [vmem:[%s317 + $0xe18] sm:$0xff]
                %774 = vst [vmem:[%s318 + $0x718] sm:$0xff] %v773
                %v775 = vld [vmem:[%s317 + $0xe40] sm:$0xff]
                %776 = vst [vmem:[%s318 + $0x720] sm:$0xff] %v775
                %v777 = vld [vmem:[%s317 + $0xe48] sm:$0xff]
                %778 = vst [vmem:[%s318 + $0x728] sm:$0xff] %v777
                %v779 = vld [vmem:[%s317 + $0xe50] sm:$0xff]
                %780 = vst [vmem:[%s318 + $0x730] sm:$0xff] %v779
                %v781 = vld [vmem:[%s317 + $0xe58] sm:$0xff]
                %782 = vst [vmem:[%s318 + $0x738] sm:$0xff] %v781
                %v783 = vld [vmem:[%s317 + $0xe80] sm:$0xff]
                %784 = vst [vmem:[%s318 + $0x740] sm:$0xff] %v783
                %v785 = vld [vmem:[%s317 + $0xe88] sm:$0xff]
                %786 = vst [vmem:[%s318 + $0x748] sm:$0xff] %v785
                %v787 = vld [vmem:[%s317 + $0xe90] sm:$0xff]
                %788 = vst [vmem:[%s318 + $0x750] sm:$0xff] %v787
                %v789 = vld [vmem:[%s317 + $0xe98] sm:$0xff]
                %790 = vst [vmem:[%s318 + $0x758] sm:$0xff] %v789
                %v791 = vld [vmem:[%s317 + $0xec0] sm:$0xff]
                %792 = vst [vmem:[%s318 + $0x760] sm:$0xff] %v791
                %v793 = vld [vmem:[%s317 + $0xec8] sm:$0xff]
                %794 = vst [vmem:[%s318 + $0x768] sm:$0xff] %v793
                %v795 = vld [vmem:[%s317 + $0xed0] sm:$0xff]
                %796 = vst [vmem:[%s318 + $0x770] sm:$0xff] %v795
                %v797 = vld [vmem:[%s317 + $0xed8] sm:$0xff]
                %798 = vst [vmem:[%s318 + $0x778] sm:$0xff] %v797
                %v799 = vld [vmem:[%s317 + $0xf00] sm:$0xff]
                %800 = vst [vmem:[%s318 + $0x780] sm:$0xff] %v799
                %v801 = vld [vmem:[%s317 + $0xf08] sm:$0xff]
                %802 = vst [vmem:[%s318 + $0x788] sm:$0xff] %v801
                %v803 = vld [vmem:[%s317 + $0xf10] sm:$0xff]
                %804 = vst [vmem:[%s318 + $0x790] sm:$0xff] %v803
                %v805 = vld [vmem:[%s317 + $0xf18] sm:$0xff]
                %806 = vst [vmem:[%s318 + $0x798] sm:$0xff] %v805
                %v807 = vld [vmem:[%s317 + $0xf40] sm:$0xff]
                %808 = vst [vmem:[%s318 + $0x7a0] sm:$0xff] %v807
                %v809 = vld [vmem:[%s317 + $0xf48] sm:$0xff]
                %810 = vst [vmem:[%s318 + $0x7a8] sm:$0xff] %v809
                %v811 = vld [vmem:[%s317 + $0xf50] sm:$0xff]
                %812 = vst [vmem:[%s318 + $0x7b0] sm:$0xff] %v811
                %v813 = vld [vmem:[%s317 + $0xf58] sm:$0xff]
                %814 = vst [vmem:[%s318 + $0x7b8] sm:$0xff] %v813
                %v815 = vld [vmem:[%s317 + $0xf80] sm:$0xff]
                %816 = vst [vmem:[%s318 + $0x7c0] sm:$0xff] %v815
                %v817 = vld [vmem:[%s317 + $0xf88] sm:$0xff]
                %818 = vst [vmem:[%s318 + $0x7c8] sm:$0xff] %v817
                %v819 = vld [vmem:[%s317 + $0xf90] sm:$0xff]
                %820 = vst [vmem:[%s318 + $0x7d0] sm:$0xff] %v819
                %v821 = vld [vmem:[%s317 + $0xf98] sm:$0xff]
                %822 = vst [vmem:[%s318 + $0x7d8] sm:$0xff] %v821
                %v823 = vld [vmem:[%s317 + $0xfc0] sm:$0xff]
                %824 = vst [vmem:[%s318 + $0x7e0] sm:$0xff] %v823
                %v825 = vld [vmem:[%s317 + $0xfc8] sm:$0xff]
                %826 = vst [vmem:[%s318 + $0x7e8] sm:$0xff] %v825
                %v827 = vld [vmem:[%s317 + $0xfd0] sm:$0xff]
                %828 = vst [vmem:[%s318 + $0x7f0] sm:$0xff] %v827
                %v829 = vld [vmem:[%s317 + $0xfd8] sm:$0xff]
                %830 = vst [vmem:[%s318 + $0x7f8] sm:$0xff] %v829
                %v831 = vld [vmem:[%s317 + $0x1000] sm:$0xff]
                %832 = vst [vmem:[%s318 + $0x800] sm:$0xff] %v831
                %v833 = vld [vmem:[%s317 + $0x1008] sm:$0xff]
                %834 = vst [vmem:[%s318 + $0x808] sm:$0xff] %v833
                %v835 = vld [vmem:[%s317 + $0x1010] sm:$0xff]
                %836 = vst [vmem:[%s318 + $0x810] sm:$0xff] %v835
                %v837 = vld [vmem:[%s317 + $0x1018] sm:$0xff]
                %838 = vst [vmem:[%s318 + $0x818] sm:$0xff] %v837
                %v839 = vld [vmem:[%s317 + $0x1040] sm:$0xff]
                %840 = vst [vmem:[%s318 + $0x820] sm:$0xff] %v839
                %v841 = vld [vmem:[%s317 + $0x1048] sm:$0xff]
                %842 = vst [vmem:[%s318 + $0x828] sm:$0xff] %v841
                %v843 = vld [vmem:[%s317 + $0x1050] sm:$0xff]
                %844 = vst [vmem:[%s318 + $0x830] sm:$0xff] %v843
                %v845 = vld [vmem:[%s317 + $0x1058] sm:$0xff]
                %846 = vst [vmem:[%s318 + $0x838] sm:$0xff] %v845
                %v847 = vld [vmem:[%s317 + $0x1080] sm:$0xff]
                %848 = vst [vmem:[%s318 + $0x840] sm:$0xff] %v847
                %v849 = vld [vmem:[%s317 + $0x1088] sm:$0xff]
                %850 = vst [vmem:[%s318 + $0x848] sm:$0xff] %v849
                %v851 = vld [vmem:[%s317 + $0x1090] sm:$0xff]
                %852 = vst [vmem:[%s318 + $0x850] sm:$0xff] %v851
                %v853 = vld [vmem:[%s317 + $0x1098] sm:$0xff]
                %854 = vst [vmem:[%s318 + $0x858] sm:$0xff] %v853
                %v855 = vld [vmem:[%s317 + $0x10c0] sm:$0xff]
                %856 = vst [vmem:[%s318 + $0x860] sm:$0xff] %v855
                %v857 = vld [vmem:[%s317 + $0x10c8] sm:$0xff]
                %858 = vst [vmem:[%s318 + $0x868] sm:$0xff] %v857
                %v859 = vld [vmem:[%s317 + $0x10d0] sm:$0xff]
                %860 = vst [vmem:[%s318 + $0x870] sm:$0xff] %v859
                %v861 = vld [vmem:[%s317 + $0x10d8] sm:$0xff]
                %862 = vst [vmem:[%s318 + $0x878] sm:$0xff] %v861
                %v863 = vld [vmem:[%s317 + $0x1100] sm:$0xff]
                %864 = vst [vmem:[%s318 + $0x880] sm:$0xff] %v863
                %v865 = vld [vmem:[%s317 + $0x1108] sm:$0xff]
                %866 = vst [vmem:[%s318 + $0x888] sm:$0xff] %v865
                %v867 = vld [vmem:[%s317 + $0x1110] sm:$0xff]
                %868 = vst [vmem:[%s318 + $0x890] sm:$0xff] %v867
                %v869 = vld [vmem:[%s317 + $0x1118] sm:$0xff]
                %870 = vst [vmem:[%s318 + $0x898] sm:$0xff] %v869
                %v871 = vld [vmem:[%s317 + $0x1140] sm:$0xff]
                %872 = vst [vmem:[%s318 + $0x8a0] sm:$0xff] %v871
                %v873 = vld [vmem:[%s317 + $0x1148] sm:$0xff]
                %874 = vst [vmem:[%s318 + $0x8a8] sm:$0xff] %v873
                %v875 = vld [vmem:[%s317 + $0x1150] sm:$0xff]
                %876 = vst [vmem:[%s318 + $0x8b0] sm:$0xff] %v875
                %v877 = vld [vmem:[%s317 + $0x1158] sm:$0xff]
                %878 = vst [vmem:[%s318 + $0x8b8] sm:$0xff] %v877
                %v879 = vld [vmem:[%s317 + $0x1180] sm:$0xff]
                %880 = vst [vmem:[%s318 + $0x8c0] sm:$0xff] %v879
                %v881 = vld [vmem:[%s317 + $0x1188] sm:$0xff]
                %882 = vst [vmem:[%s318 + $0x8c8] sm:$0xff] %v881
                %v883 = vld [vmem:[%s317 + $0x1190] sm:$0xff]
                %884 = vst [vmem:[%s318 + $0x8d0] sm:$0xff] %v883
                %v885 = vld [vmem:[%s317 + $0x1198] sm:$0xff]
                %886 = vst [vmem:[%s318 + $0x8d8] sm:$0xff] %v885
                %v887 = vld [vmem:[%s317 + $0x11c0] sm:$0xff]
                %888 = vst [vmem:[%s318 + $0x8e0] sm:$0xff] %v887
                %v889 = vld [vmem:[%s317 + $0x11c8] sm:$0xff]
                %890 = vst [vmem:[%s318 + $0x8e8] sm:$0xff] %v889
                %v891 = vld [vmem:[%s317 + $0x11d0] sm:$0xff]
                %892 = vst [vmem:[%s318 + $0x8f0] sm:$0xff] %v891
                %v893 = vld [vmem:[%s317 + $0x11d8] sm:$0xff]
                %894 = vst [vmem:[%s318 + $0x8f8] sm:$0xff] %v893
                %v895 = vld [vmem:[%s317 + $0x1200] sm:$0xff]
                %896 = vst [vmem:[%s318 + $0x900] sm:$0xff] %v895
                %v897 = vld [vmem:[%s317 + $0x1208] sm:$0xff]
                %898 = vst [vmem:[%s318 + $0x908] sm:$0xff] %v897
                %v899 = vld [vmem:[%s317 + $0x1210] sm:$0xff]
                %900 = vst [vmem:[%s318 + $0x910] sm:$0xff] %v899
                %v901 = vld [vmem:[%s317 + $0x1218] sm:$0xff]
                %902 = vst [vmem:[%s318 + $0x918] sm:$0xff] %v901
                %v903 = vld [vmem:[%s317 + $0x1240] sm:$0xff]
                %904 = vst [vmem:[%s318 + $0x920] sm:$0xff] %v903
                %v905 = vld [vmem:[%s317 + $0x1248] sm:$0xff]
                %906 = vst [vmem:[%s318 + $0x928] sm:$0xff] %v905
                %v907 = vld [vmem:[%s317 + $0x1250] sm:$0xff]
                %908 = vst [vmem:[%s318 + $0x930] sm:$0xff] %v907
                %v909 = vld [vmem:[%s317 + $0x1258] sm:$0xff]
                %910 = vst [vmem:[%s318 + $0x938] sm:$0xff] %v909
                %v911 = vld [vmem:[%s317 + $0x1280] sm:$0xff]
                %912 = vst [vmem:[%s318 + $0x940] sm:$0xff] %v911
                %v913 = vld [vmem:[%s317 + $0x1288] sm:$0xff]
                %914 = vst [vmem:[%s318 + $0x948] sm:$0xff] %v913
                %v915 = vld [vmem:[%s317 + $0x1290] sm:$0xff]
                %916 = vst [vmem:[%s318 + $0x950] sm:$0xff] %v915
                %v917 = vld [vmem:[%s317 + $0x1298] sm:$0xff]
                %918 = vst [vmem:[%s318 + $0x958] sm:$0xff] %v917
                %v919 = vld [vmem:[%s317 + $0x12c0] sm:$0xff]
                %920 = vst [vmem:[%s318 + $0x960] sm:$0xff] %v919
                %v921 = vld [vmem:[%s317 + $0x12c8] sm:$0xff]
                %922 = vst [vmem:[%s318 + $0x968] sm:$0xff] %v921
                %v923 = vld [vmem:[%s317 + $0x12d0] sm:$0xff]
                %924 = vst [vmem:[%s318 + $0x970] sm:$0xff] %v923
                %v925 = vld [vmem:[%s317 + $0x12d8] sm:$0xff]
                %926 = vst [vmem:[%s318 + $0x978] sm:$0xff] %v925
                %v927 = vld [vmem:[%s317 + $0x1300] sm:$0xff]
                %928 = vst [vmem:[%s318 + $0x980] sm:$0xff] %v927
                %v929 = vld [vmem:[%s317 + $0x1308] sm:$0xff]
                %930 = vst [vmem:[%s318 + $0x988] sm:$0xff] %v929
                %v931 = vld [vmem:[%s317 + $0x1310] sm:$0xff]
                %932 = vst [vmem:[%s318 + $0x990] sm:$0xff] %v931
                %v933 = vld [vmem:[%s317 + $0x1318] sm:$0xff]
                %934 = vst [vmem:[%s318 + $0x998] sm:$0xff] %v933
                %v935 = vld [vmem:[%s317 + $0x1340] sm:$0xff]
                %936 = vst [vmem:[%s318 + $0x9a0] sm:$0xff] %v935
                %v937 = vld [vmem:[%s317 + $0x1348] sm:$0xff]
                %938 = vst [vmem:[%s318 + $0x9a8] sm:$0xff] %v937
                %v939 = vld [vmem:[%s317 + $0x1350] sm:$0xff]
                %940 = vst [vmem:[%s318 + $0x9b0] sm:$0xff] %v939
                %v941 = vld [vmem:[%s317 + $0x1358] sm:$0xff]
                %942 = vst [vmem:[%s318 + $0x9b8] sm:$0xff] %v941
                %v943 = vld [vmem:[%s317 + $0x1380] sm:$0xff]
                %944 = vst [vmem:[%s318 + $0x9c0] sm:$0xff] %v943
                %v945 = vld [vmem:[%s317 + $0x1388] sm:$0xff]
                %946 = vst [vmem:[%s318 + $0x9c8] sm:$0xff] %v945
                %v947 = vld [vmem:[%s317 + $0x1390] sm:$0xff]
                %948 = vst [vmem:[%s318 + $0x9d0] sm:$0xff] %v947
                %v949 = vld [vmem:[%s317 + $0x1398] sm:$0xff]
                %950 = vst [vmem:[%s318 + $0x9d8] sm:$0xff] %v949
                %v951 = vld [vmem:[%s317 + $0x13c0] sm:$0xff]
                %952 = vst [vmem:[%s318 + $0x9e0] sm:$0xff] %v951
                %v953 = vld [vmem:[%s317 + $0x13c8] sm:$0xff]
                %954 = vst [vmem:[%s318 + $0x9e8] sm:$0xff] %v953
                %v955 = vld [vmem:[%s317 + $0x13d0] sm:$0xff]
                %956 = vst [vmem:[%s318 + $0x9f0] sm:$0xff] %v955
                %v957 = vld [vmem:[%s317 + $0x13d8] sm:$0xff]
                %958 = vst [vmem:[%s318 + $0x9f8] sm:$0xff] %v957
              $region71: #{igala_forward.7} parent=65 // loop_footer
                %s316 = sadd.s32 1, %s312
              $region72: #{igala_forward.7} parent=65 // loop_footer_branch
                %311 = sbr.rel target = $region68
              $region73: #{igala_forward.7} parent=65 // loop_exit
                _
            $region66: #{igala_forward.7} parent=61 // pred_fallthru
              _
            // Predicated region
            $region74: #{igala_forward.7} parent=61 // pred_check
              _
            $region75: #{igala_forward.7} parent=61 // pred_check_branch
              %960 = sbr.rel target = $region77
            $region76: #{igala_forward.7} parent=61 // pred_region
              _
            $region77: #{igala_forward.7} parent=61 // pred_fallthru
              _
          $region62: #{igala_forward.7} parent=57 // pred_fallthru
            _
          %961 = vnop
        $region58: #{igala_forward.7} parent=15 // pred_fallthru
          _
      $region16: #{igala_forward.7} parent=5 // pred_fallthru
        _
      %p962 = scmp.le.s32.totalorder 1, %s8
      %p963 = scmp.lt.s32.totalorder %s8, 31
      %p964 = pnand %p962, %p963
      %p965 = pneg %p964
      // Predicated region
      $region78: #{igala_forward.7} parent=5 // pred_check
        _
      $region79: #{igala_forward.7} parent=5 // pred_check_branch
        %967 = sbr.rel (%p964) target = $region81
      $region80: #{igala_forward.7} parent=5 // pred_region
        %s968 = ssub.s32 %s8, 1
        %s969 = sand.u32 %s42, 1
        %s970 = sand.u32 %s42, 1
        %s971 = smul.addr %s970, 256
        %s972 = scalar_lea.vmem [#allocation3], %s971
        // Predicated region
        $region82: #{igala_forward.7} parent=80 // pred_check
          %p973 = pneg %p55
        $region83: #{igala_forward.7} parent=80 // pred_check_branch
          %975 = sbr.rel (%p973) target = $region85
        $region84: #{igala_forward.7} parent=80 // pred_region
          _
        $region85: #{igala_forward.7} parent=80 // pred_fallthru
          _
        %s976 = sand.u32 %s68, 1
        %s977 = sand.u32 %s68, 1
        %s978 = smul.addr %s977, 2560
        %s979 = scalar_lea.vmem [#allocation4], %s978
        // Predicated region
        $region86: #{igala_forward.7} parent=80 // pred_check
          %p980 = pneg %p81
        $region87: #{igala_forward.7} parent=80 // pred_check_branch
          %982 = sbr.rel (%p980) target = $region89
        $region88: #{igala_forward.7} parent=80 // pred_region
          _
        $region89: #{igala_forward.7} parent=80 // pred_fallthru
          _
        %s983 = sand.u32 %s42, 1
        %s984 = sand.u32 %s42, 1
        %s985 = smul.addr %s984, 256
        %s986 = scalar_lea.vmem [#allocation3], %s985
        %p987 = pneg %p55
        %p988 = pneg %p52
        %s989 = sand.u32 %s68, 1
        %s990 = sand.u32 %s68, 1
        %s991 = smul.addr %s990, 2560
        %s992 = scalar_lea.vmem [#allocation4], %s991
        %p993 = pneg %p81
        %p994 = pneg %p78
        %p995 = pneg %p109
        %p996 = pneg %p106
        %s997 = sand.u32 %s96, 1
        %s998 = sand.u32 %s96, 1
        %s999 = smul.addr %s998, 1024
        %s1000 = scalar_lea.vmem [#allocation5], %s999
        %s1001 = smul.u32 32, %s18
        %s1002 = smul.u32 4, %s19
        %s1003 = smul.u32 32, %s18
        %s1004 = smul.u32 4, %s19
        %p1005 = scmp.eq.s32.totalorder %s20, 0
        // Predicated region
        $region90: #{igala_forward.7} parent=80 // pred_check
          %p1006 = pneg %p1005
        $region91: #{igala_forward.7} parent=80 // pred_check_branch
          %1008 = sbr.rel (%p1006) target = $region93
        $region92: #{igala_forward.7} parent=80 // pred_region
          %1009 = vst [vmem:[#allocation2] sm:$0xff] 0.0
          %1010 = vst [vmem:[#allocation2 + $0x8] sm:$0xff] 0.0
          %1011 = vst [vmem:[#allocation2 + $0x10] sm:$0xff] 0.0
          %1012 = vst [vmem:[#allocation2 + $0x18] sm:$0xff] 0.0
          %1013 = vst [vmem:[#allocation2 + $0x20] sm:$0xff] 0.0
          %1014 = vst [vmem:[#allocation2 + $0x28] sm:$0xff] 0.0
          %1015 = vst [vmem:[#allocation2 + $0x30] sm:$0xff] 0.0
          %1016 = vst [vmem:[#allocation2 + $0x38] sm:$0xff] 0.0
          %1017 = vst [vmem:[#allocation2 + $0x40] sm:$0xff] 0.0
          %1018 = vst [vmem:[#allocation2 + $0x48] sm:$0xff] 0.0
          %1019 = vst [vmem:[#allocation2 + $0x50] sm:$0xff] 0.0
          %1020 = vst [vmem:[#allocation2 + $0x58] sm:$0xff] 0.0
          %1021 = vst [vmem:[#allocation2 + $0x60] sm:$0xff] 0.0
          %1022 = vst [vmem:[#allocation2 + $0x68] sm:$0xff] 0.0
          %1023 = vst [vmem:[#allocation2 + $0x70] sm:$0xff] 0.0
          %1024 = vst [vmem:[#allocation2 + $0x78] sm:$0xff] 0.0
          %1025 = vst [vmem:[#allocation2 + $0x80] sm:$0xff] 0.0
          %1026 = vst [vmem:[#allocation2 + $0x88] sm:$0xff] 0.0
          %1027 = vst [vmem:[#allocation2 + $0x90] sm:$0xff] 0.0
          %1028 = vst [vmem:[#allocation2 + $0x98] sm:$0xff] 0.0
          %1029 = vst [vmem:[#allocation2 + $0xa0] sm:$0xff] 0.0
          %1030 = vst [vmem:[#allocation2 + $0xa8] sm:$0xff] 0.0
          %1031 = vst [vmem:[#allocation2 + $0xb0] sm:$0xff] 0.0
          %1032 = vst [vmem:[#allocation2 + $0xb8] sm:$0xff] 0.0
          %1033 = vst [vmem:[#allocation2 + $0xc0] sm:$0xff] 0.0
          %1034 = vst [vmem:[#allocation2 + $0xc8] sm:$0xff] 0.0
          %1035 = vst [vmem:[#allocation2 + $0xd0] sm:$0xff] 0.0
          %1036 = vst [vmem:[#allocation2 + $0xd8] sm:$0xff] 0.0
          %1037 = vst [vmem:[#allocation2 + $0xe0] sm:$0xff] 0.0
          %1038 = vst [vmem:[#allocation2 + $0xe8] sm:$0xff] 0.0
          %1039 = vst [vmem:[#allocation2 + $0xf0] sm:$0xff] 0.0
          %1040 = vst [vmem:[#allocation2 + $0xf8] sm:$0xff] 0.0
          %1041 = vst [vmem:[#allocation2 + $0x100] sm:$0xff] 0.0
          %1042 = vst [vmem:[#allocation2 + $0x108] sm:$0xff] 0.0
          %1043 = vst [vmem:[#allocation2 + $0x110] sm:$0xff] 0.0
          %1044 = vst [vmem:[#allocation2 + $0x118] sm:$0xff] 0.0
          %1045 = vst [vmem:[#allocation2 + $0x120] sm:$0xff] 0.0
          %1046 = vst [vmem:[#allocation2 + $0x128] sm:$0xff] 0.0
          %1047 = vst [vmem:[#allocation2 + $0x130] sm:$0xff] 0.0
          %1048 = vst [vmem:[#allocation2 + $0x138] sm:$0xff] 0.0
          %1049 = vst [vmem:[#allocation2 + $0x140] sm:$0xff] 0.0
          %1050 = vst [vmem:[#allocation2 + $0x148] sm:$0xff] 0.0
          %1051 = vst [vmem:[#allocation2 + $0x150] sm:$0xff] 0.0
          %1052 = vst [vmem:[#allocation2 + $0x158] sm:$0xff] 0.0
          %1053 = vst [vmem:[#allocation2 + $0x160] sm:$0xff] 0.0
          %1054 = vst [vmem:[#allocation2 + $0x168] sm:$0xff] 0.0
          %1055 = vst [vmem:[#allocation2 + $0x170] sm:$0xff] 0.0
          %1056 = vst [vmem:[#allocation2 + $0x178] sm:$0xff] 0.0
          %1057 = vst [vmem:[#allocation2 + $0x180] sm:$0xff] 0.0
          %1058 = vst [vmem:[#allocation2 + $0x188] sm:$0xff] 0.0
          %1059 = vst [vmem:[#allocation2 + $0x190] sm:$0xff] 0.0
          %1060 = vst [vmem:[#allocation2 + $0x198] sm:$0xff] 0.0
          %1061 = vst [vmem:[#allocation2 + $0x1a0] sm:$0xff] 0.0
          %1062 = vst [vmem:[#allocation2 + $0x1a8] sm:$0xff] 0.0
          %1063 = vst [vmem:[#allocation2 + $0x1b0] sm:$0xff] 0.0
          %1064 = vst [vmem:[#allocation2 + $0x1b8] sm:$0xff] 0.0
          %1065 = vst [vmem:[#allocation2 + $0x1c0] sm:$0xff] 0.0
          %1066 = vst [vmem:[#allocation2 + $0x1c8] sm:$0xff] 0.0
          %1067 = vst [vmem:[#allocation2 + $0x1d0] sm:$0xff] 0.0
          %1068 = vst [vmem:[#allocation2 + $0x1d8] sm:$0xff] 0.0
          %1069 = vst [vmem:[#allocation2 + $0x1e0] sm:$0xff] 0.0
          %1070 = vst [vmem:[#allocation2 + $0x1e8] sm:$0xff] 0.0
          %1071 = vst [vmem:[#allocation2 + $0x1f0] sm:$0xff] 0.0
          %1072 = vst [vmem:[#allocation2 + $0x1f8] sm:$0xff] 0.0
          %1073 = vst [vmem:[#allocation2 + $0x200] sm:$0xff] 0.0
          %1074 = vst [vmem:[#allocation2 + $0x208] sm:$0xff] 0.0
          %1075 = vst [vmem:[#allocation2 + $0x210] sm:$0xff] 0.0
          %1076 = vst [vmem:[#allocation2 + $0x218] sm:$0xff] 0.0
          %1077 = vst [vmem:[#allocation2 + $0x220] sm:$0xff] 0.0
          %1078 = vst [vmem:[#allocation2 + $0x228] sm:$0xff] 0.0
          %1079 = vst [vmem:[#allocation2 + $0x230] sm:$0xff] 0.0
          %1080 = vst [vmem:[#allocation2 + $0x238] sm:$0xff] 0.0
          %1081 = vst [vmem:[#allocation2 + $0x240] sm:$0xff] 0.0
          %1082 = vst [vmem:[#allocation2 + $0x248] sm:$0xff] 0.0
          %1083 = vst [vmem:[#allocation2 + $0x250] sm:$0xff] 0.0
          %1084 = vst [vmem:[#allocation2 + $0x258] sm:$0xff] 0.0
          %1085 = vst [vmem:[#allocation2 + $0x260] sm:$0xff] 0.0
          %1086 = vst [vmem:[#allocation2 + $0x268] sm:$0xff] 0.0
          %1087 = vst [vmem:[#allocation2 + $0x270] sm:$0xff] 0.0
          %1088 = vst [vmem:[#allocation2 + $0x278] sm:$0xff] 0.0
          %1089 = vst [vmem:[#allocation2 + $0x280] sm:$0xff] 0.0
          %1090 = vst [vmem:[#allocation2 + $0x288] sm:$0xff] 0.0
          %1091 = vst [vmem:[#allocation2 + $0x290] sm:$0xff] 0.0
          %1092 = vst [vmem:[#allocation2 + $0x298] sm:$0xff] 0.0
          %1093 = vst [vmem:[#allocation2 + $0x2a0] sm:$0xff] 0.0
          %1094 = vst [vmem:[#allocation2 + $0x2a8] sm:$0xff] 0.0
          %1095 = vst [vmem:[#allocation2 + $0x2b0] sm:$0xff] 0.0
          %1096 = vst [vmem:[#allocation2 + $0x2b8] sm:$0xff] 0.0
          %1097 = vst [vmem:[#allocation2 + $0x2c0] sm:$0xff] 0.0
          %1098 = vst [vmem:[#allocation2 + $0x2c8] sm:$0xff] 0.0
          %1099 = vst [vmem:[#allocation2 + $0x2d0] sm:$0xff] 0.0
          %1100 = vst [vmem:[#allocation2 + $0x2d8] sm:$0xff] 0.0
          %1101 = vst [vmem:[#allocation2 + $0x2e0] sm:$0xff] 0.0
          %1102 = vst [vmem:[#allocation2 + $0x2e8] sm:$0xff] 0.0
          %1103 = vst [vmem:[#allocation2 + $0x2f0] sm:$0xff] 0.0
          %1104 = vst [vmem:[#allocation2 + $0x2f8] sm:$0xff] 0.0
          %1105 = vst [vmem:[#allocation2 + $0x300] sm:$0xff] 0.0
          %1106 = vst [vmem:[#allocation2 + $0x308] sm:$0xff] 0.0
          %1107 = vst [vmem:[#allocation2 + $0x310] sm:$0xff] 0.0
          %1108 = vst [vmem:[#allocation2 + $0x318] sm:$0xff] 0.0
          %1109 = vst [vmem:[#allocation2 + $0x320] sm:$0xff] 0.0
          %1110 = vst [vmem:[#allocation2 + $0x328] sm:$0xff] 0.0
          %1111 = vst [vmem:[#allocation2 + $0x330] sm:$0xff] 0.0
          %1112 = vst [vmem:[#allocation2 + $0x338] sm:$0xff] 0.0
          %1113 = vst [vmem:[#allocation2 + $0x340] sm:$0xff] 0.0
          %1114 = vst [vmem:[#allocation2 + $0x348] sm:$0xff] 0.0
          %1115 = vst [vmem:[#allocation2 + $0x350] sm:$0xff] 0.0
          %1116 = vst [vmem:[#allocation2 + $0x358] sm:$0xff] 0.0
          %1117 = vst [vmem:[#allocation2 + $0x360] sm:$0xff] 0.0
          %1118 = vst [vmem:[#allocation2 + $0x368] sm:$0xff] 0.0
          %1119 = vst [vmem:[#allocation2 + $0x370] sm:$0xff] 0.0
          %1120 = vst [vmem:[#allocation2 + $0x378] sm:$0xff] 0.0
          %1121 = vst [vmem:[#allocation2 + $0x380] sm:$0xff] 0.0
          %1122 = vst [vmem:[#allocation2 + $0x388] sm:$0xff] 0.0
          %1123 = vst [vmem:[#allocation2 + $0x390] sm:$0xff] 0.0
          %1124 = vst [vmem:[#allocation2 + $0x398] sm:$0xff] 0.0
          %1125 = vst [vmem:[#allocation2 + $0x3a0] sm:$0xff] 0.0
          %1126 = vst [vmem:[#allocation2 + $0x3a8] sm:$0xff] 0.0
          %1127 = vst [vmem:[#allocation2 + $0x3b0] sm:$0xff] 0.0
          %1128 = vst [vmem:[#allocation2 + $0x3b8] sm:$0xff] 0.0
          %1129 = vst [vmem:[#allocation2 + $0x3c0] sm:$0xff] 0.0
          %1130 = vst [vmem:[#allocation2 + $0x3c8] sm:$0xff] 0.0
          %1131 = vst [vmem:[#allocation2 + $0x3d0] sm:$0xff] 0.0
          %1132 = vst [vmem:[#allocation2 + $0x3d8] sm:$0xff] 0.0
          %1133 = vst [vmem:[#allocation2 + $0x3e0] sm:$0xff] 0.0
          %1134 = vst [vmem:[#allocation2 + $0x3e8] sm:$0xff] 0.0
          %1135 = vst [vmem:[#allocation2 + $0x3f0] sm:$0xff] 0.0
          %1136 = vst [vmem:[#allocation2 + $0x3f8] sm:$0xff] 0.0
        $region93: #{igala_forward.7} parent=80 // pred_fallthru
          _
        %s1137 = smul.u32 %s20, 128
        %v1138 = vld [vmem:[#allocation2] sm:$0xff]
        %v1139 = vld [vmem:[#allocation2 + $0x8] sm:$0xff]
        %v1140 = vld [vmem:[#allocation2 + $0x10] sm:$0xff]
        %v1141 = vld [vmem:[#allocation2 + $0x18] sm:$0xff]
        %v1142 = vld [vmem:[#allocation2 + $0x20] sm:$0xff]
        %v1143 = vld [vmem:[#allocation2 + $0x28] sm:$0xff]
        %v1144 = vld [vmem:[#allocation2 + $0x30] sm:$0xff]
        %v1145 = vld [vmem:[#allocation2 + $0x38] sm:$0xff]
        %v1146 = vld [vmem:[#allocation2 + $0x40] sm:$0xff]
        %v1147 = vld [vmem:[#allocation2 + $0x48] sm:$0xff]
        %v1148 = vld [vmem:[#allocation2 + $0x50] sm:$0xff]
        %v1149 = vld [vmem:[#allocation2 + $0x58] sm:$0xff]
        %v1150 = vld [vmem:[#allocation2 + $0x60] sm:$0xff]
        %v1151 = vld [vmem:[#allocation2 + $0x68] sm:$0xff]
        %v1152 = vld [vmem:[#allocation2 + $0x70] sm:$0xff]
        %v1153 = vld [vmem:[#allocation2 + $0x78] sm:$0xff]
        %v1154 = vld [vmem:[#allocation2 + $0x80] sm:$0xff]
        %v1155 = vld [vmem:[#allocation2 + $0x88] sm:$0xff]
        %v1156 = vld [vmem:[#allocation2 + $0x90] sm:$0xff]
        %v1157 = vld [vmem:[#allocation2 + $0x98] sm:$0xff]
        %v1158 = vld [vmem:[#allocation2 + $0xa0] sm:$0xff]
        %v1159 = vld [vmem:[#allocation2 + $0xa8] sm:$0xff]
        %v1160 = vld [vmem:[#allocation2 + $0xb0] sm:$0xff]
        %v1161 = vld [vmem:[#allocation2 + $0xb8] sm:$0xff]
        %v1162 = vld [vmem:[#allocation2 + $0xc0] sm:$0xff]
        %v1163 = vld [vmem:[#allocation2 + $0xc8] sm:$0xff]
        %v1164 = vld [vmem:[#allocation2 + $0xd0] sm:$0xff]
        %v1165 = vld [vmem:[#allocation2 + $0xd8] sm:$0xff]
        %v1166 = vld [vmem:[#allocation2 + $0xe0] sm:$0xff]
        %v1167 = vld [vmem:[#allocation2 + $0xe8] sm:$0xff]
        %v1168 = vld [vmem:[#allocation2 + $0xf0] sm:$0xff]
        %v1169 = vld [vmem:[#allocation2 + $0xf8] sm:$0xff]
        %v1170 = vld [vmem:[#allocation2 + $0x100] sm:$0xff]
        %v1171 = vld [vmem:[#allocation2 + $0x108] sm:$0xff]
        %v1172 = vld [vmem:[#allocation2 + $0x110] sm:$0xff]
        %v1173 = vld [vmem:[#allocation2 + $0x118] sm:$0xff]
        %v1174 = vld [vmem:[#allocation2 + $0x120] sm:$0xff]
        %v1175 = vld [vmem:[#allocation2 + $0x128] sm:$0xff]
        %v1176 = vld [vmem:[#allocation2 + $0x130] sm:$0xff]
        %v1177 = vld [vmem:[#allocation2 + $0x138] sm:$0xff]
        %v1178 = vld [vmem:[#allocation2 + $0x140] sm:$0xff]
        %v1179 = vld [vmem:[#allocation2 + $0x148] sm:$0xff]
        %v1180 = vld [vmem:[#allocation2 + $0x150] sm:$0xff]
        %v1181 = vld [vmem:[#allocation2 + $0x158] sm:$0xff]
        %v1182 = vld [vmem:[#allocation2 + $0x160] sm:$0xff]
        %v1183 = vld [vmem:[#allocation2 + $0x168] sm:$0xff]
        %v1184 = vld [vmem:[#allocation2 + $0x170] sm:$0xff]
        %v1185 = vld [vmem:[#allocation2 + $0x178] sm:$0xff]
        %v1186 = vld [vmem:[#allocation2 + $0x180] sm:$0xff]
        %v1187 = vld [vmem:[#allocation2 + $0x188] sm:$0xff]
        %v1188 = vld [vmem:[#allocation2 + $0x190] sm:$0xff]
        %v1189 = vld [vmem:[#allocation2 + $0x198] sm:$0xff]
        %v1190 = vld [vmem:[#allocation2 + $0x1a0] sm:$0xff]
        %v1191 = vld [vmem:[#allocation2 + $0x1a8] sm:$0xff]
        %v1192 = vld [vmem:[#allocation2 + $0x1b0] sm:$0xff]
        %v1193 = vld [vmem:[#allocation2 + $0x1b8] sm:$0xff]
        %v1194 = vld [vmem:[#allocation2 + $0x1c0] sm:$0xff]
        %v1195 = vld [vmem:[#allocation2 + $0x1c8] sm:$0xff]
        %v1196 = vld [vmem:[#allocation2 + $0x1d0] sm:$0xff]
        %v1197 = vld [vmem:[#allocation2 + $0x1d8] sm:$0xff]
        %v1198 = vld [vmem:[#allocation2 + $0x1e0] sm:$0xff]
        %v1199 = vld [vmem:[#allocation2 + $0x1e8] sm:$0xff]
        %v1200 = vld [vmem:[#allocation2 + $0x1f0] sm:$0xff]
        %v1201 = vld [vmem:[#allocation2 + $0x1f8] sm:$0xff]
        %v1202 = vld [vmem:[#allocation2 + $0x200] sm:$0xff]
        %v1203 = vld [vmem:[#allocation2 + $0x208] sm:$0xff]
        %v1204 = vld [vmem:[#allocation2 + $0x210] sm:$0xff]
        %v1205 = vld [vmem:[#allocation2 + $0x218] sm:$0xff]
        %v1206 = vld [vmem:[#allocation2 + $0x220] sm:$0xff]
        %v1207 = vld [vmem:[#allocation2 + $0x228] sm:$0xff]
        %v1208 = vld [vmem:[#allocation2 + $0x230] sm:$0xff]
        %v1209 = vld [vmem:[#allocation2 + $0x238] sm:$0xff]
        %v1210 = vld [vmem:[#allocation2 + $0x240] sm:$0xff]
        %v1211 = vld [vmem:[#allocation2 + $0x248] sm:$0xff]
        %v1212 = vld [vmem:[#allocation2 + $0x250] sm:$0xff]
        %v1213 = vld [vmem:[#allocation2 + $0x258] sm:$0xff]
        %v1214 = vld [vmem:[#allocation2 + $0x260] sm:$0xff]
        %v1215 = vld [vmem:[#allocation2 + $0x268] sm:$0xff]
        %v1216 = vld [vmem:[#allocation2 + $0x270] sm:$0xff]
        %v1217 = vld [vmem:[#allocation2 + $0x278] sm:$0xff]
        %v1218 = vld [vmem:[#allocation2 + $0x280] sm:$0xff]
        %v1219 = vld [vmem:[#allocation2 + $0x288] sm:$0xff]
        %v1220 = vld [vmem:[#allocation2 + $0x290] sm:$0xff]
        %v1221 = vld [vmem:[#allocation2 + $0x298] sm:$0xff]
        %v1222 = vld [vmem:[#allocation2 + $0x2a0] sm:$0xff]
        %v1223 = vld [vmem:[#allocation2 + $0x2a8] sm:$0xff]
        %v1224 = vld [vmem:[#allocation2 + $0x2b0] sm:$0xff]
        %v1225 = vld [vmem:[#allocation2 + $0x2b8] sm:$0xff]
        %v1226 = vld [vmem:[#allocation2 + $0x2c0] sm:$0xff]
        %v1227 = vld [vmem:[#allocation2 + $0x2c8] sm:$0xff]
        %v1228 = vld [vmem:[#allocation2 + $0x2d0] sm:$0xff]
        %v1229 = vld [vmem:[#allocation2 + $0x2d8] sm:$0xff]
        %v1230 = vld [vmem:[#allocation2 + $0x2e0] sm:$0xff]
        %v1231 = vld [vmem:[#allocation2 + $0x2e8] sm:$0xff]
        %v1232 = vld [vmem:[#allocation2 + $0x2f0] sm:$0xff]
        %v1233 = vld [vmem:[#allocation2 + $0x2f8] sm:$0xff]
        %v1234 = vld [vmem:[#allocation2 + $0x300] sm:$0xff]
        %v1235 = vld [vmem:[#allocation2 + $0x308] sm:$0xff]
        %v1236 = vld [vmem:[#allocation2 + $0x310] sm:$0xff]
        %v1237 = vld [vmem:[#allocation2 + $0x318] sm:$0xff]
        %v1238 = vld [vmem:[#allocation2 + $0x320] sm:$0xff]
        %v1239 = vld [vmem:[#allocation2 + $0x328] sm:$0xff]
        %v1240 = vld [vmem:[#allocation2 + $0x330] sm:$0xff]
        %v1241 = vld [vmem:[#allocation2 + $0x338] sm:$0xff]
        %v1242 = vld [vmem:[#allocation2 + $0x340] sm:$0xff]
        %v1243 = vld [vmem:[#allocation2 + $0x348] sm:$0xff]
        %v1244 = vld [vmem:[#allocation2 + $0x350] sm:$0xff]
        %v1245 = vld [vmem:[#allocation2 + $0x358] sm:$0xff]
        %v1246 = vld [vmem:[#allocation2 + $0x360] sm:$0xff]
        %v1247 = vld [vmem:[#allocation2 + $0x368] sm:$0xff]
        %v1248 = vld [vmem:[#allocation2 + $0x370] sm:$0xff]
        %v1249 = vld [vmem:[#allocation2 + $0x378] sm:$0xff]
        %v1250 = vld [vmem:[#allocation2 + $0x380] sm:$0xff]
        %v1251 = vld [vmem:[#allocation2 + $0x388] sm:$0xff]
        %v1252 = vld [vmem:[#allocation2 + $0x390] sm:$0xff]
        %v1253 = vld [vmem:[#allocation2 + $0x398] sm:$0xff]
        %v1254 = vld [vmem:[#allocation2 + $0x3a0] sm:$0xff]
        %v1255 = vld [vmem:[#allocation2 + $0x3a8] sm:$0xff]
        %v1256 = vld [vmem:[#allocation2 + $0x3b0] sm:$0xff]
        %v1257 = vld [vmem:[#allocation2 + $0x3b8] sm:$0xff]
        %v1258 = vld [vmem:[#allocation2 + $0x3c0] sm:$0xff]
        %v1259 = vld [vmem:[#allocation2 + $0x3c8] sm:$0xff]
        %v1260 = vld [vmem:[#allocation2 + $0x3d0] sm:$0xff]
        %v1261 = vld [vmem:[#allocation2 + $0x3d8] sm:$0xff]
        %v1262 = vld [vmem:[#allocation2 + $0x3e0] sm:$0xff]
        %v1263 = vld [vmem:[#allocation2 + $0x3e8] sm:$0xff]
        %v1264 = vld [vmem:[#allocation2 + $0x3f0] sm:$0xff]
        %v1265 = vld [vmem:[#allocation2 + $0x3f8] sm:$0xff]
        %v1266 = vld [vmem:[%s972] sm:$0xff]
        %v1267 = vld [vmem:[%s972 + $0x8] sm:$0xff]
        %v1268 = vld [vmem:[%s972 + $0x10] sm:$0xff]
        %v1269 = vld [vmem:[%s972 + $0x18] sm:$0xff]
        %v1270 = vld [vmem:[%s972 + $0x20] sm:$0xff]
        %v1271 = vld [vmem:[%s972 + $0x28] sm:$0xff]
        %v1272 = vld [vmem:[%s972 + $0x30] sm:$0xff]
        %v1273 = vld [vmem:[%s972 + $0x38] sm:$0xff]
        %v1274 = vld [vmem:[%s972 + $0x40] sm:$0xff]
        %v1275 = vld [vmem:[%s972 + $0x48] sm:$0xff]
        %v1276 = vld [vmem:[%s972 + $0x50] sm:$0xff]
        %v1277 = vld [vmem:[%s972 + $0x58] sm:$0xff]
        %v1278 = vld [vmem:[%s972 + $0x60] sm:$0xff]
        %v1279 = vld [vmem:[%s972 + $0x68] sm:$0xff]
        %v1280 = vld [vmem:[%s972 + $0x70] sm:$0xff]
        %v1281 = vld [vmem:[%s972 + $0x78] sm:$0xff]
        %v1282 = vld [vmem:[%s972 + $0x80] sm:$0xff]
        %v1283 = vld [vmem:[%s972 + $0x88] sm:$0xff]
        %v1284 = vld [vmem:[%s972 + $0x90] sm:$0xff]
        %v1285 = vld [vmem:[%s972 + $0x98] sm:$0xff]
        %v1286 = vld [vmem:[%s972 + $0xa0] sm:$0xff]
        %v1287 = vld [vmem:[%s972 + $0xa8] sm:$0xff]
        %v1288 = vld [vmem:[%s972 + $0xb0] sm:$0xff]
        %v1289 = vld [vmem:[%s972 + $0xb8] sm:$0xff]
        %v1290 = vld [vmem:[%s972 + $0xc0] sm:$0xff]
        %v1291 = vld [vmem:[%s972 + $0xc8] sm:$0xff]
        %v1292 = vld [vmem:[%s972 + $0xd0] sm:$0xff]
        %v1293 = vld [vmem:[%s972 + $0xd8] sm:$0xff]
        %v1294 = vld [vmem:[%s972 + $0xe0] sm:$0xff]
        %v1295 = vld [vmem:[%s972 + $0xe8] sm:$0xff]
        %v1296 = vld [vmem:[%s972 + $0xf0] sm:$0xff]
        %v1297 = vld [vmem:[%s972 + $0xf8] sm:$0xff]
        %s1298 = sshra.s32 %s1137, 3
        %s1299 = sand.u32 %s1137, 7
        %s1300 = smul.u32 %s1298, 4
        %s1301 = smul.addr %s1300, 8
        %s1302 = scalar_lea.vmem %s979, %s1301 [#allocation4]
        %v1303 = vld [vmem:[%s1302] sm:$0xff]
        %v1304 = vld [vmem:[%s1302 + $0x8] sm:$0xff]
        %v1305 = vld [vmem:[%s1302 + $0x10] sm:$0xff]
        %v1306 = vld [vmem:[%s1302 + $0x18] sm:$0xff]
        %v1307 = vld [vmem:[%s1302 + $0x20] sm:$0xff]
        %v1308 = vld [vmem:[%s1302 + $0x28] sm:$0xff]
        %v1309 = vld [vmem:[%s1302 + $0x30] sm:$0xff]
        %v1310 = vld [vmem:[%s1302 + $0x38] sm:$0xff]
        %v1311 = vld [vmem:[%s1302 + $0x40] sm:$0xff]
        %v1312 = vld [vmem:[%s1302 + $0x48] sm:$0xff]
        %v1313 = vld [vmem:[%s1302 + $0x50] sm:$0xff]
        %v1314 = vld [vmem:[%s1302 + $0x58] sm:$0xff]
        %v1315 = vld [vmem:[%s1302 + $0x60] sm:$0xff]
        %v1316 = vld [vmem:[%s1302 + $0x68] sm:$0xff]
        %v1317 = vld [vmem:[%s1302 + $0x70] sm:$0xff]
        %v1318 = vld [vmem:[%s1302 + $0x78] sm:$0xff]
        %v1319 = vld [vmem:[%s1302 + $0x80] sm:$0xff]
        %v1320 = vld [vmem:[%s1302 + $0x88] sm:$0xff]
        %v1321 = vld [vmem:[%s1302 + $0x90] sm:$0xff]
        %v1322 = vld [vmem:[%s1302 + $0x98] sm:$0xff]
        %v1323 = vld [vmem:[%s1302 + $0xa0] sm:$0xff]
        %v1324 = vld [vmem:[%s1302 + $0xa8] sm:$0xff]
        %v1325 = vld [vmem:[%s1302 + $0xb0] sm:$0xff]
        %v1326 = vld [vmem:[%s1302 + $0xb8] sm:$0xff]
        %v1327 = vld [vmem:[%s1302 + $0xc0] sm:$0xff]
        %v1328 = vld [vmem:[%s1302 + $0xc8] sm:$0xff]
        %v1329 = vld [vmem:[%s1302 + $0xd0] sm:$0xff]
        %v1330 = vld [vmem:[%s1302 + $0xd8] sm:$0xff]
        %v1331 = vld [vmem:[%s1302 + $0xe0] sm:$0xff]
        %v1332 = vld [vmem:[%s1302 + $0xe8] sm:$0xff]
        %v1333 = vld [vmem:[%s1302 + $0xf0] sm:$0xff]
        %v1334 = vld [vmem:[%s1302 + $0xf8] sm:$0xff]
        %v1335 = vld [vmem:[%s1302 + $0x100] sm:$0xff]
        %v1336 = vld [vmem:[%s1302 + $0x108] sm:$0xff]
        %v1337 = vld [vmem:[%s1302 + $0x110] sm:$0xff]
        %v1338 = vld [vmem:[%s1302 + $0x118] sm:$0xff]
        %v1339 = vld [vmem:[%s1302 + $0x120] sm:$0xff]
        %v1340 = vld [vmem:[%s1302 + $0x128] sm:$0xff]
        %v1341 = vld [vmem:[%s1302 + $0x130] sm:$0xff]
        %v1342 = vld [vmem:[%s1302 + $0x138] sm:$0xff]
        %v1343 = vld [vmem:[%s1302 + $0x140] sm:$0xff]
        %v1344 = vld [vmem:[%s1302 + $0x148] sm:$0xff]
        %v1345 = vld [vmem:[%s1302 + $0x150] sm:$0xff]
        %v1346 = vld [vmem:[%s1302 + $0x158] sm:$0xff]
        %v1347 = vld [vmem:[%s1302 + $0x160] sm:$0xff]
        %v1348 = vld [vmem:[%s1302 + $0x168] sm:$0xff]
        %v1349 = vld [vmem:[%s1302 + $0x170] sm:$0xff]
        %v1350 = vld [vmem:[%s1302 + $0x178] sm:$0xff]
        %v1351 = vld [vmem:[%s1302 + $0x180] sm:$0xff]
        %v1352 = vld [vmem:[%s1302 + $0x188] sm:$0xff]
        %v1353 = vld [vmem:[%s1302 + $0x190] sm:$0xff]
        %v1354 = vld [vmem:[%s1302 + $0x198] sm:$0xff]
        %v1355 = vld [vmem:[%s1302 + $0x1a0] sm:$0xff]
        %v1356 = vld [vmem:[%s1302 + $0x1a8] sm:$0xff]
        %v1357 = vld [vmem:[%s1302 + $0x1b0] sm:$0xff]
        %v1358 = vld [vmem:[%s1302 + $0x1b8] sm:$0xff]
        %v1359 = vld [vmem:[%s1302 + $0x1c0] sm:$0xff]
        %v1360 = vld [vmem:[%s1302 + $0x1c8] sm:$0xff]
        %v1361 = vld [vmem:[%s1302 + $0x1d0] sm:$0xff]
        %v1362 = vld [vmem:[%s1302 + $0x1d8] sm:$0xff]
        %v1363 = vld [vmem:[%s1302 + $0x1e0] sm:$0xff]
        %v1364 = vld [vmem:[%s1302 + $0x1e8] sm:$0xff]
        %v1365 = vld [vmem:[%s1302 + $0x1f0] sm:$0xff]
        %v1366 = vld [vmem:[%s1302 + $0x1f8] sm:$0xff]
        %1367 = vmatprep.subr.mxu0 %v1364
        %1368 = vmatpush1.msra.mxu0 %v1363
        %1369 = vmatprep.subr.mxu0 %v1360
        %1370 = vmatpush1.msra.mxu0 %v1359
        %1371 = vmatprep.subr.mxu0 %v1356
        %1372 = vmatpush1.msra.mxu0 %v1355
        %1373 = vmatprep.subr.mxu0 %v1352
        %1374 = vmatpush1.msra.mxu0 %v1351
        %1375 = vmatprep.subr.mxu0 %v1348
        %1376 = vmatpush1.msra.mxu0 %v1347
        %1377 = vmatprep.subr.mxu0 %v1344
        %1378 = vmatpush1.msra.mxu0 %v1343
        %1379 = vmatprep.subr.mxu0 %v1340
        %1380 = vmatpush1.msra.mxu0 %v1339
        %1381 = vmatprep.subr.mxu0 %v1336
        %1382 = vmatpush1.msra.mxu0 %v1335
        %1383 = vmatprep.subr.mxu0 %v1332
        %1384 = vmatpush1.msra.mxu0 %v1331
        %1385 = vmatprep.subr.mxu0 %v1328
        %1386 = vmatpush1.msra.mxu0 %v1327
        %1387 = vmatprep.subr.mxu0 %v1324
        %1388 = vmatpush1.msra.mxu0 %v1323
        %1389 = vmatprep.subr.mxu0 %v1320
        %1390 = vmatpush1.msra.mxu0 %v1319
        %1391 = vmatprep.subr.mxu0 %v1316
        %1392 = vmatpush1.msra.mxu0 %v1315
        %1393 = vmatprep.subr.mxu0 %v1312
        %1394 = vmatpush1.msra.mxu0 %v1311
        %1395 = vmatprep.subr.mxu0 %v1308
        %1396 = vmatpush1.msra.mxu0 %v1307
        %1397 = vmatprep.subr.mxu0 %v1304
        %1398 = vmatpush1.msra.mxu0 %v1303
        %1399 = vmatprep.subr.mxu0 0.0
        %1400 = vmatpush2.msra.mxu0 0.0
        %1401 = vmatprep.subr.mxu0 0.0
        %1402 = vmatpush2.msra.mxu0 0.0
        %1403 = vmatprep.subr.mxu0 0.0
        %1404 = vmatpush2.msra.mxu0 0.0
        %1405 = vmatprep.subr.mxu0 0.0
        %1406 = vmatpush2.msra.mxu0 0.0
        %1407 = vmatprep.subr.mxu0 0.0
        %1408 = vmatpush2.msra.mxu0 0.0
        %1409 = vmatprep.subr.mxu0 0.0
        %1410 = vmatpush2.msra.mxu0 0.0
        %1411 = vmatprep.subr.mxu0 0.0
        %1412 = vmatpush2.msra.mxu0 0.0
        %1413 = vmatprep.subr.mxu0 0.0
        %1414 = vmatpush2.msra.mxu0 0.0
        %1415 = vmatprep.subr.mxu0 0.0
        %1416 = vmatpush2.msra.mxu0 0.0
        %1417 = vmatprep.subr.mxu0 0.0
        %1418 = vmatpush2.msra.mxu0 0.0
        %1419 = vmatprep.subr.mxu0 0.0
        %1420 = vmatpush2.msra.mxu0 0.0
        %1421 = vmatprep.subr.mxu0 0.0
        %1422 = vmatpush2.msra.mxu0 0.0
        %1423 = vmatprep.subr.mxu0 0.0
        %1424 = vmatpush2.msra.mxu0 0.0
        %1425 = vmatprep.subr.mxu0 0.0
        %1426 = vmatpush2.msra.mxu0 0.0
        %1427 = vmatprep.subr.mxu0 0.0
        %1428 = vmatpush2.msra.mxu0 0.0
        %1429 = vmatprep.subr.mxu0 0.0
        %1430 = vmatpush2.msra.mxu0 0.0
        %1431 = vmatprep.mubr.f32.mxu0 0.0
        %1432 = vmatmul.mubr.f32.gmra.mxu0 %v1266
        %v1433 = vpop.f32.mrf.mxu0
        %v1434 = vadd.f32 0.0, %v1433
        %v1435 = vpop.f32.mrf.mxu0
        %v1436 = vadd.f32 0.0, %v1435
        %1437 = vmatprep.mubr.f32.mxu0 0.0
        %1438 = vmatmul.mubr.f32.gmra.mxu0 %v1267
        %v1439 = vpop.f32.mrf.mxu0
        %v1440 = vadd.f32 0.0, %v1439
        %v1441 = vpop.f32.mrf.mxu0
        %v1442 = vadd.f32 0.0, %v1441
        %1443 = vmatprep.mubr.f32.mxu0 0.0
        %1444 = vmatmul.mubr.f32.gmra.mxu0 %v1268
        %v1445 = vpop.f32.mrf.mxu0
        %v1446 = vadd.f32 0.0, %v1445
        %v1447 = vpop.f32.mrf.mxu0
        %v1448 = vadd.f32 0.0, %v1447
        %1449 = vmatprep.mubr.f32.mxu0 0.0
        %1450 = vmatmul.mubr.f32.gmra.mxu0 %v1269
        %v1451 = vpop.f32.mrf.mxu0
        %v1452 = vadd.f32 0.0, %v1451
        %v1453 = vpop.f32.mrf.mxu0
        %v1454 = vadd.f32 0.0, %v1453
        %1455 = vmatprep.mubr.f32.mxu0 0.0
        %1456 = vmatmul.mubr.f32.gmra.mxu0 %v1270
        %v1457 = vpop.f32.mrf.mxu0
        %v1458 = vadd.f32 0.0, %v1457
        %v1459 = vpop.f32.mrf.mxu0
        %v1460 = vadd.f32 0.0, %v1459
        %1461 = vmatprep.mubr.f32.mxu0 0.0
        %1462 = vmatmul.mubr.f32.gmra.mxu0 %v1271
        %v1463 = vpop.f32.mrf.mxu0
        %v1464 = vadd.f32 0.0, %v1463
        %v1465 = vpop.f32.mrf.mxu0
        %v1466 = vadd.f32 0.0, %v1465
        %1467 = vmatprep.mubr.f32.mxu0 0.0
        %1468 = vmatmul.mubr.f32.gmra.mxu0 %v1272
        %v1469 = vpop.f32.mrf.mxu0
        %v1470 = vadd.f32 0.0, %v1469
        %v1471 = vpop.f32.mrf.mxu0
        %v1472 = vadd.f32 0.0, %v1471
        %1473 = vmatprep.mubr.f32.mxu0 0.0
        %1474 = vmatmul.mubr.f32.gmra.mxu0 %v1273
        %v1475 = vpop.f32.mrf.mxu0
        %v1476 = vadd.f32 0.0, %v1475
        %v1477 = vpop.f32.mrf.mxu0
        %v1478 = vadd.f32 0.0, %v1477
        %1479 = vmatprep.mubr.f32.mxu0 0.0
        %1480 = vmatmul.mubr.f32.gmra.mxu0 %v1274
        %v1481 = vpop.f32.mrf.mxu0
        %v1482 = vadd.f32 0.0, %v1481
        %v1483 = vpop.f32.mrf.mxu0
        %v1484 = vadd.f32 0.0, %v1483
        %1485 = vmatprep.mubr.f32.mxu0 0.0
        %1486 = vmatmul.mubr.f32.gmra.mxu0 %v1275
        %v1487 = vpop.f32.mrf.mxu0
        %v1488 = vadd.f32 0.0, %v1487
        %v1489 = vpop.f32.mrf.mxu0
        %v1490 = vadd.f32 0.0, %v1489
        %1491 = vmatprep.mubr.f32.mxu0 0.0
        %1492 = vmatmul.mubr.f32.gmra.mxu0 %v1276
        %v1493 = vpop.f32.mrf.mxu0
        %v1494 = vadd.f32 0.0, %v1493
        %v1495 = vpop.f32.mrf.mxu0
        %v1496 = vadd.f32 0.0, %v1495
        %1497 = vmatprep.mubr.f32.mxu0 0.0
        %1498 = vmatmul.mubr.f32.gmra.mxu0 %v1277
        %v1499 = vpop.f32.mrf.mxu0
        %v1500 = vadd.f32 0.0, %v1499
        %v1501 = vpop.f32.mrf.mxu0
        %v1502 = vadd.f32 0.0, %v1501
        %1503 = vmatprep.mubr.f32.mxu0 0.0
        %1504 = vmatmul.mubr.f32.gmra.mxu0 %v1278
        %v1505 = vpop.f32.mrf.mxu0
        %v1506 = vadd.f32 0.0, %v1505
        %v1507 = vpop.f32.mrf.mxu0
        %v1508 = vadd.f32 0.0, %v1507
        %1509 = vmatprep.mubr.f32.mxu0 0.0
        %1510 = vmatmul.mubr.f32.gmra.mxu0 %v1279
        %v1511 = vpop.f32.mrf.mxu0
        %v1512 = vadd.f32 0.0, %v1511
        %v1513 = vpop.f32.mrf.mxu0
        %v1514 = vadd.f32 0.0, %v1513
        %1515 = vmatprep.mubr.f32.mxu0 0.0
        %1516 = vmatmul.mubr.f32.gmra.mxu0 %v1280
        %v1517 = vpop.f32.mrf.mxu0
        %v1518 = vadd.f32 0.0, %v1517
        %v1519 = vpop.f32.mrf.mxu0
        %v1520 = vadd.f32 0.0, %v1519
        %1521 = vmatprep.mubr.f32.mxu0 0.0
        %1522 = vmatmul.mubr.f32.gmra.mxu0 %v1281
        %v1523 = vpop.f32.mrf.mxu0
        %v1524 = vadd.f32 0.0, %v1523
        %v1525 = vpop.f32.mrf.mxu0
        %v1526 = vadd.f32 0.0, %v1525
        %1527 = vmatprep.mubr.f32.mxu0 0.0
        %1528 = vmatmul.mubr.f32.gmra.mxu0 %v1282
        %v1529 = vpop.f32.mrf.mxu0
        %v1530 = vadd.f32 0.0, %v1529
        %v1531 = vpop.f32.mrf.mxu0
        %v1532 = vadd.f32 0.0, %v1531
        %1533 = vmatprep.mubr.f32.mxu0 0.0
        %1534 = vmatmul.mubr.f32.gmra.mxu0 %v1283
        %v1535 = vpop.f32.mrf.mxu0
        %v1536 = vadd.f32 0.0, %v1535
        %v1537 = vpop.f32.mrf.mxu0
        %v1538 = vadd.f32 0.0, %v1537
        %1539 = vmatprep.mubr.f32.mxu0 0.0
        %1540 = vmatmul.mubr.f32.gmra.mxu0 %v1284
        %v1541 = vpop.f32.mrf.mxu0
        %v1542 = vadd.f32 0.0, %v1541
        %v1543 = vpop.f32.mrf.mxu0
        %v1544 = vadd.f32 0.0, %v1543
        %1545 = vmatprep.mubr.f32.mxu0 0.0
        %1546 = vmatmul.mubr.f32.gmra.mxu0 %v1285
        %v1547 = vpop.f32.mrf.mxu0
        %v1548 = vadd.f32 0.0, %v1547
        %v1549 = vpop.f32.mrf.mxu0
        %v1550 = vadd.f32 0.0, %v1549
        %1551 = vmatprep.mubr.f32.mxu0 0.0
        %1552 = vmatmul.mubr.f32.gmra.mxu0 %v1286
        %v1553 = vpop.f32.mrf.mxu0
        %v1554 = vadd.f32 0.0, %v1553
        %v1555 = vpop.f32.mrf.mxu0
        %v1556 = vadd.f32 0.0, %v1555
        %1557 = vmatprep.mubr.f32.mxu0 0.0
        %1558 = vmatmul.mubr.f32.gmra.mxu0 %v1287
        %v1559 = vpop.f32.mrf.mxu0
        %v1560 = vadd.f32 0.0, %v1559
        %v1561 = vpop.f32.mrf.mxu0
        %v1562 = vadd.f32 0.0, %v1561
        %1563 = vmatprep.mubr.f32.mxu0 0.0
        %1564 = vmatmul.mubr.f32.gmra.mxu0 %v1288
        %v1565 = vpop.f32.mrf.mxu0
        %v1566 = vadd.f32 0.0, %v1565
        %v1567 = vpop.f32.mrf.mxu0
        %v1568 = vadd.f32 0.0, %v1567
        %1569 = vmatprep.mubr.f32.mxu0 0.0
        %1570 = vmatmul.mubr.f32.gmra.mxu0 %v1289
        %v1571 = vpop.f32.mrf.mxu0
        %v1572 = vadd.f32 0.0, %v1571
        %v1573 = vpop.f32.mrf.mxu0
        %v1574 = vadd.f32 0.0, %v1573
        %1575 = vmatprep.mubr.f32.mxu0 0.0
        %1576 = vmatmul.mubr.f32.gmra.mxu0 %v1290
        %v1577 = vpop.f32.mrf.mxu0
        %v1578 = vadd.f32 0.0, %v1577
        %v1579 = vpop.f32.mrf.mxu0
        %v1580 = vadd.f32 0.0, %v1579
        %1581 = vmatprep.mubr.f32.mxu0 0.0
        %1582 = vmatmul.mubr.f32.gmra.mxu0 %v1291
        %v1583 = vpop.f32.mrf.mxu0
        %v1584 = vadd.f32 0.0, %v1583
        %v1585 = vpop.f32.mrf.mxu0
        %v1586 = vadd.f32 0.0, %v1585
        %1587 = vmatprep.mubr.f32.mxu0 0.0
        %1588 = vmatmul.mubr.f32.gmra.mxu0 %v1292
        %v1589 = vpop.f32.mrf.mxu0
        %v1590 = vadd.f32 0.0, %v1589
        %v1591 = vpop.f32.mrf.mxu0
        %v1592 = vadd.f32 0.0, %v1591
        %1593 = vmatprep.mubr.f32.mxu0 0.0
        %1594 = vmatmul.mubr.f32.gmra.mxu0 %v1293
        %v1595 = vpop.f32.mrf.mxu0
        %v1596 = vadd.f32 0.0, %v1595
        %v1597 = vpop.f32.mrf.mxu0
        %v1598 = vadd.f32 0.0, %v1597
        %1599 = vmatprep.mubr.f32.mxu0 0.0
        %1600 = vmatmul.mubr.f32.gmra.mxu0 %v1294
        %v1601 = vpop.f32.mrf.mxu0
        %v1602 = vadd.f32 0.0, %v1601
        %v1603 = vpop.f32.mrf.mxu0
        %v1604 = vadd.f32 0.0, %v1603
        %1605 = vmatprep.mubr.f32.mxu0 0.0
        %1606 = vmatmul.mubr.f32.gmra.mxu0 %v1295
        %v1607 = vpop.f32.mrf.mxu0
        %v1608 = vadd.f32 0.0, %v1607
        %v1609 = vpop.f32.mrf.mxu0
        %v1610 = vadd.f32 0.0, %v1609
        %1611 = vmatprep.mubr.f32.mxu0 0.0
        %1612 = vmatmul.mubr.f32.gmra.mxu0 %v1296
        %v1613 = vpop.f32.mrf.mxu0
        %v1614 = vadd.f32 0.0, %v1613
        %v1615 = vpop.f32.mrf.mxu0
        %v1616 = vadd.f32 0.0, %v1615
        %1617 = vmatprep.mubr.f32.mxu0 0.0
        %1618 = vmatmul.mubr.f32.gmra.mxu0 %v1297
        %v1619 = vpop.f32.mrf.mxu0
        %v1620 = vadd.f32 0.0, %v1619
        %v1621 = vpop.f32.mrf.mxu0
        %v1622 = vadd.f32 0.0, %v1621
        %1623 = vdwg.mxu0
        %1624 = vmatprep.subr.mxu0 %v1366
        %1625 = vmatpush1.msra.mxu0 %v1365
        %1626 = vmatprep.subr.mxu0 %v1362
        %1627 = vmatpush1.msra.mxu0 %v1361
        %1628 = vmatprep.subr.mxu0 %v1358
        %1629 = vmatpush1.msra.mxu0 %v1357
        %1630 = vmatprep.subr.mxu0 %v1354
        %1631 = vmatpush1.msra.mxu0 %v1353
        %1632 = vmatprep.subr.mxu0 %v1350
        %1633 = vmatpush1.msra.mxu0 %v1349
        %1634 = vmatprep.subr.mxu0 %v1346
        %1635 = vmatpush1.msra.mxu0 %v1345
        %1636 = vmatprep.subr.mxu0 %v1342
        %1637 = vmatpush1.msra.mxu0 %v1341
        %1638 = vmatprep.subr.mxu0 %v1338
        %1639 = vmatpush1.msra.mxu0 %v1337
        %1640 = vmatprep.subr.mxu0 %v1334
        %1641 = vmatpush1.msra.mxu0 %v1333
        %1642 = vmatprep.subr.mxu0 %v1330
        %1643 = vmatpush1.msra.mxu0 %v1329
        %1644 = vmatprep.subr.mxu0 %v1326
        %1645 = vmatpush1.msra.mxu0 %v1325
        %1646 = vmatprep.subr.mxu0 %v1322
        %1647 = vmatpush1.msra.mxu0 %v1321
        %1648 = vmatprep.subr.mxu0 %v1318
        %1649 = vmatpush1.msra.mxu0 %v1317
        %1650 = vmatprep.subr.mxu0 %v1314
        %1651 = vmatpush1.msra.mxu0 %v1313
        %1652 = vmatprep.subr.mxu0 %v1310
        %1653 = vmatpush1.msra.mxu0 %v1309
        %1654 = vmatprep.subr.mxu0 %v1306
        %1655 = vmatpush1.msra.mxu0 %v1305
        %1656 = vmatprep.subr.mxu0 0.0
        %1657 = vmatpush2.msra.mxu0 0.0
        %1658 = vmatprep.subr.mxu0 0.0
        %1659 = vmatpush2.msra.mxu0 0.0
        %1660 = vmatprep.subr.mxu0 0.0
        %1661 = vmatpush2.msra.mxu0 0.0
        %1662 = vmatprep.subr.mxu0 0.0
        %1663 = vmatpush2.msra.mxu0 0.0
        %1664 = vmatprep.subr.mxu0 0.0
        %1665 = vmatpush2.msra.mxu0 0.0
        %1666 = vmatprep.subr.mxu0 0.0
        %1667 = vmatpush2.msra.mxu0 0.0
        %1668 = vmatprep.subr.mxu0 0.0
        %1669 = vmatpush2.msra.mxu0 0.0
        %1670 = vmatprep.subr.mxu0 0.0
        %1671 = vmatpush2.msra.mxu0 0.0
        %1672 = vmatprep.subr.mxu0 0.0
        %1673 = vmatpush2.msra.mxu0 0.0
        %1674 = vmatprep.subr.mxu0 0.0
        %1675 = vmatpush2.msra.mxu0 0.0
        %1676 = vmatprep.subr.mxu0 0.0
        %1677 = vmatpush2.msra.mxu0 0.0
        %1678 = vmatprep.subr.mxu0 0.0
        %1679 = vmatpush2.msra.mxu0 0.0
        %1680 = vmatprep.subr.mxu0 0.0
        %1681 = vmatpush2.msra.mxu0 0.0
        %1682 = vmatprep.subr.mxu0 0.0
        %1683 = vmatpush2.msra.mxu0 0.0
        %1684 = vmatprep.subr.mxu0 0.0
        %1685 = vmatpush2.msra.mxu0 0.0
        %1686 = vmatprep.subr.mxu0 0.0
        %1687 = vmatpush2.msra.mxu0 0.0
        %1688 = vmatprep.mubr.f32.mxu0 0.0
        %1689 = vmatmul.mubr.f32.gmra.mxu0 %v1266
        %v1690 = vpop.f32.mrf.mxu0
        %v1691 = vadd.f32 0.0, %v1690
        %v1692 = vpop.f32.mrf.mxu0
        %v1693 = vadd.f32 0.0, %v1692
        %1694 = vmatprep.mubr.f32.mxu0 0.0
        %1695 = vmatmul.mubr.f32.gmra.mxu0 %v1267
        %v1696 = vpop.f32.mrf.mxu0
        %v1697 = vadd.f32 0.0, %v1696
        %v1698 = vpop.f32.mrf.mxu0
        %v1699 = vadd.f32 0.0, %v1698
        %1700 = vmatprep.mubr.f32.mxu0 0.0
        %1701 = vmatmul.mubr.f32.gmra.mxu0 %v1268
        %v1702 = vpop.f32.mrf.mxu0
        %v1703 = vadd.f32 0.0, %v1702
        %v1704 = vpop.f32.mrf.mxu0
        %v1705 = vadd.f32 0.0, %v1704
        %1706 = vmatprep.mubr.f32.mxu0 0.0
        %1707 = vmatmul.mubr.f32.gmra.mxu0 %v1269
        %v1708 = vpop.f32.mrf.mxu0
        %v1709 = vadd.f32 0.0, %v1708
        %v1710 = vpop.f32.mrf.mxu0
        %v1711 = vadd.f32 0.0, %v1710
        %1712 = vmatprep.mubr.f32.mxu0 0.0
        %1713 = vmatmul.mubr.f32.gmra.mxu0 %v1270
        %v1714 = vpop.f32.mrf.mxu0
        %v1715 = vadd.f32 0.0, %v1714
        %v1716 = vpop.f32.mrf.mxu0
        %v1717 = vadd.f32 0.0, %v1716
        %1718 = vmatprep.mubr.f32.mxu0 0.0
        %1719 = vmatmul.mubr.f32.gmra.mxu0 %v1271
        %v1720 = vpop.f32.mrf.mxu0
        %v1721 = vadd.f32 0.0, %v1720
        %v1722 = vpop.f32.mrf.mxu0
        %v1723 = vadd.f32 0.0, %v1722
        %1724 = vmatprep.mubr.f32.mxu0 0.0
        %1725 = vmatmul.mubr.f32.gmra.mxu0 %v1272
        %v1726 = vpop.f32.mrf.mxu0
        %v1727 = vadd.f32 0.0, %v1726
        %v1728 = vpop.f32.mrf.mxu0
        %v1729 = vadd.f32 0.0, %v1728
        %1730 = vmatprep.mubr.f32.mxu0 0.0
        %1731 = vmatmul.mubr.f32.gmra.mxu0 %v1273
        %v1732 = vpop.f32.mrf.mxu0
        %v1733 = vadd.f32 0.0, %v1732
        %v1734 = vpop.f32.mrf.mxu0
        %v1735 = vadd.f32 0.0, %v1734
        %1736 = vmatprep.mubr.f32.mxu0 0.0
        %1737 = vmatmul.mubr.f32.gmra.mxu0 %v1274
        %v1738 = vpop.f32.mrf.mxu0
        %v1739 = vadd.f32 0.0, %v1738
        %v1740 = vpop.f32.mrf.mxu0
        %v1741 = vadd.f32 0.0, %v1740
        %1742 = vmatprep.mubr.f32.mxu0 0.0
        %1743 = vmatmul.mubr.f32.gmra.mxu0 %v1275
        %v1744 = vpop.f32.mrf.mxu0
        %v1745 = vadd.f32 0.0, %v1744
        %v1746 = vpop.f32.mrf.mxu0
        %v1747 = vadd.f32 0.0, %v1746
        %1748 = vmatprep.mubr.f32.mxu0 0.0
        %1749 = vmatmul.mubr.f32.gmra.mxu0 %v1276
        %v1750 = vpop.f32.mrf.mxu0
        %v1751 = vadd.f32 0.0, %v1750
        %v1752 = vpop.f32.mrf.mxu0
        %v1753 = vadd.f32 0.0, %v1752
        %1754 = vmatprep.mubr.f32.mxu0 0.0
        %1755 = vmatmul.mubr.f32.gmra.mxu0 %v1277
        %v1756 = vpop.f32.mrf.mxu0
        %v1757 = vadd.f32 0.0, %v1756
        %v1758 = vpop.f32.mrf.mxu0
        %v1759 = vadd.f32 0.0, %v1758
        %1760 = vmatprep.mubr.f32.mxu0 0.0
        %1761 = vmatmul.mubr.f32.gmra.mxu0 %v1278
        %v1762 = vpop.f32.mrf.mxu0
        %v1763 = vadd.f32 0.0, %v1762
        %v1764 = vpop.f32.mrf.mxu0
        %v1765 = vadd.f32 0.0, %v1764
        %1766 = vmatprep.mubr.f32.mxu0 0.0
        %1767 = vmatmul.mubr.f32.gmra.mxu0 %v1279
        %v1768 = vpop.f32.mrf.mxu0
        %v1769 = vadd.f32 0.0, %v1768
        %v1770 = vpop.f32.mrf.mxu0
        %v1771 = vadd.f32 0.0, %v1770
        %1772 = vmatprep.mubr.f32.mxu0 0.0
        %1773 = vmatmul.mubr.f32.gmra.mxu0 %v1280
        %v1774 = vpop.f32.mrf.mxu0
        %v1775 = vadd.f32 0.0, %v1774
        %v1776 = vpop.f32.mrf.mxu0
        %v1777 = vadd.f32 0.0, %v1776
        %1778 = vmatprep.mubr.f32.mxu0 0.0
        %1779 = vmatmul.mubr.f32.gmra.mxu0 %v1281
        %v1780 = vpop.f32.mrf.mxu0
        %v1781 = vadd.f32 0.0, %v1780
        %v1782 = vpop.f32.mrf.mxu0
        %v1783 = vadd.f32 0.0, %v1782
        %1784 = vmatprep.mubr.f32.mxu0 0.0
        %1785 = vmatmul.mubr.f32.gmra.mxu0 %v1282
        %v1786 = vpop.f32.mrf.mxu0
        %v1787 = vadd.f32 0.0, %v1786
        %v1788 = vpop.f32.mrf.mxu0
        %v1789 = vadd.f32 0.0, %v1788
        %1790 = vmatprep.mubr.f32.mxu0 0.0
        %1791 = vmatmul.mubr.f32.gmra.mxu0 %v1283
        %v1792 = vpop.f32.mrf.mxu0
        %v1793 = vadd.f32 0.0, %v1792
        %v1794 = vpop.f32.mrf.mxu0
        %v1795 = vadd.f32 0.0, %v1794
        %1796 = vmatprep.mubr.f32.mxu0 0.0
        %1797 = vmatmul.mubr.f32.gmra.mxu0 %v1284
        %v1798 = vpop.f32.mrf.mxu0
        %v1799 = vadd.f32 0.0, %v1798
        %v1800 = vpop.f32.mrf.mxu0
        %v1801 = vadd.f32 0.0, %v1800
        %1802 = vmatprep.mubr.f32.mxu0 0.0
        %1803 = vmatmul.mubr.f32.gmra.mxu0 %v1285
        %v1804 = vpop.f32.mrf.mxu0
        %v1805 = vadd.f32 0.0, %v1804
        %v1806 = vpop.f32.mrf.mxu0
        %v1807 = vadd.f32 0.0, %v1806
        %1808 = vmatprep.mubr.f32.mxu0 0.0
        %1809 = vmatmul.mubr.f32.gmra.mxu0 %v1286
        %v1810 = vpop.f32.mrf.mxu0
        %v1811 = vadd.f32 0.0, %v1810
        %v1812 = vpop.f32.mrf.mxu0
        %v1813 = vadd.f32 0.0, %v1812
        %1814 = vmatprep.mubr.f32.mxu0 0.0
        %1815 = vmatmul.mubr.f32.gmra.mxu0 %v1287
        %v1816 = vpop.f32.mrf.mxu0
        %v1817 = vadd.f32 0.0, %v1816
        %v1818 = vpop.f32.mrf.mxu0
        %v1819 = vadd.f32 0.0, %v1818
        %1820 = vmatprep.mubr.f32.mxu0 0.0
        %1821 = vmatmul.mubr.f32.gmra.mxu0 %v1288
        %v1822 = vpop.f32.mrf.mxu0
        %v1823 = vadd.f32 0.0, %v1822
        %v1824 = vpop.f32.mrf.mxu0
        %v1825 = vadd.f32 0.0, %v1824
        %1826 = vmatprep.mubr.f32.mxu0 0.0
        %1827 = vmatmul.mubr.f32.gmra.mxu0 %v1289
        %v1828 = vpop.f32.mrf.mxu0
        %v1829 = vadd.f32 0.0, %v1828
        %v1830 = vpop.f32.mrf.mxu0
        %v1831 = vadd.f32 0.0, %v1830
        %1832 = vmatprep.mubr.f32.mxu0 0.0
        %1833 = vmatmul.mubr.f32.gmra.mxu0 %v1290
        %v1834 = vpop.f32.mrf.mxu0
        %v1835 = vadd.f32 0.0, %v1834
        %v1836 = vpop.f32.mrf.mxu0
        %v1837 = vadd.f32 0.0, %v1836
        %1838 = vmatprep.mubr.f32.mxu0 0.0
        %1839 = vmatmul.mubr.f32.gmra.mxu0 %v1291
        %v1840 = vpop.f32.mrf.mxu0
        %v1841 = vadd.f32 0.0, %v1840
        %v1842 = vpop.f32.mrf.mxu0
        %v1843 = vadd.f32 0.0, %v1842
        %1844 = vmatprep.mubr.f32.mxu0 0.0
        %1845 = vmatmul.mubr.f32.gmra.mxu0 %v1292
        %v1846 = vpop.f32.mrf.mxu0
        %v1847 = vadd.f32 0.0, %v1846
        %v1848 = vpop.f32.mrf.mxu0
        %v1849 = vadd.f32 0.0, %v1848
        %1850 = vmatprep.mubr.f32.mxu0 0.0
        %1851 = vmatmul.mubr.f32.gmra.mxu0 %v1293
        %v1852 = vpop.f32.mrf.mxu0
        %v1853 = vadd.f32 0.0, %v1852
        %v1854 = vpop.f32.mrf.mxu0
        %v1855 = vadd.f32 0.0, %v1854
        %1856 = vmatprep.mubr.f32.mxu0 0.0
        %1857 = vmatmul.mubr.f32.gmra.mxu0 %v1294
        %v1858 = vpop.f32.mrf.mxu0
        %v1859 = vadd.f32 0.0, %v1858
        %v1860 = vpop.f32.mrf.mxu0
        %v1861 = vadd.f32 0.0, %v1860
        %1862 = vmatprep.mubr.f32.mxu0 0.0
        %1863 = vmatmul.mubr.f32.gmra.mxu0 %v1295
        %v1864 = vpop.f32.mrf.mxu0
        %v1865 = vadd.f32 0.0, %v1864
        %v1866 = vpop.f32.mrf.mxu0
        %v1867 = vadd.f32 0.0, %v1866
        %1868 = vmatprep.mubr.f32.mxu0 0.0
        %1869 = vmatmul.mubr.f32.gmra.mxu0 %v1296
        %v1870 = vpop.f32.mrf.mxu0
        %v1871 = vadd.f32 0.0, %v1870
        %v1872 = vpop.f32.mrf.mxu0
        %v1873 = vadd.f32 0.0, %v1872
        %1874 = vmatprep.mubr.f32.mxu0 0.0
        %1875 = vmatmul.mubr.f32.gmra.mxu0 %v1297
        %v1876 = vpop.f32.mrf.mxu0
        %v1877 = vadd.f32 0.0, %v1876
        %v1878 = vpop.f32.mrf.mxu0
        %v1879 = vadd.f32 0.0, %v1878
        %1880 = vdwg.mxu0
        %v1881 = vadd.f32 %v1138, %v1434
        %v1882 = vadd.f32 %v1139, %v1436
        %v1883 = vadd.f32 %v1140, %v1691
        %v1884 = vadd.f32 %v1141, %v1693
        %v1885 = vadd.f32 %v1142, %v1440
        %v1886 = vadd.f32 %v1143, %v1442
        %v1887 = vadd.f32 %v1144, %v1697
        %v1888 = vadd.f32 %v1145, %v1699
        %v1889 = vadd.f32 %v1146, %v1446
        %v1890 = vadd.f32 %v1147, %v1448
        %v1891 = vadd.f32 %v1148, %v1703
        %v1892 = vadd.f32 %v1149, %v1705
        %v1893 = vadd.f32 %v1150, %v1452
        %v1894 = vadd.f32 %v1151, %v1454
        %v1895 = vadd.f32 %v1152, %v1709
        %v1896 = vadd.f32 %v1153, %v1711
        %v1897 = vadd.f32 %v1154, %v1458
        %v1898 = vadd.f32 %v1155, %v1460
        %v1899 = vadd.f32 %v1156, %v1715
        %v1900 = vadd.f32 %v1157, %v1717
        %v1901 = vadd.f32 %v1158, %v1464
        %v1902 = vadd.f32 %v1159, %v1466
        %v1903 = vadd.f32 %v1160, %v1721
        %v1904 = vadd.f32 %v1161, %v1723
        %v1905 = vadd.f32 %v1162, %v1470
        %v1906 = vadd.f32 %v1163, %v1472
        %v1907 = vadd.f32 %v1164, %v1727
        %v1908 = vadd.f32 %v1165, %v1729
        %v1909 = vadd.f32 %v1166, %v1476
        %v1910 = vadd.f32 %v1167, %v1478
        %v1911 = vadd.f32 %v1168, %v1733
        %v1912 = vadd.f32 %v1169, %v1735
        %v1913 = vadd.f32 %v1170, %v1482
        %v1914 = vadd.f32 %v1171, %v1484
        %v1915 = vadd.f32 %v1172, %v1739
        %v1916 = vadd.f32 %v1173, %v1741
        %v1917 = vadd.f32 %v1174, %v1488
        %v1918 = vadd.f32 %v1175, %v1490
        %v1919 = vadd.f32 %v1176, %v1745
        %v1920 = vadd.f32 %v1177, %v1747
        %v1921 = vadd.f32 %v1178, %v1494
        %v1922 = vadd.f32 %v1179, %v1496
        %v1923 = vadd.f32 %v1180, %v1751
        %v1924 = vadd.f32 %v1181, %v1753
        %v1925 = vadd.f32 %v1182, %v1500
        %v1926 = vadd.f32 %v1183, %v1502
        %v1927 = vadd.f32 %v1184, %v1757
        %v1928 = vadd.f32 %v1185, %v1759
        %v1929 = vadd.f32 %v1186, %v1506
        %v1930 = vadd.f32 %v1187, %v1508
        %v1931 = vadd.f32 %v1188, %v1763
        %v1932 = vadd.f32 %v1189, %v1765
        %v1933 = vadd.f32 %v1190, %v1512
        %v1934 = vadd.f32 %v1191, %v1514
        %v1935 = vadd.f32 %v1192, %v1769
        %v1936 = vadd.f32 %v1193, %v1771
        %v1937 = vadd.f32 %v1194, %v1518
        %v1938 = vadd.f32 %v1195, %v1520
        %v1939 = vadd.f32 %v1196, %v1775
        %v1940 = vadd.f32 %v1197, %v1777
        %v1941 = vadd.f32 %v1198, %v1524
        %v1942 = vadd.f32 %v1199, %v1526
        %v1943 = vadd.f32 %v1200, %v1781
        %v1944 = vadd.f32 %v1201, %v1783
        %v1945 = vadd.f32 %v1202, %v1530
        %v1946 = vadd.f32 %v1203, %v1532
        %v1947 = vadd.f32 %v1204, %v1787
        %v1948 = vadd.f32 %v1205, %v1789
        %v1949 = vadd.f32 %v1206, %v1536
        %v1950 = vadd.f32 %v1207, %v1538
        %v1951 = vadd.f32 %v1208, %v1793
        %v1952 = vadd.f32 %v1209, %v1795
        %v1953 = vadd.f32 %v1210, %v1542
        %v1954 = vadd.f32 %v1211, %v1544
        %v1955 = vadd.f32 %v1212, %v1799
        %v1956 = vadd.f32 %v1213, %v1801
        %v1957 = vadd.f32 %v1214, %v1548
        %v1958 = vadd.f32 %v1215, %v1550
        %v1959 = vadd.f32 %v1216, %v1805
        %v1960 = vadd.f32 %v1217, %v1807
        %v1961 = vadd.f32 %v1218, %v1554
        %v1962 = vadd.f32 %v1219, %v1556
        %v1963 = vadd.f32 %v1220, %v1811
        %v1964 = vadd.f32 %v1221, %v1813
        %v1965 = vadd.f32 %v1222, %v1560
        %v1966 = vadd.f32 %v1223, %v1562
        %v1967 = vadd.f32 %v1224, %v1817
        %v1968 = vadd.f32 %v1225, %v1819
        %v1969 = vadd.f32 %v1226, %v1566
        %v1970 = vadd.f32 %v1227, %v1568
        %v1971 = vadd.f32 %v1228, %v1823
        %v1972 = vadd.f32 %v1229, %v1825
        %v1973 = vadd.f32 %v1230, %v1572
        %v1974 = vadd.f32 %v1231, %v1574
        %v1975 = vadd.f32 %v1232, %v1829
        %v1976 = vadd.f32 %v1233, %v1831
        %v1977 = vadd.f32 %v1234, %v1578
        %v1978 = vadd.f32 %v1235, %v1580
        %v1979 = vadd.f32 %v1236, %v1835
        %v1980 = vadd.f32 %v1237, %v1837
        %v1981 = vadd.f32 %v1238, %v1584
        %v1982 = vadd.f32 %v1239, %v1586
        %v1983 = vadd.f32 %v1240, %v1841
        %v1984 = vadd.f32 %v1241, %v1843
        %v1985 = vadd.f32 %v1242, %v1590
        %v1986 = vadd.f32 %v1243, %v1592
        %v1987 = vadd.f32 %v1244, %v1847
        %v1988 = vadd.f32 %v1245, %v1849
        %v1989 = vadd.f32 %v1246, %v1596
        %v1990 = vadd.f32 %v1247, %v1598
        %v1991 = vadd.f32 %v1248, %v1853
        %v1992 = vadd.f32 %v1249, %v1855
        %v1993 = vadd.f32 %v1250, %v1602
        %v1994 = vadd.f32 %v1251, %v1604
        %v1995 = vadd.f32 %v1252, %v1859
        %v1996 = vadd.f32 %v1253, %v1861
        %v1997 = vadd.f32 %v1254, %v1608
        %v1998 = vadd.f32 %v1255, %v1610
        %v1999 = vadd.f32 %v1256, %v1865
        %v2000 = vadd.f32 %v1257, %v1867
        %v2001 = vadd.f32 %v1258, %v1614
        %v2002 = vadd.f32 %v1259, %v1616
        %v2003 = vadd.f32 %v1260, %v1871
        %v2004 = vadd.f32 %v1261, %v1873
        %v2005 = vadd.f32 %v1262, %v1620
        %v2006 = vadd.f32 %v1263, %v1622
        %v2007 = vadd.f32 %v1264, %v1877
        %v2008 = vadd.f32 %v1265, %v1879
        %2009 = vst [vmem:[#allocation2] sm:$0xff] %v1881
        %2010 = vst [vmem:[#allocation2 + $0x8] sm:$0xff] %v1882
        %2011 = vst [vmem:[#allocation2 + $0x10] sm:$0xff] %v1883
        %2012 = vst [vmem:[#allocation2 + $0x18] sm:$0xff] %v1884
        %2013 = vst [vmem:[#allocation2 + $0x20] sm:$0xff] %v1885
        %2014 = vst [vmem:[#allocation2 + $0x28] sm:$0xff] %v1886
        %2015 = vst [vmem:[#allocation2 + $0x30] sm:$0xff] %v1887
        %2016 = vst [vmem:[#allocation2 + $0x38] sm:$0xff] %v1888
        %2017 = vst [vmem:[#allocation2 + $0x40] sm:$0xff] %v1889
        %2018 = vst [vmem:[#allocation2 + $0x48] sm:$0xff] %v1890
        %2019 = vst [vmem:[#allocation2 + $0x50] sm:$0xff] %v1891
        %2020 = vst [vmem:[#allocation2 + $0x58] sm:$0xff] %v1892
        %2021 = vst [vmem:[#allocation2 + $0x60] sm:$0xff] %v1893
        %2022 = vst [vmem:[#allocation2 + $0x68] sm:$0xff] %v1894
        %2023 = vst [vmem:[#allocation2 + $0x70] sm:$0xff] %v1895
        %2024 = vst [vmem:[#allocation2 + $0x78] sm:$0xff] %v1896
        %2025 = vst [vmem:[#allocation2 + $0x80] sm:$0xff] %v1897
        %2026 = vst [vmem:[#allocation2 + $0x88] sm:$0xff] %v1898
        %2027 = vst [vmem:[#allocation2 + $0x90] sm:$0xff] %v1899
        %2028 = vst [vmem:[#allocation2 + $0x98] sm:$0xff] %v1900
        %2029 = vst [vmem:[#allocation2 + $0xa0] sm:$0xff] %v1901
        %2030 = vst [vmem:[#allocation2 + $0xa8] sm:$0xff] %v1902
        %2031 = vst [vmem:[#allocation2 + $0xb0] sm:$0xff] %v1903
        %2032 = vst [vmem:[#allocation2 + $0xb8] sm:$0xff] %v1904
        %2033 = vst [vmem:[#allocation2 + $0xc0] sm:$0xff] %v1905
        %2034 = vst [vmem:[#allocation2 + $0xc8] sm:$0xff] %v1906
        %2035 = vst [vmem:[#allocation2 + $0xd0] sm:$0xff] %v1907
        %2036 = vst [vmem:[#allocation2 + $0xd8] sm:$0xff] %v1908
        %2037 = vst [vmem:[#allocation2 + $0xe0] sm:$0xff] %v1909
        %2038 = vst [vmem:[#allocation2 + $0xe8] sm:$0xff] %v1910
        %2039 = vst [vmem:[#allocation2 + $0xf0] sm:$0xff] %v1911
        %2040 = vst [vmem:[#allocation2 + $0xf8] sm:$0xff] %v1912
        %2041 = vst [vmem:[#allocation2 + $0x100] sm:$0xff] %v1913
        %2042 = vst [vmem:[#allocation2 + $0x108] sm:$0xff] %v1914
        %2043 = vst [vmem:[#allocation2 + $0x110] sm:$0xff] %v1915
        %2044 = vst [vmem:[#allocation2 + $0x118] sm:$0xff] %v1916
        %2045 = vst [vmem:[#allocation2 + $0x120] sm:$0xff] %v1917
        %2046 = vst [vmem:[#allocation2 + $0x128] sm:$0xff] %v1918
        %2047 = vst [vmem:[#allocation2 + $0x130] sm:$0xff] %v1919
        %2048 = vst [vmem:[#allocation2 + $0x138] sm:$0xff] %v1920
        %2049 = vst [vmem:[#allocation2 + $0x140] sm:$0xff] %v1921
        %2050 = vst [vmem:[#allocation2 + $0x148] sm:$0xff] %v1922
        %2051 = vst [vmem:[#allocation2 + $0x150] sm:$0xff] %v1923
        %2052 = vst [vmem:[#allocation2 + $0x158] sm:$0xff] %v1924
        %2053 = vst [vmem:[#allocation2 + $0x160] sm:$0xff] %v1925
        %2054 = vst [vmem:[#allocation2 + $0x168] sm:$0xff] %v1926
        %2055 = vst [vmem:[#allocation2 + $0x170] sm:$0xff] %v1927
        %2056 = vst [vmem:[#allocation2 + $0x178] sm:$0xff] %v1928
        %2057 = vst [vmem:[#allocation2 + $0x180] sm:$0xff] %v1929
        %2058 = vst [vmem:[#allocation2 + $0x188] sm:$0xff] %v1930
        %2059 = vst [vmem:[#allocation2 + $0x190] sm:$0xff] %v1931
        %2060 = vst [vmem:[#allocation2 + $0x198] sm:$0xff] %v1932
        %2061 = vst [vmem:[#allocation2 + $0x1a0] sm:$0xff] %v1933
        %2062 = vst [vmem:[#allocation2 + $0x1a8] sm:$0xff] %v1934
        %2063 = vst [vmem:[#allocation2 + $0x1b0] sm:$0xff] %v1935
        %2064 = vst [vmem:[#allocation2 + $0x1b8] sm:$0xff] %v1936
        %2065 = vst [vmem:[#allocation2 + $0x1c0] sm:$0xff] %v1937
        %2066 = vst [vmem:[#allocation2 + $0x1c8] sm:$0xff] %v1938
        %2067 = vst [vmem:[#allocation2 + $0x1d0] sm:$0xff] %v1939
        %2068 = vst [vmem:[#allocation2 + $0x1d8] sm:$0xff] %v1940
        %2069 = vst [vmem:[#allocation2 + $0x1e0] sm:$0xff] %v1941
        %2070 = vst [vmem:[#allocation2 + $0x1e8] sm:$0xff] %v1942
        %2071 = vst [vmem:[#allocation2 + $0x1f0] sm:$0xff] %v1943
        %2072 = vst [vmem:[#allocation2 + $0x1f8] sm:$0xff] %v1944
        %2073 = vst [vmem:[#allocation2 + $0x200] sm:$0xff] %v1945
        %2074 = vst [vmem:[#allocation2 + $0x208] sm:$0xff] %v1946
        %2075 = vst [vmem:[#allocation2 + $0x210] sm:$0xff] %v1947
        %2076 = vst [vmem:[#allocation2 + $0x218] sm:$0xff] %v1948
        %2077 = vst [vmem:[#allocation2 + $0x220] sm:$0xff] %v1949
        %2078 = vst [vmem:[#allocation2 + $0x228] sm:$0xff] %v1950
        %2079 = vst [vmem:[#allocation2 + $0x230] sm:$0xff] %v1951
        %2080 = vst [vmem:[#allocation2 + $0x238] sm:$0xff] %v1952
        %2081 = vst [vmem:[#allocation2 + $0x240] sm:$0xff] %v1953
        %2082 = vst [vmem:[#allocation2 + $0x248] sm:$0xff] %v1954
        %2083 = vst [vmem:[#allocation2 + $0x250] sm:$0xff] %v1955
        %2084 = vst [vmem:[#allocation2 + $0x258] sm:$0xff] %v1956
        %2085 = vst [vmem:[#allocation2 + $0x260] sm:$0xff] %v1957
        %2086 = vst [vmem:[#allocation2 + $0x268] sm:$0xff] %v1958
        %2087 = vst [vmem:[#allocation2 + $0x270] sm:$0xff] %v1959
        %2088 = vst [vmem:[#allocation2 + $0x278] sm:$0xff] %v1960
        %2089 = vst [vmem:[#allocation2 + $0x280] sm:$0xff] %v1961
        %2090 = vst [vmem:[#allocation2 + $0x288] sm:$0xff] %v1962
        %2091 = vst [vmem:[#allocation2 + $0x290] sm:$0xff] %v1963
        %2092 = vst [vmem:[#allocation2 + $0x298] sm:$0xff] %v1964
        %2093 = vst [vmem:[#allocation2 + $0x2a0] sm:$0xff] %v1965
        %2094 = vst [vmem:[#allocation2 + $0x2a8] sm:$0xff] %v1966
        %2095 = vst [vmem:[#allocation2 + $0x2b0] sm:$0xff] %v1967
        %2096 = vst [vmem:[#allocation2 + $0x2b8] sm:$0xff] %v1968
        %2097 = vst [vmem:[#allocation2 + $0x2c0] sm:$0xff] %v1969
        %2098 = vst [vmem:[#allocation2 + $0x2c8] sm:$0xff] %v1970
        %2099 = vst [vmem:[#allocation2 + $0x2d0] sm:$0xff] %v1971
        %2100 = vst [vmem:[#allocation2 + $0x2d8] sm:$0xff] %v1972
        %2101 = vst [vmem:[#allocation2 + $0x2e0] sm:$0xff] %v1973
        %2102 = vst [vmem:[#allocation2 + $0x2e8] sm:$0xff] %v1974
        %2103 = vst [vmem:[#allocation2 + $0x2f0] sm:$0xff] %v1975
        %2104 = vst [vmem:[#allocation2 + $0x2f8] sm:$0xff] %v1976
        %2105 = vst [vmem:[#allocation2 + $0x300] sm:$0xff] %v1977
        %2106 = vst [vmem:[#allocation2 + $0x308] sm:$0xff] %v1978
        %2107 = vst [vmem:[#allocation2 + $0x310] sm:$0xff] %v1979
        %2108 = vst [vmem:[#allocation2 + $0x318] sm:$0xff] %v1980
        %2109 = vst [vmem:[#allocation2 + $0x320] sm:$0xff] %v1981
        %2110 = vst [vmem:[#allocation2 + $0x328] sm:$0xff] %v1982
        %2111 = vst [vmem:[#allocation2 + $0x330] sm:$0xff] %v1983
        %2112 = vst [vmem:[#allocation2 + $0x338] sm:$0xff] %v1984
        %2113 = vst [vmem:[#allocation2 + $0x340] sm:$0xff] %v1985
        %2114 = vst [vmem:[#allocation2 + $0x348] sm:$0xff] %v1986
        %2115 = vst [vmem:[#allocation2 + $0x350] sm:$0xff] %v1987
        %2116 = vst [vmem:[#allocation2 + $0x358] sm:$0xff] %v1988
        %2117 = vst [vmem:[#allocation2 + $0x360] sm:$0xff] %v1989
        %2118 = vst [vmem:[#allocation2 + $0x368] sm:$0xff] %v1990
        %2119 = vst [vmem:[#allocation2 + $0x370] sm:$0xff] %v1991
        %2120 = vst [vmem:[#allocation2 + $0x378] sm:$0xff] %v1992
        %2121 = vst [vmem:[#allocation2 + $0x380] sm:$0xff] %v1993
        %2122 = vst [vmem:[#allocation2 + $0x388] sm:$0xff] %v1994
        %2123 = vst [vmem:[#allocation2 + $0x390] sm:$0xff] %v1995
        %2124 = vst [vmem:[#allocation2 + $0x398] sm:$0xff] %v1996
        %2125 = vst [vmem:[#allocation2 + $0x3a0] sm:$0xff] %v1997
        %2126 = vst [vmem:[#allocation2 + $0x3a8] sm:$0xff] %v1998
        %2127 = vst [vmem:[#allocation2 + $0x3b0] sm:$0xff] %v1999
        %2128 = vst [vmem:[#allocation2 + $0x3b8] sm:$0xff] %v2000
        %2129 = vst [vmem:[#allocation2 + $0x3c0] sm:$0xff] %v2001
        %2130 = vst [vmem:[#allocation2 + $0x3c8] sm:$0xff] %v2002
        %2131 = vst [vmem:[#allocation2 + $0x3d0] sm:$0xff] %v2003
        %2132 = vst [vmem:[#allocation2 + $0x3d8] sm:$0xff] %v2004
        %2133 = vst [vmem:[#allocation2 + $0x3e0] sm:$0xff] %v2005
        %2134 = vst [vmem:[#allocation2 + $0x3e8] sm:$0xff] %v2006
        %2135 = vst [vmem:[#allocation2 + $0x3f0] sm:$0xff] %v2007
        %2136 = vst [vmem:[#allocation2 + $0x3f8] sm:$0xff] %v2008
        %p2137 = scmp.eq.s32.totalorder %s20, 4
        // Predicated region
        $region94: #{igala_forward.7} parent=80 // pred_check
          %p2138 = pneg %p2137
        $region95: #{igala_forward.7} parent=80 // pred_check_branch
          %2140 = sbr.rel (%p2138) target = $region97
        $region96: #{igala_forward.7} parent=80 // pred_region
          %v2141 = vld [vmem:[#allocation2] sm:$0xff]
          %v2142 = vld [vmem:[#allocation2 + $0x8] sm:$0xff]
          %v2143 = vld [vmem:[#allocation2 + $0x10] sm:$0xff]
          %v2144 = vld [vmem:[#allocation2 + $0x18] sm:$0xff]
          %v2145 = vld [vmem:[#allocation2 + $0x20] sm:$0xff]
          %v2146 = vld [vmem:[#allocation2 + $0x28] sm:$0xff]
          %v2147 = vld [vmem:[#allocation2 + $0x30] sm:$0xff]
          %v2148 = vld [vmem:[#allocation2 + $0x38] sm:$0xff]
          %v2149 = vld [vmem:[#allocation2 + $0x40] sm:$0xff]
          %v2150 = vld [vmem:[#allocation2 + $0x48] sm:$0xff]
          %v2151 = vld [vmem:[#allocation2 + $0x50] sm:$0xff]
          %v2152 = vld [vmem:[#allocation2 + $0x58] sm:$0xff]
          %v2153 = vld [vmem:[#allocation2 + $0x60] sm:$0xff]
          %v2154 = vld [vmem:[#allocation2 + $0x68] sm:$0xff]
          %v2155 = vld [vmem:[#allocation2 + $0x70] sm:$0xff]
          %v2156 = vld [vmem:[#allocation2 + $0x78] sm:$0xff]
          %v2157 = vld [vmem:[#allocation2 + $0x80] sm:$0xff]
          %v2158 = vld [vmem:[#allocation2 + $0x88] sm:$0xff]
          %v2159 = vld [vmem:[#allocation2 + $0x90] sm:$0xff]
          %v2160 = vld [vmem:[#allocation2 + $0x98] sm:$0xff]
          %v2161 = vld [vmem:[#allocation2 + $0xa0] sm:$0xff]
          %v2162 = vld [vmem:[#allocation2 + $0xa8] sm:$0xff]
          %v2163 = vld [vmem:[#allocation2 + $0xb0] sm:$0xff]
          %v2164 = vld [vmem:[#allocation2 + $0xb8] sm:$0xff]
          %v2165 = vld [vmem:[#allocation2 + $0xc0] sm:$0xff]
          %v2166 = vld [vmem:[#allocation2 + $0xc8] sm:$0xff]
          %v2167 = vld [vmem:[#allocation2 + $0xd0] sm:$0xff]
          %v2168 = vld [vmem:[#allocation2 + $0xd8] sm:$0xff]
          %v2169 = vld [vmem:[#allocation2 + $0xe0] sm:$0xff]
          %v2170 = vld [vmem:[#allocation2 + $0xe8] sm:$0xff]
          %v2171 = vld [vmem:[#allocation2 + $0xf0] sm:$0xff]
          %v2172 = vld [vmem:[#allocation2 + $0xf8] sm:$0xff]
          %v2173 = vld [vmem:[#allocation2 + $0x100] sm:$0xff]
          %v2174 = vld [vmem:[#allocation2 + $0x108] sm:$0xff]
          %v2175 = vld [vmem:[#allocation2 + $0x110] sm:$0xff]
          %v2176 = vld [vmem:[#allocation2 + $0x118] sm:$0xff]
          %v2177 = vld [vmem:[#allocation2 + $0x120] sm:$0xff]
          %v2178 = vld [vmem:[#allocation2 + $0x128] sm:$0xff]
          %v2179 = vld [vmem:[#allocation2 + $0x130] sm:$0xff]
          %v2180 = vld [vmem:[#allocation2 + $0x138] sm:$0xff]
          %v2181 = vld [vmem:[#allocation2 + $0x140] sm:$0xff]
          %v2182 = vld [vmem:[#allocation2 + $0x148] sm:$0xff]
          %v2183 = vld [vmem:[#allocation2 + $0x150] sm:$0xff]
          %v2184 = vld [vmem:[#allocation2 + $0x158] sm:$0xff]
          %v2185 = vld [vmem:[#allocation2 + $0x160] sm:$0xff]
          %v2186 = vld [vmem:[#allocation2 + $0x168] sm:$0xff]
          %v2187 = vld [vmem:[#allocation2 + $0x170] sm:$0xff]
          %v2188 = vld [vmem:[#allocation2 + $0x178] sm:$0xff]
          %v2189 = vld [vmem:[#allocation2 + $0x180] sm:$0xff]
          %v2190 = vld [vmem:[#allocation2 + $0x188] sm:$0xff]
          %v2191 = vld [vmem:[#allocation2 + $0x190] sm:$0xff]
          %v2192 = vld [vmem:[#allocation2 + $0x198] sm:$0xff]
          %v2193 = vld [vmem:[#allocation2 + $0x1a0] sm:$0xff]
          %v2194 = vld [vmem:[#allocation2 + $0x1a8] sm:$0xff]
          %v2195 = vld [vmem:[#allocation2 + $0x1b0] sm:$0xff]
          %v2196 = vld [vmem:[#allocation2 + $0x1b8] sm:$0xff]
          %v2197 = vld [vmem:[#allocation2 + $0x1c0] sm:$0xff]
          %v2198 = vld [vmem:[#allocation2 + $0x1c8] sm:$0xff]
          %v2199 = vld [vmem:[#allocation2 + $0x1d0] sm:$0xff]
          %v2200 = vld [vmem:[#allocation2 + $0x1d8] sm:$0xff]
          %v2201 = vld [vmem:[#allocation2 + $0x1e0] sm:$0xff]
          %v2202 = vld [vmem:[#allocation2 + $0x1e8] sm:$0xff]
          %v2203 = vld [vmem:[#allocation2 + $0x1f0] sm:$0xff]
          %v2204 = vld [vmem:[#allocation2 + $0x1f8] sm:$0xff]
          %v2205 = vld [vmem:[#allocation2 + $0x200] sm:$0xff]
          %v2206 = vld [vmem:[#allocation2 + $0x208] sm:$0xff]
          %v2207 = vld [vmem:[#allocation2 + $0x210] sm:$0xff]
          %v2208 = vld [vmem:[#allocation2 + $0x218] sm:$0xff]
          %v2209 = vld [vmem:[#allocation2 + $0x220] sm:$0xff]
          %v2210 = vld [vmem:[#allocation2 + $0x228] sm:$0xff]
          %v2211 = vld [vmem:[#allocation2 + $0x230] sm:$0xff]
          %v2212 = vld [vmem:[#allocation2 + $0x238] sm:$0xff]
          %v2213 = vld [vmem:[#allocation2 + $0x240] sm:$0xff]
          %v2214 = vld [vmem:[#allocation2 + $0x248] sm:$0xff]
          %v2215 = vld [vmem:[#allocation2 + $0x250] sm:$0xff]
          %v2216 = vld [vmem:[#allocation2 + $0x258] sm:$0xff]
          %v2217 = vld [vmem:[#allocation2 + $0x260] sm:$0xff]
          %v2218 = vld [vmem:[#allocation2 + $0x268] sm:$0xff]
          %v2219 = vld [vmem:[#allocation2 + $0x270] sm:$0xff]
          %v2220 = vld [vmem:[#allocation2 + $0x278] sm:$0xff]
          %v2221 = vld [vmem:[#allocation2 + $0x280] sm:$0xff]
          %v2222 = vld [vmem:[#allocation2 + $0x288] sm:$0xff]
          %v2223 = vld [vmem:[#allocation2 + $0x290] sm:$0xff]
          %v2224 = vld [vmem:[#allocation2 + $0x298] sm:$0xff]
          %v2225 = vld [vmem:[#allocation2 + $0x2a0] sm:$0xff]
          %v2226 = vld [vmem:[#allocation2 + $0x2a8] sm:$0xff]
          %v2227 = vld [vmem:[#allocation2 + $0x2b0] sm:$0xff]
          %v2228 = vld [vmem:[#allocation2 + $0x2b8] sm:$0xff]
          %v2229 = vld [vmem:[#allocation2 + $0x2c0] sm:$0xff]
          %v2230 = vld [vmem:[#allocation2 + $0x2c8] sm:$0xff]
          %v2231 = vld [vmem:[#allocation2 + $0x2d0] sm:$0xff]
          %v2232 = vld [vmem:[#allocation2 + $0x2d8] sm:$0xff]
          %v2233 = vld [vmem:[#allocation2 + $0x2e0] sm:$0xff]
          %v2234 = vld [vmem:[#allocation2 + $0x2e8] sm:$0xff]
          %v2235 = vld [vmem:[#allocation2 + $0x2f0] sm:$0xff]
          %v2236 = vld [vmem:[#allocation2 + $0x2f8] sm:$0xff]
          %v2237 = vld [vmem:[#allocation2 + $0x300] sm:$0xff]
          %v2238 = vld [vmem:[#allocation2 + $0x308] sm:$0xff]
          %v2239 = vld [vmem:[#allocation2 + $0x310] sm:$0xff]
          %v2240 = vld [vmem:[#allocation2 + $0x318] sm:$0xff]
          %v2241 = vld [vmem:[#allocation2 + $0x320] sm:$0xff]
          %v2242 = vld [vmem:[#allocation2 + $0x328] sm:$0xff]
          %v2243 = vld [vmem:[#allocation2 + $0x330] sm:$0xff]
          %v2244 = vld [vmem:[#allocation2 + $0x338] sm:$0xff]
          %v2245 = vld [vmem:[#allocation2 + $0x340] sm:$0xff]
          %v2246 = vld [vmem:[#allocation2 + $0x348] sm:$0xff]
          %v2247 = vld [vmem:[#allocation2 + $0x350] sm:$0xff]
          %v2248 = vld [vmem:[#allocation2 + $0x358] sm:$0xff]
          %v2249 = vld [vmem:[#allocation2 + $0x360] sm:$0xff]
          %v2250 = vld [vmem:[#allocation2 + $0x368] sm:$0xff]
          %v2251 = vld [vmem:[#allocation2 + $0x370] sm:$0xff]
          %v2252 = vld [vmem:[#allocation2 + $0x378] sm:$0xff]
          %v2253 = vld [vmem:[#allocation2 + $0x380] sm:$0xff]
          %v2254 = vld [vmem:[#allocation2 + $0x388] sm:$0xff]
          %v2255 = vld [vmem:[#allocation2 + $0x390] sm:$0xff]
          %v2256 = vld [vmem:[#allocation2 + $0x398] sm:$0xff]
          %v2257 = vld [vmem:[#allocation2 + $0x3a0] sm:$0xff]
          %v2258 = vld [vmem:[#allocation2 + $0x3a8] sm:$0xff]
          %v2259 = vld [vmem:[#allocation2 + $0x3b0] sm:$0xff]
          %v2260 = vld [vmem:[#allocation2 + $0x3b8] sm:$0xff]
          %v2261 = vld [vmem:[#allocation2 + $0x3c0] sm:$0xff]
          %v2262 = vld [vmem:[#allocation2 + $0x3c8] sm:$0xff]
          %v2263 = vld [vmem:[#allocation2 + $0x3d0] sm:$0xff]
          %v2264 = vld [vmem:[#allocation2 + $0x3d8] sm:$0xff]
          %v2265 = vld [vmem:[#allocation2 + $0x3e0] sm:$0xff]
          %v2266 = vld [vmem:[#allocation2 + $0x3e8] sm:$0xff]
          %v2267 = vld [vmem:[#allocation2 + $0x3f0] sm:$0xff]
          %v2268 = vld [vmem:[#allocation2 + $0x3f8] sm:$0xff]
          %2269 = vst [vmem:[%s1000] sm:$0xff] %v2141
          %2270 = vst [vmem:[%s1000 + $0x8] sm:$0xff] %v2142
          %2271 = vst [vmem:[%s1000 + $0x10] sm:$0xff] %v2143
          %2272 = vst [vmem:[%s1000 + $0x18] sm:$0xff] %v2144
          %2273 = vst [vmem:[%s1000 + $0x20] sm:$0xff] %v2145
          %2274 = vst [vmem:[%s1000 + $0x28] sm:$0xff] %v2146
          %2275 = vst [vmem:[%s1000 + $0x30] sm:$0xff] %v2147
          %2276 = vst [vmem:[%s1000 + $0x38] sm:$0xff] %v2148
          %2277 = vst [vmem:[%s1000 + $0x40] sm:$0xff] %v2149
          %2278 = vst [vmem:[%s1000 + $0x48] sm:$0xff] %v2150
          %2279 = vst [vmem:[%s1000 + $0x50] sm:$0xff] %v2151
          %2280 = vst [vmem:[%s1000 + $0x58] sm:$0xff] %v2152
          %2281 = vst [vmem:[%s1000 + $0x60] sm:$0xff] %v2153
          %2282 = vst [vmem:[%s1000 + $0x68] sm:$0xff] %v2154
          %2283 = vst [vmem:[%s1000 + $0x70] sm:$0xff] %v2155
          %2284 = vst [vmem:[%s1000 + $0x78] sm:$0xff] %v2156
          %2285 = vst [vmem:[%s1000 + $0x80] sm:$0xff] %v2157
          %2286 = vst [vmem:[%s1000 + $0x88] sm:$0xff] %v2158
          %2287 = vst [vmem:[%s1000 + $0x90] sm:$0xff] %v2159
          %2288 = vst [vmem:[%s1000 + $0x98] sm:$0xff] %v2160
          %2289 = vst [vmem:[%s1000 + $0xa0] sm:$0xff] %v2161
          %2290 = vst [vmem:[%s1000 + $0xa8] sm:$0xff] %v2162
          %2291 = vst [vmem:[%s1000 + $0xb0] sm:$0xff] %v2163
          %2292 = vst [vmem:[%s1000 + $0xb8] sm:$0xff] %v2164
          %2293 = vst [vmem:[%s1000 + $0xc0] sm:$0xff] %v2165
          %2294 = vst [vmem:[%s1000 + $0xc8] sm:$0xff] %v2166
          %2295 = vst [vmem:[%s1000 + $0xd0] sm:$0xff] %v2167
          %2296 = vst [vmem:[%s1000 + $0xd8] sm:$0xff] %v2168
          %2297 = vst [vmem:[%s1000 + $0xe0] sm:$0xff] %v2169
          %2298 = vst [vmem:[%s1000 + $0xe8] sm:$0xff] %v2170
          %2299 = vst [vmem:[%s1000 + $0xf0] sm:$0xff] %v2171
          %2300 = vst [vmem:[%s1000 + $0xf8] sm:$0xff] %v2172
          %2301 = vst [vmem:[%s1000 + $0x100] sm:$0xff] %v2173
          %2302 = vst [vmem:[%s1000 + $0x108] sm:$0xff] %v2174
          %2303 = vst [vmem:[%s1000 + $0x110] sm:$0xff] %v2175
          %2304 = vst [vmem:[%s1000 + $0x118] sm:$0xff] %v2176
          %2305 = vst [vmem:[%s1000 + $0x120] sm:$0xff] %v2177
          %2306 = vst [vmem:[%s1000 + $0x128] sm:$0xff] %v2178
          %2307 = vst [vmem:[%s1000 + $0x130] sm:$0xff] %v2179
          %2308 = vst [vmem:[%s1000 + $0x138] sm:$0xff] %v2180
          %2309 = vst [vmem:[%s1000 + $0x140] sm:$0xff] %v2181
          %2310 = vst [vmem:[%s1000 + $0x148] sm:$0xff] %v2182
          %2311 = vst [vmem:[%s1000 + $0x150] sm:$0xff] %v2183
          %2312 = vst [vmem:[%s1000 + $0x158] sm:$0xff] %v2184
          %2313 = vst [vmem:[%s1000 + $0x160] sm:$0xff] %v2185
          %2314 = vst [vmem:[%s1000 + $0x168] sm:$0xff] %v2186
          %2315 = vst [vmem:[%s1000 + $0x170] sm:$0xff] %v2187
          %2316 = vst [vmem:[%s1000 + $0x178] sm:$0xff] %v2188
          %2317 = vst [vmem:[%s1000 + $0x180] sm:$0xff] %v2189
          %2318 = vst [vmem:[%s1000 + $0x188] sm:$0xff] %v2190
          %2319 = vst [vmem:[%s1000 + $0x190] sm:$0xff] %v2191
          %2320 = vst [vmem:[%s1000 + $0x198] sm:$0xff] %v2192
          %2321 = vst [vmem:[%s1000 + $0x1a0] sm:$0xff] %v2193
          %2322 = vst [vmem:[%s1000 + $0x1a8] sm:$0xff] %v2194
          %2323 = vst [vmem:[%s1000 + $0x1b0] sm:$0xff] %v2195
          %2324 = vst [vmem:[%s1000 + $0x1b8] sm:$0xff] %v2196
          %2325 = vst [vmem:[%s1000 + $0x1c0] sm:$0xff] %v2197
          %2326 = vst [vmem:[%s1000 + $0x1c8] sm:$0xff] %v2198
          %2327 = vst [vmem:[%s1000 + $0x1d0] sm:$0xff] %v2199
          %2328 = vst [vmem:[%s1000 + $0x1d8] sm:$0xff] %v2200
          %2329 = vst [vmem:[%s1000 + $0x1e0] sm:$0xff] %v2201
          %2330 = vst [vmem:[%s1000 + $0x1e8] sm:$0xff] %v2202
          %2331 = vst [vmem:[%s1000 + $0x1f0] sm:$0xff] %v2203
          %2332 = vst [vmem:[%s1000 + $0x1f8] sm:$0xff] %v2204
          %2333 = vst [vmem:[%s1000 + $0x200] sm:$0xff] %v2205
          %2334 = vst [vmem:[%s1000 + $0x208] sm:$0xff] %v2206
          %2335 = vst [vmem:[%s1000 + $0x210] sm:$0xff] %v2207
          %2336 = vst [vmem:[%s1000 + $0x218] sm:$0xff] %v2208
          %2337 = vst [vmem:[%s1000 + $0x220] sm:$0xff] %v2209
          %2338 = vst [vmem:[%s1000 + $0x228] sm:$0xff] %v2210
          %2339 = vst [vmem:[%s1000 + $0x230] sm:$0xff] %v2211
          %2340 = vst [vmem:[%s1000 + $0x238] sm:$0xff] %v2212
          %2341 = vst [vmem:[%s1000 + $0x240] sm:$0xff] %v2213
          %2342 = vst [vmem:[%s1000 + $0x248] sm:$0xff] %v2214
          %2343 = vst [vmem:[%s1000 + $0x250] sm:$0xff] %v2215
          %2344 = vst [vmem:[%s1000 + $0x258] sm:$0xff] %v2216
          %2345 = vst [vmem:[%s1000 + $0x260] sm:$0xff] %v2217
          %2346 = vst [vmem:[%s1000 + $0x268] sm:$0xff] %v2218
          %2347 = vst [vmem:[%s1000 + $0x270] sm:$0xff] %v2219
          %2348 = vst [vmem:[%s1000 + $0x278] sm:$0xff] %v2220
          %2349 = vst [vmem:[%s1000 + $0x280] sm:$0xff] %v2221
          %2350 = vst [vmem:[%s1000 + $0x288] sm:$0xff] %v2222
          %2351 = vst [vmem:[%s1000 + $0x290] sm:$0xff] %v2223
          %2352 = vst [vmem:[%s1000 + $0x298] sm:$0xff] %v2224
          %2353 = vst [vmem:[%s1000 + $0x2a0] sm:$0xff] %v2225
          %2354 = vst [vmem:[%s1000 + $0x2a8] sm:$0xff] %v2226
          %2355 = vst [vmem:[%s1000 + $0x2b0] sm:$0xff] %v2227
          %2356 = vst [vmem:[%s1000 + $0x2b8] sm:$0xff] %v2228
          %2357 = vst [vmem:[%s1000 + $0x2c0] sm:$0xff] %v2229
          %2358 = vst [vmem:[%s1000 + $0x2c8] sm:$0xff] %v2230
          %2359 = vst [vmem:[%s1000 + $0x2d0] sm:$0xff] %v2231
          %2360 = vst [vmem:[%s1000 + $0x2d8] sm:$0xff] %v2232
          %2361 = vst [vmem:[%s1000 + $0x2e0] sm:$0xff] %v2233
          %2362 = vst [vmem:[%s1000 + $0x2e8] sm:$0xff] %v2234
          %2363 = vst [vmem:[%s1000 + $0x2f0] sm:$0xff] %v2235
          %2364 = vst [vmem:[%s1000 + $0x2f8] sm:$0xff] %v2236
          %2365 = vst [vmem:[%s1000 + $0x300] sm:$0xff] %v2237
          %2366 = vst [vmem:[%s1000 + $0x308] sm:$0xff] %v2238
          %2367 = vst [vmem:[%s1000 + $0x310] sm:$0xff] %v2239
          %2368 = vst [vmem:[%s1000 + $0x318] sm:$0xff] %v2240
          %2369 = vst [vmem:[%s1000 + $0x320] sm:$0xff] %v2241
          %2370 = vst [vmem:[%s1000 + $0x328] sm:$0xff] %v2242
          %2371 = vst [vmem:[%s1000 + $0x330] sm:$0xff] %v2243
          %2372 = vst [vmem:[%s1000 + $0x338] sm:$0xff] %v2244
          %2373 = vst [vmem:[%s1000 + $0x340] sm:$0xff] %v2245
          %2374 = vst [vmem:[%s1000 + $0x348] sm:$0xff] %v2246
          %2375 = vst [vmem:[%s1000 + $0x350] sm:$0xff] %v2247
          %2376 = vst [vmem:[%s1000 + $0x358] sm:$0xff] %v2248
          %2377 = vst [vmem:[%s1000 + $0x360] sm:$0xff] %v2249
          %2378 = vst [vmem:[%s1000 + $0x368] sm:$0xff] %v2250
          %2379 = vst [vmem:[%s1000 + $0x370] sm:$0xff] %v2251
          %2380 = vst [vmem:[%s1000 + $0x378] sm:$0xff] %v2252
          %2381 = vst [vmem:[%s1000 + $0x380] sm:$0xff] %v2253
          %2382 = vst [vmem:[%s1000 + $0x388] sm:$0xff] %v2254
          %2383 = vst [vmem:[%s1000 + $0x390] sm:$0xff] %v2255
          %2384 = vst [vmem:[%s1000 + $0x398] sm:$0xff] %v2256
          %2385 = vst [vmem:[%s1000 + $0x3a0] sm:$0xff] %v2257
          %2386 = vst [vmem:[%s1000 + $0x3a8] sm:$0xff] %v2258
          %2387 = vst [vmem:[%s1000 + $0x3b0] sm:$0xff] %v2259
          %2388 = vst [vmem:[%s1000 + $0x3b8] sm:$0xff] %v2260
          %2389 = vst [vmem:[%s1000 + $0x3c0] sm:$0xff] %v2261
          %2390 = vst [vmem:[%s1000 + $0x3c8] sm:$0xff] %v2262
          %2391 = vst [vmem:[%s1000 + $0x3d0] sm:$0xff] %v2263
          %2392 = vst [vmem:[%s1000 + $0x3d8] sm:$0xff] %v2264
          %2393 = vst [vmem:[%s1000 + $0x3e0] sm:$0xff] %v2265
          %2394 = vst [vmem:[%s1000 + $0x3e8] sm:$0xff] %v2266
          %2395 = vst [vmem:[%s1000 + $0x3f0] sm:$0xff] %v2267
          %2396 = vst [vmem:[%s1000 + $0x3f8] sm:$0xff] %v2268
        $region97: #{igala_forward.7} parent=80 // pred_fallthru
          _
        %s2397 = sand.u32 %s96, 1
        %s2398 = sand.u32 %s96, 1
        %s2399 = smul.addr %s2398, 1024
        %s2400 = scalar_lea.vmem [#allocation5], %s2399
        // Predicated region
        $region98: #{igala_forward.7} parent=80 // pred_check
          %p2401 = pneg %p106
        $region99: #{igala_forward.7} parent=80 // pred_check_branch
          %2403 = sbr.rel (%p2401) target = $region101
        $region100: #{igala_forward.7} parent=80 // pred_region
          %s2404 = smul.u32 32, %s18
          %s2405 = smul.u32 4, %s19
          %s2406 = smul.addr %s2404, 8
          %s2407 = sadd.s32 %s2405, %s2406
          %s2408 = smul.addr %s2407, 8
          %s2409 = scalar_lea.vmem %s2, %s2408
          // Predicated region
          $region102: #{igala_forward.7} parent=100 // pred_check
            _
          $region103: #{igala_forward.7} parent=100 // pred_check_branch
            %2411 = sbr.rel (0) target = $region105
          $region104: #{igala_forward.7} parent=100 // pred_region
            // Predicated region
            $region106: #{igala_forward.7} parent=104 // pred_check
              _
            $region107: #{igala_forward.7} parent=104 // pred_check_branch
              %2413 = sbr.rel (0) target = $region109
            $region108: #{igala_forward.7} parent=104 // pred_region
              loop: start=0, step=1, limit=1
              $region110: #{igala_forward.7} parent=108 // loop_pre_header
                _
              $region111: #{igala_forward.7} parent=108 // loop_header
                %s2415 = sphi 0, %s2419
                %p2416 = scmp.ge.s32.totalorder %s2415, 1
                %s2420 = sphi %s2400, %s2400
                %s2421 = sphi %s2409, %s2409
              $region112: #{igala_forward.7} parent=108 // loop_header_branch
                %2418 = sbr.rel (%p2416) target = $region116
              $region113: #{igala_forward.7} parent=108 // loop_body
                %v2422 = vld [vmem:[%s2420] sm:$0xff]
                %2423 = vst [vmem:[%s2421] sm:$0xff] %v2422
                %v2424 = vld [vmem:[%s2420 + $0x8] sm:$0xff]
                %2425 = vst [vmem:[%s2421 + $0x8] sm:$0xff] %v2424
                %v2426 = vld [vmem:[%s2420 + $0x10] sm:$0xff]
                %2427 = vst [vmem:[%s2421 + $0x10] sm:$0xff] %v2426
                %v2428 = vld [vmem:[%s2420 + $0x18] sm:$0xff]
                %2429 = vst [vmem:[%s2421 + $0x18] sm:$0xff] %v2428
                %v2430 = vld [vmem:[%s2420 + $0x20] sm:$0xff]
                %2431 = vst [vmem:[%s2421 + $0x40] sm:$0xff] %v2430
                %v2432 = vld [vmem:[%s2420 + $0x28] sm:$0xff]
                %2433 = vst [vmem:[%s2421 + $0x48] sm:$0xff] %v2432
                %v2434 = vld [vmem:[%s2420 + $0x30] sm:$0xff]
                %2435 = vst [vmem:[%s2421 + $0x50] sm:$0xff] %v2434
                %v2436 = vld [vmem:[%s2420 + $0x38] sm:$0xff]
                %2437 = vst [vmem:[%s2421 + $0x58] sm:$0xff] %v2436
                %v2438 = vld [vmem:[%s2420 + $0x40] sm:$0xff]
                %2439 = vst [vmem:[%s2421 + $0x80] sm:$0xff] %v2438
                %v2440 = vld [vmem:[%s2420 + $0x48] sm:$0xff]
                %2441 = vst [vmem:[%s2421 + $0x88] sm:$0xff] %v2440
                %v2442 = vld [vmem:[%s2420 + $0x50] sm:$0xff]
                %2443 = vst [vmem:[%s2421 + $0x90] sm:$0xff] %v2442
                %v2444 = vld [vmem:[%s2420 + $0x58] sm:$0xff]
                %2445 = vst [vmem:[%s2421 + $0x98] sm:$0xff] %v2444
                %v2446 = vld [vmem:[%s2420 + $0x60] sm:$0xff]
                %2447 = vst [vmem:[%s2421 + $0xc0] sm:$0xff] %v2446
                %v2448 = vld [vmem:[%s2420 + $0x68] sm:$0xff]
                %2449 = vst [vmem:[%s2421 + $0xc8] sm:$0xff] %v2448
                %v2450 = vld [vmem:[%s2420 + $0x70] sm:$0xff]
                %2451 = vst [vmem:[%s2421 + $0xd0] sm:$0xff] %v2450
                %v2452 = vld [vmem:[%s2420 + $0x78] sm:$0xff]
                %2453 = vst [vmem:[%s2421 + $0xd8] sm:$0xff] %v2452
                %v2454 = vld [vmem:[%s2420 + $0x80] sm:$0xff]
                %2455 = vst [vmem:[%s2421 + $0x100] sm:$0xff] %v2454
                %v2456 = vld [vmem:[%s2420 + $0x88] sm:$0xff]
                %2457 = vst [vmem:[%s2421 + $0x108] sm:$0xff] %v2456
                %v2458 = vld [vmem:[%s2420 + $0x90] sm:$0xff]
                %2459 = vst [vmem:[%s2421 + $0x110] sm:$0xff] %v2458
                %v2460 = vld [vmem:[%s2420 + $0x98] sm:$0xff]
                %2461 = vst [vmem:[%s2421 + $0x118] sm:$0xff] %v2460
                %v2462 = vld [vmem:[%s2420 + $0xa0] sm:$0xff]
                %2463 = vst [vmem:[%s2421 + $0x140] sm:$0xff] %v2462
                %v2464 = vld [vmem:[%s2420 + $0xa8] sm:$0xff]
                %2465 = vst [vmem:[%s2421 + $0x148] sm:$0xff] %v2464
                %v2466 = vld [vmem:[%s2420 + $0xb0] sm:$0xff]
                %2467 = vst [vmem:[%s2421 + $0x150] sm:$0xff] %v2466
                %v2468 = vld [vmem:[%s2420 + $0xb8] sm:$0xff]
                %2469 = vst [vmem:[%s2421 + $0x158] sm:$0xff] %v2468
                %v2470 = vld [vmem:[%s2420 + $0xc0] sm:$0xff]
                %2471 = vst [vmem:[%s2421 + $0x180] sm:$0xff] %v2470
                %v2472 = vld [vmem:[%s2420 + $0xc8] sm:$0xff]
                %2473 = vst [vmem:[%s2421 + $0x188] sm:$0xff] %v2472
                %v2474 = vld [vmem:[%s2420 + $0xd0] sm:$0xff]
                %2475 = vst [vmem:[%s2421 + $0x190] sm:$0xff] %v2474
                %v2476 = vld [vmem:[%s2420 + $0xd8] sm:$0xff]
                %2477 = vst [vmem:[%s2421 + $0x198] sm:$0xff] %v2476
                %v2478 = vld [vmem:[%s2420 + $0xe0] sm:$0xff]
                %2479 = vst [vmem:[%s2421 + $0x1c0] sm:$0xff] %v2478
                %v2480 = vld [vmem:[%s2420 + $0xe8] sm:$0xff]
                %2481 = vst [vmem:[%s2421 + $0x1c8] sm:$0xff] %v2480
                %v2482 = vld [vmem:[%s2420 + $0xf0] sm:$0xff]
                %2483 = vst [vmem:[%s2421 + $0x1d0] sm:$0xff] %v2482
                %v2484 = vld [vmem:[%s2420 + $0xf8] sm:$0xff]
                %2485 = vst [vmem:[%s2421 + $0x1d8] sm:$0xff] %v2484
                %v2486 = vld [vmem:[%s2420 + $0x100] sm:$0xff]
                %2487 = vst [vmem:[%s2421 + $0x200] sm:$0xff] %v2486
                %v2488 = vld [vmem:[%s2420 + $0x108] sm:$0xff]
                %2489 = vst [vmem:[%s2421 + $0x208] sm:$0xff] %v2488
                %v2490 = vld [vmem:[%s2420 + $0x110] sm:$0xff]
                %2491 = vst [vmem:[%s2421 + $0x210] sm:$0xff] %v2490
                %v2492 = vld [vmem:[%s2420 + $0x118] sm:$0xff]
                %2493 = vst [vmem:[%s2421 + $0x218] sm:$0xff] %v2492
                %v2494 = vld [vmem:[%s2420 + $0x120] sm:$0xff]
                %2495 = vst [vmem:[%s2421 + $0x240] sm:$0xff] %v2494
                %v2496 = vld [vmem:[%s2420 + $0x128] sm:$0xff]
                %2497 = vst [vmem:[%s2421 + $0x248] sm:$0xff] %v2496
                %v2498 = vld [vmem:[%s2420 + $0x130] sm:$0xff]
                %2499 = vst [vmem:[%s2421 + $0x250] sm:$0xff] %v2498
                %v2500 = vld [vmem:[%s2420 + $0x138] sm:$0xff]
                %2501 = vst [vmem:[%s2421 + $0x258] sm:$0xff] %v2500
                %v2502 = vld [vmem:[%s2420 + $0x140] sm:$0xff]
                %2503 = vst [vmem:[%s2421 + $0x280] sm:$0xff] %v2502
                %v2504 = vld [vmem:[%s2420 + $0x148] sm:$0xff]
                %2505 = vst [vmem:[%s2421 + $0x288] sm:$0xff] %v2504
                %v2506 = vld [vmem:[%s2420 + $0x150] sm:$0xff]
                %2507 = vst [vmem:[%s2421 + $0x290] sm:$0xff] %v2506
                %v2508 = vld [vmem:[%s2420 + $0x158] sm:$0xff]
                %2509 = vst [vmem:[%s2421 + $0x298] sm:$0xff] %v2508
                %v2510 = vld [vmem:[%s2420 + $0x160] sm:$0xff]
                %2511 = vst [vmem:[%s2421 + $0x2c0] sm:$0xff] %v2510
                %v2512 = vld [vmem:[%s2420 + $0x168] sm:$0xff]
                %2513 = vst [vmem:[%s2421 + $0x2c8] sm:$0xff] %v2512
                %v2514 = vld [vmem:[%s2420 + $0x170] sm:$0xff]
                %2515 = vst [vmem:[%s2421 + $0x2d0] sm:$0xff] %v2514
                %v2516 = vld [vmem:[%s2420 + $0x178] sm:$0xff]
                %2517 = vst [vmem:[%s2421 + $0x2d8] sm:$0xff] %v2516
                %v2518 = vld [vmem:[%s2420 + $0x180] sm:$0xff]
                %2519 = vst [vmem:[%s2421 + $0x300] sm:$0xff] %v2518
                %v2520 = vld [vmem:[%s2420 + $0x188] sm:$0xff]
                %2521 = vst [vmem:[%s2421 + $0x308] sm:$0xff] %v2520
                %v2522 = vld [vmem:[%s2420 + $0x190] sm:$0xff]
                %2523 = vst [vmem:[%s2421 + $0x310] sm:$0xff] %v2522
                %v2524 = vld [vmem:[%s2420 + $0x198] sm:$0xff]
                %2525 = vst [vmem:[%s2421 + $0x318] sm:$0xff] %v2524
                %v2526 = vld [vmem:[%s2420 + $0x1a0] sm:$0xff]
                %2527 = vst [vmem:[%s2421 + $0x340] sm:$0xff] %v2526
                %v2528 = vld [vmem:[%s2420 + $0x1a8] sm:$0xff]
                %2529 = vst [vmem:[%s2421 + $0x348] sm:$0xff] %v2528
                %v2530 = vld [vmem:[%s2420 + $0x1b0] sm:$0xff]
                %2531 = vst [vmem:[%s2421 + $0x350] sm:$0xff] %v2530
                %v2532 = vld [vmem:[%s2420 + $0x1b8] sm:$0xff]
                %2533 = vst [vmem:[%s2421 + $0x358] sm:$0xff] %v2532
                %v2534 = vld [vmem:[%s2420 + $0x1c0] sm:$0xff]
                %2535 = vst [vmem:[%s2421 + $0x380] sm:$0xff] %v2534
                %v2536 = vld [vmem:[%s2420 + $0x1c8] sm:$0xff]
                %2537 = vst [vmem:[%s2421 + $0x388] sm:$0xff] %v2536
                %v2538 = vld [vmem:[%s2420 + $0x1d0] sm:$0xff]
                %2539 = vst [vmem:[%s2421 + $0x390] sm:$0xff] %v2538
                %v2540 = vld [vmem:[%s2420 + $0x1d8] sm:$0xff]
                %2541 = vst [vmem:[%s2421 + $0x398] sm:$0xff] %v2540
                %v2542 = vld [vmem:[%s2420 + $0x1e0] sm:$0xff]
                %2543 = vst [vmem:[%s2421 + $0x3c0] sm:$0xff] %v2542
                %v2544 = vld [vmem:[%s2420 + $0x1e8] sm:$0xff]
                %2545 = vst [vmem:[%s2421 + $0x3c8] sm:$0xff] %v2544
                %v2546 = vld [vmem:[%s2420 + $0x1f0] sm:$0xff]
                %2547 = vst [vmem:[%s2421 + $0x3d0] sm:$0xff] %v2546
                %v2548 = vld [vmem:[%s2420 + $0x1f8] sm:$0xff]
                %2549 = vst [vmem:[%s2421 + $0x3d8] sm:$0xff] %v2548
                %v2550 = vld [vmem:[%s2420 + $0x200] sm:$0xff]
                %2551 = vst [vmem:[%s2421 + $0x400] sm:$0xff] %v2550
                %v2552 = vld [vmem:[%s2420 + $0x208] sm:$0xff]
                %2553 = vst [vmem:[%s2421 + $0x408] sm:$0xff] %v2552
                %v2554 = vld [vmem:[%s2420 + $0x210] sm:$0xff]
                %2555 = vst [vmem:[%s2421 + $0x410] sm:$0xff] %v2554
                %v2556 = vld [vmem:[%s2420 + $0x218] sm:$0xff]
                %2557 = vst [vmem:[%s2421 + $0x418] sm:$0xff] %v2556
                %v2558 = vld [vmem:[%s2420 + $0x220] sm:$0xff]
                %2559 = vst [vmem:[%s2421 + $0x440] sm:$0xff] %v2558
                %v2560 = vld [vmem:[%s2420 + $0x228] sm:$0xff]
                %2561 = vst [vmem:[%s2421 + $0x448] sm:$0xff] %v2560
                %v2562 = vld [vmem:[%s2420 + $0x230] sm:$0xff]
                %2563 = vst [vmem:[%s2421 + $0x450] sm:$0xff] %v2562
                %v2564 = vld [vmem:[%s2420 + $0x238] sm:$0xff]
                %2565 = vst [vmem:[%s2421 + $0x458] sm:$0xff] %v2564
                %v2566 = vld [vmem:[%s2420 + $0x240] sm:$0xff]
                %2567 = vst [vmem:[%s2421 + $0x480] sm:$0xff] %v2566
                %v2568 = vld [vmem:[%s2420 + $0x248] sm:$0xff]
                %2569 = vst [vmem:[%s2421 + $0x488] sm:$0xff] %v2568
                %v2570 = vld [vmem:[%s2420 + $0x250] sm:$0xff]
                %2571 = vst [vmem:[%s2421 + $0x490] sm:$0xff] %v2570
                %v2572 = vld [vmem:[%s2420 + $0x258] sm:$0xff]
                %2573 = vst [vmem:[%s2421 + $0x498] sm:$0xff] %v2572
                %v2574 = vld [vmem:[%s2420 + $0x260] sm:$0xff]
                %2575 = vst [vmem:[%s2421 + $0x4c0] sm:$0xff] %v2574
                %v2576 = vld [vmem:[%s2420 + $0x268] sm:$0xff]
                %2577 = vst [vmem:[%s2421 + $0x4c8] sm:$0xff] %v2576
                %v2578 = vld [vmem:[%s2420 + $0x270] sm:$0xff]
                %2579 = vst [vmem:[%s2421 + $0x4d0] sm:$0xff] %v2578
                %v2580 = vld [vmem:[%s2420 + $0x278] sm:$0xff]
                %2581 = vst [vmem:[%s2421 + $0x4d8] sm:$0xff] %v2580
                %v2582 = vld [vmem:[%s2420 + $0x280] sm:$0xff]
                %2583 = vst [vmem:[%s2421 + $0x500] sm:$0xff] %v2582
                %v2584 = vld [vmem:[%s2420 + $0x288] sm:$0xff]
                %2585 = vst [vmem:[%s2421 + $0x508] sm:$0xff] %v2584
                %v2586 = vld [vmem:[%s2420 + $0x290] sm:$0xff]
                %2587 = vst [vmem:[%s2421 + $0x510] sm:$0xff] %v2586
                %v2588 = vld [vmem:[%s2420 + $0x298] sm:$0xff]
                %2589 = vst [vmem:[%s2421 + $0x518] sm:$0xff] %v2588
                %v2590 = vld [vmem:[%s2420 + $0x2a0] sm:$0xff]
                %2591 = vst [vmem:[%s2421 + $0x540] sm:$0xff] %v2590
                %v2592 = vld [vmem:[%s2420 + $0x2a8] sm:$0xff]
                %2593 = vst [vmem:[%s2421 + $0x548] sm:$0xff] %v2592
                %v2594 = vld [vmem:[%s2420 + $0x2b0] sm:$0xff]
                %2595 = vst [vmem:[%s2421 + $0x550] sm:$0xff] %v2594
                %v2596 = vld [vmem:[%s2420 + $0x2b8] sm:$0xff]
                %2597 = vst [vmem:[%s2421 + $0x558] sm:$0xff] %v2596
                %v2598 = vld [vmem:[%s2420 + $0x2c0] sm:$0xff]
                %2599 = vst [vmem:[%s2421 + $0x580] sm:$0xff] %v2598
                %v2600 = vld [vmem:[%s2420 + $0x2c8] sm:$0xff]
                %2601 = vst [vmem:[%s2421 + $0x588] sm:$0xff] %v2600
                %v2602 = vld [vmem:[%s2420 + $0x2d0] sm:$0xff]
                %2603 = vst [vmem:[%s2421 + $0x590] sm:$0xff] %v2602
                %v2604 = vld [vmem:[%s2420 + $0x2d8] sm:$0xff]
                %2605 = vst [vmem:[%s2421 + $0x598] sm:$0xff] %v2604
                %v2606 = vld [vmem:[%s2420 + $0x2e0] sm:$0xff]
                %2607 = vst [vmem:[%s2421 + $0x5c0] sm:$0xff] %v2606
                %v2608 = vld [vmem:[%s2420 + $0x2e8] sm:$0xff]
                %2609 = vst [vmem:[%s2421 + $0x5c8] sm:$0xff] %v2608
                %v2610 = vld [vmem:[%s2420 + $0x2f0] sm:$0xff]
                %2611 = vst [vmem:[%s2421 + $0x5d0] sm:$0xff] %v2610
                %v2612 = vld [vmem:[%s2420 + $0x2f8] sm:$0xff]
                %2613 = vst [vmem:[%s2421 + $0x5d8] sm:$0xff] %v2612
                %v2614 = vld [vmem:[%s2420 + $0x300] sm:$0xff]
                %2615 = vst [vmem:[%s2421 + $0x600] sm:$0xff] %v2614
                %v2616 = vld [vmem:[%s2420 + $0x308] sm:$0xff]
                %2617 = vst [vmem:[%s2421 + $0x608] sm:$0xff] %v2616
                %v2618 = vld [vmem:[%s2420 + $0x310] sm:$0xff]
                %2619 = vst [vmem:[%s2421 + $0x610] sm:$0xff] %v2618
                %v2620 = vld [vmem:[%s2420 + $0x318] sm:$0xff]
                %2621 = vst [vmem:[%s2421 + $0x618] sm:$0xff] %v2620
                %v2622 = vld [vmem:[%s2420 + $0x320] sm:$0xff]
                %2623 = vst [vmem:[%s2421 + $0x640] sm:$0xff] %v2622
                %v2624 = vld [vmem:[%s2420 + $0x328] sm:$0xff]
                %2625 = vst [vmem:[%s2421 + $0x648] sm:$0xff] %v2624
                %v2626 = vld [vmem:[%s2420 + $0x330] sm:$0xff]
                %2627 = vst [vmem:[%s2421 + $0x650] sm:$0xff] %v2626
                %v2628 = vld [vmem:[%s2420 + $0x338] sm:$0xff]
                %2629 = vst [vmem:[%s2421 + $0x658] sm:$0xff] %v2628
                %v2630 = vld [vmem:[%s2420 + $0x340] sm:$0xff]
                %2631 = vst [vmem:[%s2421 + $0x680] sm:$0xff] %v2630
                %v2632 = vld [vmem:[%s2420 + $0x348] sm:$0xff]
                %2633 = vst [vmem:[%s2421 + $0x688] sm:$0xff] %v2632
                %v2634 = vld [vmem:[%s2420 + $0x350] sm:$0xff]
                %2635 = vst [vmem:[%s2421 + $0x690] sm:$0xff] %v2634
                %v2636 = vld [vmem:[%s2420 + $0x358] sm:$0xff]
                %2637 = vst [vmem:[%s2421 + $0x698] sm:$0xff] %v2636
                %v2638 = vld [vmem:[%s2420 + $0x360] sm:$0xff]
                %2639 = vst [vmem:[%s2421 + $0x6c0] sm:$0xff] %v2638
                %v2640 = vld [vmem:[%s2420 + $0x368] sm:$0xff]
                %2641 = vst [vmem:[%s2421 + $0x6c8] sm:$0xff] %v2640
                %v2642 = vld [vmem:[%s2420 + $0x370] sm:$0xff]
                %2643 = vst [vmem:[%s2421 + $0x6d0] sm:$0xff] %v2642
                %v2644 = vld [vmem:[%s2420 + $0x378] sm:$0xff]
                %2645 = vst [vmem:[%s2421 + $0x6d8] sm:$0xff] %v2644
                %v2646 = vld [vmem:[%s2420 + $0x380] sm:$0xff]
                %2647 = vst [vmem:[%s2421 + $0x700] sm:$0xff] %v2646
                %v2648 = vld [vmem:[%s2420 + $0x388] sm:$0xff]
                %2649 = vst [vmem:[%s2421 + $0x708] sm:$0xff] %v2648
                %v2650 = vld [vmem:[%s2420 + $0x390] sm:$0xff]
                %2651 = vst [vmem:[%s2421 + $0x710] sm:$0xff] %v2650
                %v2652 = vld [vmem:[%s2420 + $0x398] sm:$0xff]
                %2653 = vst [vmem:[%s2421 + $0x718] sm:$0xff] %v2652
                %v2654 = vld [vmem:[%s2420 + $0x3a0] sm:$0xff]
                %2655 = vst [vmem:[%s2421 + $0x740] sm:$0xff] %v2654
                %v2656 = vld [vmem:[%s2420 + $0x3a8] sm:$0xff]
                %2657 = vst [vmem:[%s2421 + $0x748] sm:$0xff] %v2656
                %v2658 = vld [vmem:[%s2420 + $0x3b0] sm:$0xff]
                %2659 = vst [vmem:[%s2421 + $0x750] sm:$0xff] %v2658
                %v2660 = vld [vmem:[%s2420 + $0x3b8] sm:$0xff]
                %2661 = vst [vmem:[%s2421 + $0x758] sm:$0xff] %v2660
                %v2662 = vld [vmem:[%s2420 + $0x3c0] sm:$0xff]
                %2663 = vst [vmem:[%s2421 + $0x780] sm:$0xff] %v2662
                %v2664 = vld [vmem:[%s2420 + $0x3c8] sm:$0xff]
                %2665 = vst [vmem:[%s2421 + $0x788] sm:$0xff] %v2664
                %v2666 = vld [vmem:[%s2420 + $0x3d0] sm:$0xff]
                %2667 = vst [vmem:[%s2421 + $0x790] sm:$0xff] %v2666
                %v2668 = vld [vmem:[%s2420 + $0x3d8] sm:$0xff]
                %2669 = vst [vmem:[%s2421 + $0x798] sm:$0xff] %v2668
                %v2670 = vld [vmem:[%s2420 + $0x3e0] sm:$0xff]
                %2671 = vst [vmem:[%s2421 + $0x7c0] sm:$0xff] %v2670
                %v2672 = vld [vmem:[%s2420 + $0x3e8] sm:$0xff]
                %2673 = vst [vmem:[%s2421 + $0x7c8] sm:$0xff] %v2672
                %v2674 = vld [vmem:[%s2420 + $0x3f0] sm:$0xff]
                %2675 = vst [vmem:[%s2421 + $0x7d0] sm:$0xff] %v2674
                %v2676 = vld [vmem:[%s2420 + $0x3f8] sm:$0xff]
                %2677 = vst [vmem:[%s2421 + $0x7d8] sm:$0xff] %v2676
              $region114: #{igala_forward.7} parent=108 // loop_footer
                %s2419 = sadd.s32 1, %s2415
              $region115: #{igala_forward.7} parent=108 // loop_footer_branch
                %2414 = sbr.rel target = $region111
              $region116: #{igala_forward.7} parent=108 // loop_exit
                _
            $region109: #{igala_forward.7} parent=104 // pred_fallthru
              _
            // Predicated region
            $region117: #{igala_forward.7} parent=104 // pred_check
              _
            $region118: #{igala_forward.7} parent=104 // pred_check_branch
              %2679 = sbr.rel target = $region120
            $region119: #{igala_forward.7} parent=104 // pred_region
              _
            $region120: #{igala_forward.7} parent=104 // pred_fallthru
              _
          $region105: #{igala_forward.7} parent=100 // pred_fallthru
            _
          %2680 = vnop
        $region101: #{igala_forward.7} parent=80 // pred_fallthru
          _
      $region81: #{igala_forward.7} parent=5 // pred_fallthru
        _
      %p2681 = scmp.le.s32.totalorder 2, %s8
      // Predicated region
      $region121: #{igala_forward.7} parent=5 // pred_check
        %p2682 = pneg %p2681
      $region122: #{igala_forward.7} parent=5 // pred_check_branch
        %2684 = sbr.rel (%p2682) target = $region124
      $region123: #{igala_forward.7} parent=5 // pred_region
        %s2685 = ssub.s32 %s8, 2
        // Predicated region
        $region125: #{igala_forward.7} parent=123 // pred_check
          %p2686 = pneg %p112
        $region126: #{igala_forward.7} parent=123 // pred_check_branch
          %2688 = sbr.rel (%p2686) target = $region128
        $region127: #{igala_forward.7} parent=123 // pred_region
          %s2689 = sand.u32 %s97, 1
          %s2690 = sand.u32 %s97, 1
          %s2691 = smul.addr %s2690, 1024
          %s2692 = scalar_lea.vmem [#allocation5], %s2691
        $region128: #{igala_forward.7} parent=123 // pred_fallthru
          _
      $region124: #{igala_forward.7} parent=5 // pred_fallthru
        _
    $region6: #{igala_forward.7} parent=1 // loop_footer
      %s12 = sadd.s32 1, %s8
    $region7: #{igala_forward.7} parent=1 // loop_footer_branch
      %7 = sbr.rel target = $region3
    $region8: #{igala_forward.7} parent=1 // loop_exit
      _

</llo_original>
